<compile_context>
chip_gen: v6e
topology: v6e:2x2x1
jax: 0.10.0
libtpu: 0.0.40
codegen_flags: <defaults>
</compile_context>

<pallas_src>
import functools

import jax
import jax.numpy as jnp
from jax.experimental import pallas as pl
from jax.experimental.pallas import tpu as pltpu


# ----------------------------- tiled linear kernels --------------------------

def _matmul_kernel(x_ref, w_ref, o_ref, acc_ref):
    @pl.when(pl.program_id(2) == 0)
    def _init():
        acc_ref[...] = jnp.zeros_like(acc_ref)

    acc_ref[...] += jnp.dot(x_ref[...], w_ref[...],
                            preferred_element_type=jnp.float32)

    @pl.when(pl.program_id(2) == pl.num_programs(2) - 1)
    def _finalize():
        o_ref[...] = acc_ref[...].astype(o_ref.dtype)


def _matmul_bias_kernel(x_ref, w_ref, b_ref, o_ref, acc_ref):
    @pl.when(pl.program_id(2) == 0)
    def _init():
        acc_ref[...] = jnp.zeros_like(acc_ref)

    acc_ref[...] += jnp.dot(x_ref[...], w_ref[...],
                            preferred_element_type=jnp.float32)

    @pl.when(pl.program_id(2) == pl.num_programs(2) - 1)
    def _finalize():
        o_ref[...] = (acc_ref[...] + b_ref[...]).astype(o_ref.dtype)


def _tile(dim, target, align):
    """Largest tile <= target that divides dim and is a multiple of align,
    falling back to the full dim (a full-extent block is always legal)."""
    if dim <= target:
        return dim
    t = target - (target % align)
    while t >= align:
        if dim % t == 0:
            return t
        t -= align
    return dim


def _linear(x2d, w, b=None, *, out_dtype=None,
            tm_target=512, tn_target=512, tk_target=2048):
    """x2d @ w (+ b).  Weights are expected pre-cast to the compute dtype."""
    M, K = x2d.shape
    K2, Nout = w.shape
    assert K == K2
    out_dtype = out_dtype if out_dtype is not None else x2d.dtype

    # second-minor alignment depends on packed dtype (f32 -> 8, bf16 -> 16)
    sub = 32 // x2d.dtype.itemsize

    # rows: pad to a tile multiple instead of silently using a huge full block
    if M <= tm_target:
        tm = -(-M // sub) * sub
    else:
        tm = tm_target
    Mpad = -(-M // tm) * tm
    if Mpad != M:
        x2d = jnp.pad(x2d, ((0, Mpad - M), (0, 0)))

    tk = _tile(K, tk_target, 128)
    tn = _tile(Nout, tn_target, 128)
    grid = (Mpad // tm, Nout // tn, K // tk)

    cparams = pltpu.CompilerParams(
        dimension_semantics=("parallel", "parallel", "arbitrary"),
        vmem_limit_bytes=48 * 1024 * 1024,
    )
    cost = pl.CostEstimate(
        flops=2 * Mpad * K * Nout,
        transcendentals=0,
        bytes_accessed=(Mpad * K + K * Nout) * x2d.dtype.itemsize
        + Mpad * Nout * jnp.dtype(out_dtype).itemsize,
    )

    if b is None:
        out = pl.pallas_call(
            _matmul_kernel,
            out_shape=jax.ShapeDtypeStruct((Mpad, Nout), out_dtype),
            grid=grid,
            in_specs=[pl.BlockSpec((tm, tk), lambda i, j, k: (i, k)),
                      pl.BlockSpec((tk, tn), lambda i, j, k: (k, j))],
            out_specs=pl.BlockSpec((tm, tn), lambda i, j, k: (i, j)),
            scratch_shapes=[pltpu.VMEM((tm, tn), jnp.float32)],
            compiler_params=cparams,
            cost_estimate=cost,
        )(x2d, w)
    else:
        b2d = b.astype(jnp.float32).reshape(1, Nout)
        out = pl.pallas_call(
            _matmul_bias_kernel,
            out_shape=jax.ShapeDtypeStruct((Mpad, Nout), out_dtype),
            grid=grid,
            in_specs=[pl.BlockSpec((tm, tk), lambda i, j, k: (i, k)),
                      pl.BlockSpec((tk, tn), lambda i, j, k: (k, j)),
                      pl.BlockSpec((1, tn), lambda i, j, k: (0, j))],
            out_specs=pl.BlockSpec((tm, tn), lambda i, j, k: (i, j)),
            scratch_shapes=[pltpu.VMEM((tm, tn), jnp.float32)],
            compiler_params=cparams,
            cost_estimate=cost,
        )(x2d, w, b2d)

    return out[:M] if Mpad != M else out


# ----------------------------- attention kernel -------------------------------

def _attn_kernel(q_ref, kv_ref, o_ref, o_acc, *, num_heads, head_dim,
                 softmax_dtype):
    # q_ref:  (tq, 3C) query-row block (scale already folded into the q weights)
    # kv_ref: (N, 3C) full per-batch block, resident across query tiles
    # o_acc:  (tq, C) f32 VMEM scratch; one lane-dense store to o_ref at the end
    # Column layout matches torch's reshape(B,N,3,H,hd):
    #   q head h -> [h*hd, (h+1)*hd), k -> C + ..., v -> 2C + ...
    C = num_heads * head_dim
    for h in range(num_heads):                       # static unroll over heads
        lo = h * head_dim
        q = q_ref[:, lo:lo + head_dim]               # (tq, hd)
        k = kv_ref[:, C + lo:C + lo + head_dim]      # (N, hd)
        v = kv_ref[:, 2 * C + lo:2 * C + lo + head_dim]
        # (tq, hd) x (N, hd) contracted over hd -> (tq, N), f32 accumulate (MXU)
        s = jax.lax.dot_general(q, k, (((1,), (1,)), ((), ())),
                                preferred_element_type=jnp.float32)
        s = s - jnp.max(s, axis=-1, keepdims=True)
        p = jnp.exp(s.astype(softmax_dtype))
        denom = jnp.sum(p.astype(jnp.float32), axis=-1, keepdims=True)
        p = p * pl.reciprocal(denom, approx=True).astype(softmax_dtype)
        o_acc[:, lo:lo + head_dim] = jnp.dot(
            p.astype(v.dtype), v, preferred_element_type=jnp.float32)
    # single lane-dense (tq, C) store, already in torch (B, N, H*hd) layout
    o_ref[...] = o_acc[...].astype(o_ref.dtype)
    # TODO(synk): online-softmax KV tiling for very long N (keeps the (tq, N)
    # f32 score tile bounded when N >> 8k).


def _query_tile(n, sub, target=256):
    if n <= target:
        return n
    t = target - (target % sub)
    while t >= sub:
        if n % t == 0:
            return t
        t -= sub
    return n


def _default_softmax_dtype():
    # bf16 softmax elementwise only on chips with a bf16 VPU/EUP (v6 / v7).
    try:
        kind = jax.devices()[0].device_kind.lower()
        if ("v6" in kind) or ("v7" in kind) or ("7x" in kind):
            return jnp.bfloat16
    except Exception:
        pass
    return jnp.float32


# ----------------------------- params & forward --------------------------------

def prepare_params(params, num_heads, compute_dtype=jnp.bfloat16):
    """One-time (outside the hot path) bf16 weight cast + softmax-scale fold."""
    C = params["proj_w"].shape[0]
    head_dim = C // num_heads
    scale = head_dim ** (-0.5)
    col_scale = jnp.concatenate([jnp.full((C,), scale, jnp.float32),
                                 jnp.ones((2 * C,), jnp.float32)])
    qkv_w = params["qkv_w"].astype(jnp.float32) * col_scale[None, :]
    prepared = {
        "qkv_w": qkv_w.astype(compute_dtype),
        "proj_w": params["proj_w"].astype(compute_dtype),
        "proj_b": params["proj_b"].astype(jnp.float32),
    }
    if params.get("qkv_b") is not None:
        prepared["qkv_b"] = params["qkv_b"].astype(jnp.float32) * col_scale
    return prepared


def attention_forward(x, params, num_heads, *, compute_dtype=jnp.bfloat16,
                      softmax_dtype=None):
    """x: (B, N, C) float32.  params from prepare_params.  Returns (B, N, C) f32."""
    B, N, C = x.shape
    head_dim = C // num_heads
    if softmax_dtype is None:
        softmax_dtype = _default_softmax_dtype()

    # --- fused qkv projection (scale folded into q weights), bf16 MXU, f32 acc
    x2d = x.reshape(B * N, C).astype(compute_dtype)
    qkv = _linear(x2d, params["qkv_w"], params.get("qkv_b"),
                  out_dtype=compute_dtype)             # (B*N, 3C)
    qkv = qkv.reshape(B, N, 3 * C)                     # free reshape, no transpose

    # --- attention: grid over (batch, query tile); K/V block resident per batch
    sub = 32 // jnp.dtype(compute_dtype).itemsize      # 16 for bf16
    tq = _query_tile(N, sub, target=256)
    grid = (B, N // tq)

    attn = pl.pallas_call(
        functools.partial(_attn_kernel, num_heads=num_heads,
                          head_dim=head_dim, softmax_dtype=softmax_dtype),
        out_shape=jax.ShapeDtypeStruct((B, N, C), compute_dtype),
        grid=grid,
        in_specs=[pl.BlockSpec((None, tq, 3 * C), lambda b, qi: (b, qi, 0)),
                  pl.BlockSpec((None, N, 3 * C), lambda b, qi: (b, 0, 0))],
        out_specs=pl.BlockSpec((None, tq, C), lambda b, qi: (b, qi, 0)),
        scratch_shapes=[pltpu.VMEM((tq, C), jnp.float32)],
        compiler_params=pltpu.CompilerParams(
            dimension_semantics=("parallel", "parallel"),
            vmem_limit_bytes=40 * 1024 * 1024),          # sized for v7x 64 MiB/TC
        cost_estimate=pl.CostEstimate(
            flops=4 * B * num_heads * N * N * head_dim,
            transcendentals=B * num_heads * N * N,
            bytes_accessed=(B * N * 3 * C + B * N * 3 * C + B * N * C) * 2),
    )(qkv, qkv)                                        # (B, N, C) torch layout

    # --- output projection: bf16 operands, f32 bias, f32 output
    out = _linear(attn.reshape(B * N, C), params["proj_w"], params["proj_b"],
                  out_dtype=jnp.float32)
    return out.reshape(B, N, C)
    # TODO(synk): attn_drop / proj_drop are p=0.0 (identity in eval) — omitted.


# --------------------------- reference (plain JAX, f32) ------------------------

def attention_reference(x, params, num_heads):
    B, N, C = x.shape
    hd = C // num_heads
    scale = hd ** (-0.5)
    qkv = x @ params["qkv_w"]
    if params.get("qkv_b") is not None:
        qkv = qkv + params["qkv_b"]
    qkv = qkv.reshape(B, N, 3, num_heads, hd).transpose(2, 0, 3, 1, 4)
    q, k, v = qkv[0], qkv[1], qkv[2]
    attn = (q @ jnp.swapaxes(k, -2, -1)) * scale
    attn = jax.nn.softmax(attn, axis=-1)
    o = (attn @ v).transpose(0, 2, 1, 3).reshape(B, N, C)
    return o @ params["proj_w"] + params["proj_b"]


# --------------------------------- main ----------------------------------------

if __name__ == "__main__":
    B, N, C = 2, 16, 512
    num_heads = 8            # head_dim = 64, as in standard ViT

    key = jax.random.PRNGKey(0)
    kx, kqkv, kpw, kpb = jax.random.split(key, 4)

    x = jax.random.normal(kx, (B, N, C), dtype=jnp.float32)
    params = {
        "qkv_w": jax.random.normal(kqkv, (C, 3 * C), dtype=jnp.float32) * 0.02,
        "proj_w": jax.random.normal(kpw, (C, C), dtype=jnp.float32) * 0.02,
        "proj_b": jax.random.normal(kpb, (C,), dtype=jnp.float32) * 0.02,
    }

    prepared = prepare_params(params, num_heads)       # one-time bf16 cast + scale fold
    fwd = jax.jit(functools.partial(attention_forward, num_heads=num_heads))
    out = jax.block_until_ready(fwd(x, prepared))

    ref = attention_reference(x, params, num_heads)
    assert out.shape == (B, N, C)
    max_err = float(jnp.max(jnp.abs(out - ref)))
    # bf16 MXU operands + bf16 softmax elementwise + approx reciprocal
    assert max_err < 3e-2, f"mismatch vs reference: max abs err {max_err}"

    print("KERNEL_OK")
</pallas_src>

<mosaic_0001>
module attributes {stable_mosaic.version = 11 : i64} {
  func.func @_matmul_kernel(%arg0: i32, %arg1: i32, %arg2: i32, %arg3: memref<32x512xbf16, #tpu.memory_space<vmem>>, %arg4: memref<512x512xbf16, #tpu.memory_space<vmem>>, %arg5: memref<32x512xbf16, #tpu.memory_space<vmem>>, %arg6: memref<32x512xf32, #tpu.memory_space<vmem>>) attributes {dimension_semantics = [#tpu.dimension_semantics<parallel>, #tpu.dimension_semantics<parallel>, #tpu.dimension_semantics<arbitrary>], iteration_bounds = array<i64: 1, 3, 1>, scalar_prefetch = 0 : i64, scratch_operands = 1 : i64, tpu.core_type = #tpu.core_type<tc>, window_params = [{transform_indices = @transform_0, window_bounds = array<i64: 32, 512>}, {transform_indices = @transform_1, window_bounds = array<i64: 512, 512>}, {transform_indices = @transform_2, window_bounds = array<i64: 32, 512>}]} {
    %c0_i32 = arith.constant 0 : i32
    %0 = arith.cmpi eq, %arg2, %c0_i32 : i32
    %1 = arith.extui %0 : i1 to i32
    %c0_i32_0 = arith.constant 0 : i32
    %2 = arith.cmpi ne, %1, %c0_i32_0 : i32
    scf.if %2 {
      %cst_10 = arith.constant 0.000000e+00 : f32
      %12 = vector.broadcast %cst_10 : f32 to vector<32x512xf32>
      %c0_11 = arith.constant 0 : index
      %c0_12 = arith.constant 0 : index
      %13 = vector.load %arg6[%c0_11, %c0_12] : memref<32x512xf32, #tpu.memory_space<vmem>>, vector<32x512xf32>
      tpu.vector_store %arg6[%c0_11, %c0_12], %12 {strides = array<i32>} : memref<32x512xf32, #tpu.memory_space<vmem>>, vector<32x512xf32>,
    } else {
    }
    %c0 = arith.constant 0 : index
    %c0_1 = arith.constant 0 : index
    %3 = vector.load %arg6[%c0, %c0_1] : memref<32x512xf32, #tpu.memory_space<vmem>>, vector<32x512xf32>
    %c0_2 = arith.constant 0 : index
    %c0_3 = arith.constant 0 : index
    %4 = vector.load %arg3[%c0_2, %c0_3] : memref<32x512xbf16, #tpu.memory_space<vmem>>, vector<32x512xbf16>
    %c0_4 = arith.constant 0 : index
    %c0_5 = arith.constant 0 : index
    %5 = vector.load %arg4[%c0_4, %c0_5] : memref<512x512xbf16, #tpu.memory_space<vmem>>, vector<512x512xbf16>
    %cst = arith.constant dense<0.000000e+00> : vector<32x512xf32>
    %6 = tpu.matmul %4, %5, %cst {dimension_numbers = #tpu.dot_dimension_numbers<[1], [0], [0], [1], [0, 0, 1, 1], [], []>} : vector<32x512xbf16>, vector<512x512xbf16>, vector<32x512xf32> -> vector<32x512xf32>
    %7 = arith.addf %3, %6 : vector<32x512xf32>
    %c0_6 = arith.constant 0 : index
    %c0_7 = arith.constant 0 : index
    %8 = vector.load %arg6[%c0_6, %c0_7] : memref<32x512xf32, #tpu.memory_space<vmem>>, vector<32x512xf32>
    tpu.vector_store %arg6[%c0_6, %c0_7], %7 {strides = array<i32>} : memref<32x512xf32, #tpu.memory_space<vmem>>, vector<32x512xf32>,
    %c0_i32_8 = arith.constant 0 : i32
    %9 = arith.cmpi eq, %arg2, %c0_i32_8 : i32
    %10 = arith.extui %9 : i1 to i32
    %c0_i32_9 = arith.constant 0 : i32
    %11 = arith.cmpi ne, %10, %c0_i32_9 : i32
    scf.if %11 {
      %c0_10 = arith.constant 0 : index
      %c0_11 = arith.constant 0 : index
      %12 = vector.load %arg6[%c0_10, %c0_11] : memref<32x512xf32, #tpu.memory_space<vmem>>, vector<32x512xf32>
      %13 = arith.truncf %12 : vector<32x512xf32> to vector<32x512xbf16>
      %c0_12 = arith.constant 0 : index
      %c0_13 = arith.constant 0 : index
      %14 = vector.load %arg5[%c0_12, %c0_13] : memref<32x512xbf16, #tpu.memory_space<vmem>>, vector<32x512xbf16>
      tpu.vector_store %arg5[%c0_12, %c0_13], %13 {strides = array<i32>} : memref<32x512xbf16, #tpu.memory_space<vmem>>, vector<32x512xbf16>,
    } else {
    }
    return
  }
  func.func @transform_0(%arg0: i32, %arg1: i32, %arg2: i32) -> (i32, i32) {
    %c0_i32 = arith.constant 0 : i32
    return %arg0, %arg2 : i32, i32
  }
  func.func @transform_1(%arg0: i32, %arg1: i32, %arg2: i32) -> (i32, i32) {
    %c0_i32 = arith.constant 0 : i32
    return %arg2, %arg1 : i32, i32
  }
  func.func @transform_2(%arg0: i32, %arg1: i32, %arg2: i32) -> (i32, i32) {
    %c0_i32 = arith.constant 0 : i32
    return %arg0, %arg1 : i32, i32
  }
}

module attributes {stable_mosaic.version = 11 : i64} {
  func.func @_matmul_bias_kernel(%arg0: i32, %arg1: i32, %arg2: i32, %arg3: memref<32x512xbf16, #tpu.memory_space<vmem>>, %arg4: memref<512x512xbf16, #tpu.memory_space<vmem>>, %arg5: memref<1x512xf32, #tpu.memory_space<vmem>>, %arg6: memref<32x512xf32, #tpu.memory_space<vmem>>, %arg7: memref<32x512xf32, #tpu.memory_space<vmem>>) attributes {dimension_semantics = [#tpu.dimension_semantics<parallel>, #tpu.dimension_semantics<parallel>, #tpu.dimension_semantics<arbitrary>], iteration_bounds = array<i64: 1, 1, 1>, scalar_prefetch = 0 : i64, scratch_operands = 1 : i64, tpu.core_type = #tpu.core_type<tc>, window_params = [{transform_indices = @transform_0, window_bounds = array<i64: 32, 512>}, {transform_indices = @transform_1, window_bounds = array<i64: 512, 512>}, {transform_indices = @transform_2, window_bounds = array<i64: 1, 512>}, {transform_indices = @transform_3, window_bounds = array<i64: 32, 512>}]} {
    %c0_i32 = arith.constant 0 : i32
    %0 = arith.cmpi eq, %arg2, %c0_i32 : i32
    %1 = arith.extui %0 : i1 to i32
    %c0_i32_0 = arith.constant 0 : i32
    %2 = arith.cmpi ne, %1, %c0_i32_0 : i32
    scf.if %2 {
      %cst_10 = arith.constant 0.000000e+00 : f32
      %12 = vector.broadcast %cst_10 : f32 to vector<32x512xf32>
      %c0_11 = arith.constant 0 : index
      %c0_12 = arith.constant 0 : index
      %13 = vector.load %arg7[%c0_11, %c0_12] : memref<32x512xf32, #tpu.memory_space<vmem>>, vector<32x512xf32>
      tpu.vector_store %arg7[%c0_11, %c0_12], %12 {strides = array<i32>} : memref<32x512xf32, #tpu.memory_space<vmem>>, vector<32x512xf32>,
    } else {
    }
    %c0 = arith.constant 0 : index
    %c0_1 = arith.constant 0 : index
    %3 = vector.load %arg7[%c0, %c0_1] : memref<32x512xf32, #tpu.memory_space<vmem>>, vector<32x512xf32>
    %c0_2 = arith.constant 0 : index
    %c0_3 = arith.constant 0 : index
    %4 = vector.load %arg3[%c0_2, %c0_3] : memref<32x512xbf16, #tpu.memory_space<vmem>>, vector<32x512xbf16>
    %c0_4 = arith.constant 0 : index
    %c0_5 = arith.constant 0 : index
    %5 = vector.load %arg4[%c0_4, %c0_5] : memref<512x512xbf16, #tpu.memory_space<vmem>>, vector<512x512xbf16>
    %cst = arith.constant dense<0.000000e+00> : vector<32x512xf32>
    %6 = tpu.matmul %4, %5, %cst {dimension_numbers = #tpu.dot_dimension_numbers<[1], [0], [0], [1], [0, 0, 1, 1], [], []>} : vector<32x512xbf16>, vector<512x512xbf16>, vector<32x512xf32> -> vector<32x512xf32>
    %7 = arith.addf %3, %6 : vector<32x512xf32>
    %c0_6 = arith.constant 0 : index
    %c0_7 = arith.constant 0 : index
    %8 = vector.load %arg7[%c0_6, %c0_7] : memref<32x512xf32, #tpu.memory_space<vmem>>, vector<32x512xf32>
    tpu.vector_store %arg7[%c0_6, %c0_7], %7 {strides = array<i32>} : memref<32x512xf32, #tpu.memory_space<vmem>>, vector<32x512xf32>,
    %c0_i32_8 = arith.constant 0 : i32
    %9 = arith.cmpi eq, %arg2, %c0_i32_8 : i32
    %10 = arith.extui %9 : i1 to i32
    %c0_i32_9 = arith.constant 0 : i32
    %11 = arith.cmpi ne, %10, %c0_i32_9 : i32
    scf.if %11 {
      %c0_10 = arith.constant 0 : index
      %c0_11 = arith.constant 0 : index
      %12 = vector.load %arg7[%c0_10, %c0_11] : memref<32x512xf32, #tpu.memory_space<vmem>>, vector<32x512xf32>
      %c0_12 = arith.constant 0 : index
      %c0_13 = arith.constant 0 : index
      %13 = vector.load %arg5[%c0_12, %c0_13] : memref<1x512xf32, #tpu.memory_space<vmem>>, vector<1x512xf32>
      %14 = vector.broadcast %13 : vector<1x512xf32> to vector<32x512xf32>
      %15 = arith.addf %12, %14 : vector<32x512xf32>
      %c0_14 = arith.constant 0 : index
      %c0_15 = arith.constant 0 : index
      %16 = vector.load %arg6[%c0_14, %c0_15] : memref<32x512xf32, #tpu.memory_space<vmem>>, vector<32x512xf32>
      tpu.vector_store %arg6[%c0_14, %c0_15], %15 {strides = array<i32>} : memref<32x512xf32, #tpu.memory_space<vmem>>, vector<32x512xf32>,
    } else {
    }
    return
  }
  func.func @transform_0(%arg0: i32, %arg1: i32, %arg2: i32) -> (i32, i32) {
    %c0_i32 = arith.constant 0 : i32
    return %arg0, %arg2 : i32, i32
  }
  func.func @transform_1(%arg0: i32, %arg1: i32, %arg2: i32) -> (i32, i32) {
    %c0_i32 = arith.constant 0 : i32
    return %arg2, %arg1 : i32, i32
  }
  func.func @transform_2(%arg0: i32, %arg1: i32, %arg2: i32) -> (i32, i32) {
    %c0_i32 = arith.constant 0 : i32
    %c0_i32_0 = arith.constant 0 : i32
    return %c0_i32, %arg1 : i32, i32
  }
  func.func @transform_3(%arg0: i32, %arg1: i32, %arg2: i32) -> (i32, i32) {
    %c0_i32 = arith.constant 0 : i32
    return %arg0, %arg1 : i32, i32
  }
}

module attributes {stable_mosaic.version = 11 : i64} {
  func.func @_attn_kernel(%arg0: i32, %arg1: i32, %arg2: memref<1x16x1536xbf16, #tpu.memory_space<vmem>>, %arg3: memref<1x16x1536xbf16, #tpu.memory_space<vmem>>, %arg4: memref<1x16x512xbf16, #tpu.memory_space<vmem>>, %arg5: memref<16x512xf32, #tpu.memory_space<vmem>>) attributes {dimension_semantics = [#tpu.dimension_semantics<parallel>, #tpu.dimension_semantics<parallel>], iteration_bounds = array<i64: 2, 1>, scalar_prefetch = 0 : i64, scratch_operands = 1 : i64, tpu.core_type = #tpu.core_type<tc>, window_params = [{transform_indices = @transform_0, window_bounds = array<i64: 1, 16, 1536>}, {transform_indices = @transform_1, window_bounds = array<i64: 1, 16, 1536>}, {transform_indices = @transform_2, window_bounds = array<i64: 1, 16, 512>}]} {
    %c0 = arith.constant 0 : index
    %c0_0 = arith.constant 0 : index
    %c0_1 = arith.constant 0 : index
    %0 = vector.load %arg2[%c0, %c0_0, %c0_1] : memref<1x16x1536xbf16, #tpu.memory_space<vmem>>, vector<1x16x64xbf16>
    %1 = vector.shape_cast %0 : vector<1x16x64xbf16> to vector<16x64xbf16>
    %c0_2 = arith.constant 0 : index
    %c0_3 = arith.constant 0 : index
    %c512 = arith.constant 512 : index
    %2 = vector.load %arg3[%c0_2, %c0_3, %c512] : memref<1x16x1536xbf16, #tpu.memory_space<vmem>>, vector<1x16x64xbf16>
    %3 = vector.shape_cast %2 : vector<1x16x64xbf16> to vector<16x64xbf16>
    %c0_4 = arith.constant 0 : index
    %c0_5 = arith.constant 0 : index
    %c1024 = arith.constant 1024 : index
    %4 = vector.load %arg3[%c0_4, %c0_5, %c1024] : memref<1x16x1536xbf16, #tpu.memory_space<vmem>>, vector<1x16x64xbf16>
    %5 = vector.shape_cast %4 : vector<1x16x64xbf16> to vector<16x64xbf16>
    %cst = arith.constant dense<0.000000e+00> : vector<16x16xf32>
    %6 = tpu.matmul %1, %3, %cst {dimension_numbers = #tpu.dot_dimension_numbers<[1], [1], [0], [0], [0, 0, 1, 0], [], []>} : vector<16x64xbf16>, vector<16x64xbf16>, vector<16x16xf32> -> vector<16x16xf32>
    %cst_6 = arith.constant dense<0xFF800000> : vector<16xf32>
    %7 = vector.multi_reduction <maximumf>, %6, %cst_6 [1] : vector<16x16xf32> to vector<16xf32>
    %8 = vector.shape_cast %7 : vector<16xf32> to vector<16x1xf32>
    %9 = vector.broadcast %8 : vector<16x1xf32> to vector<16x16xf32>
    %10 = arith.subf %6, %9 : vector<16x16xf32>
    %11 = math.exp %10 : vector<16x16xf32>
    %cst_7 = arith.constant dense<0.000000e+00> : vector<16xf32>
    %12 = vector.multi_reduction <add>, %11, %cst_7 [1] : vector<16x16xf32> to vector<16xf32>
    %13 = vector.shape_cast %12 : vector<16xf32> to vector<16x1xf32>
    %14 = tpu.reciprocal %13 {approx = true} : vector<16x1xf32> -> vector<16x1xf32>
    %15 = vector.broadcast %14 : vector<16x1xf32> to vector<16x16xf32>
    %16 = arith.mulf %11, %15 : vector<16x16xf32>
    %17 = arith.truncf %16 : vector<16x16xf32> to vector<16x16xbf16>
    %cst_8 = arith.constant dense<0.000000e+00> : vector<16x64xf32>
    %18 = tpu.matmul %17, %5, %cst_8 {dimension_numbers = #tpu.dot_dimension_numbers<[1], [0], [0], [1], [0, 0, 1, 1], [], []>} : vector<16x16xbf16>, vector<16x64xbf16>, vector<16x64xf32> -> vector<16x64xf32>
    %c0_9 = arith.constant 0 : index
    %c0_10 = arith.constant 0 : index
    %19 = vector.load %arg5[%c0_9, %c0_10] : memref<16x512xf32, #tpu.memory_space<vmem>>, vector<16x64xf32>
    tpu.vector_store %arg5[%c0_9, %c0_10], %18 {strides = array<i32>} : memref<16x512xf32, #tpu.memory_space<vmem>>, vector<16x64xf32>,
    %c0_11 = arith.constant 0 : index
    %c0_12 = arith.constant 0 : index
    %c64 = arith.constant 64 : index
    %20 = vector.load %arg2[%c0_11, %c0_12, %c64] : memref<1x16x1536xbf16, #tpu.memory_space<vmem>>, vector<1x16x64xbf16>
    %21 = vector.shape_cast %20 : vector<1x16x64xbf16> to vector<16x64xbf16>
    %c0_13 = arith.constant 0 : index
    %c0_14 = arith.constant 0 : index
    %c576 = arith.constant 576 : index
    %22 = vector.load %arg3[%c0_13, %c0_14, %c576] : memref<1x16x1536xbf16, #tpu.memory_space<vmem>>, vector<1x16x64xbf16>
    %23 = vector.shape_cast %22 : vector<1x16x64xbf16> to vector<16x64xbf16>
    %c0_15 = arith.constant 0 : index
    %c0_16 = arith.constant 0 : index
    %c1088 = arith.constant 1088 : index
    %24 = vector.load %arg3[%c0_15, %c0_16, %c1088] : memref<1x16x1536xbf16, #tpu.memory_space<vmem>>, vector<1x16x64xbf16>
    %25 = vector.shape_cast %24 : vector<1x16x64xbf16> to vector<16x64xbf16>
    %cst_17 = arith.constant dense<0.000000e+00> : vector<16x16xf32>
    %26 = tpu.matmul %21, %23, %cst_17 {dimension_numbers = #tpu.dot_dimension_numbers<[1], [1], [0], [0], [0, 0, 1, 0], [], []>} : vector<16x64xbf16>, vector<16x64xbf16>, vector<16x16xf32> -> vector<16x16xf32>
    %cst_18 = arith.constant dense<0xFF800000> : vector<16xf32>
    %27 = vector.multi_reduction <maximumf>, %26, %cst_18 [1] : vector<16x16xf32> to vector<16xf32>
    %28 = vector.shape_cast %27 : vector<16xf32> to vector<16x1xf32>
    %29 = vector.broadcast %28 : vector<16x1xf32> to vector<16x16xf32>
    %30 = arith.subf %26, %29 : vector<16x16xf32>
    %31 = math.exp %30 : vector<16x16xf32>
    %cst_19 = arith.constant dense<0.000000e+00> : vector<16xf32>
    %32 = vector.multi_reduction <add>, %31, %cst_19 [1] : vector<16x16xf32> to vector<16xf32>
    %33 = vector.shape_cast %32 : vector<16xf32> to vector<16x1xf32>
    %34 = tpu.reciprocal %33 {approx = true} : vector<16x1xf32> -> vector<16x1xf32>
    %35 = vector.broadcast %34 : vector<16x1xf32> to vector<16x16xf32>
    %36 = arith.mulf %31, %35 : vector<16x16xf32>
    %37 = arith.truncf %36 : vector<16x16xf32> to vector<16x16xbf16>
    %cst_20 = arith.constant dense<0.000000e+00> : vector<16x64xf32>
    %38 = tpu.matmul %37, %25, %cst_20 {dimension_numbers = #tpu.dot_dimension_numbers<[1], [0], [0], [1], [0, 0, 1, 1], [], []>} : vector<16x16xbf16>, vector<16x64xbf16>, vector<16x64xf32> -> vector<16x64xf32>
    %c0_21 = arith.constant 0 : index
    %c64_22 = arith.constant 64 : index
    %39 = vector.load %arg5[%c0_21, %c64_22] : memref<16x512xf32, #tpu.memory_space<vmem>>, vector<16x64xf32>
    tpu.vector_store %arg5[%c0_21, %c64_22], %38 {strides = array<i32>} : memref<16x512xf32, #tpu.memory_space<vmem>>, vector<16x64xf32>,
    %c0_23 = arith.constant 0 : index
    %c0_24 = arith.constant 0 : index
    %c128 = arith.constant 128 : index
    %40 = vector.load %arg2[%c0_23, %c0_24, %c128] : memref<1x16x1536xbf16, #tpu.memory_space<vmem>>, vector<1x16x64xbf16>
    %41 = vector.shape_cast %40 : vector<1x16x64xbf16> to vector<16x64xbf16>
    %c0_25 = arith.constant 0 : index
    %c0_26 = arith.constant 0 : index
    %c640 = arith.constant 640 : index
    %42 = vector.load %arg3[%c0_25, %c0_26, %c640] : memref<1x16x1536xbf16, #tpu.memory_space<vmem>>, vector<1x16x64xbf16>
    %43 = vector.shape_cast %42 : vector<1x16x64xbf16> to vector<16x64xbf16>
    %c0_27 = arith.constant 0 : index
    %c0_28 = arith.constant 0 : index
    %c1152 = arith.constant 1152 : index
    %44 = vector.load %arg3[%c0_27, %c0_28, %c1152] : memref<1x16x1536xbf16, #tpu.memory_space<vmem>>, vector<1x16x64xbf16>
    %45 = vector.shape_cast %44 : vector<1x16x64xbf16> to vector<16x64xbf16>
    %cst_29 = arith.constant dense<0.000000e+00> : vector<16x16xf32>
    %46 = tpu.matmul %41, %43, %cst_29 {dimension_numbers = #tpu.dot_dimension_numbers<[1], [1], [0], [0], [0, 0, 1, 0], [], []>} : vector<16x64xbf16>, vector<16x64xbf16>, vector<16x16xf32> -> vector<16x16xf32>
    %cst_30 = arith.constant dense<0xFF800000> : vector<16xf32>
    %47 = vector.multi_reduction <maximumf>, %46, %cst_30 [1] : vector<16x16xf32> to vector<16xf32>
    %48 = vector.shape_cast %47 : vector<16xf32> to vector<16x1xf32>
    %49 = vector.broadcast %48 : vector<16x1xf32> to vector<16x16xf32>
    %50 = arith.subf %46, %49 : vector<16x16xf32>
    %51 = math.exp %50 : vector<16x16xf32>
    %cst_31 = arith.constant dense<0.000000e+00> : vector<16xf32>
    %52 = vector.multi_reduction <add>, %51, %cst_31 [1] : vector<16x16xf32> to vector<16xf32>
    %53 = vector.shape_cast %52 : vector<16xf32> to vector<16x1xf32>
    %54 = tpu.reciprocal %53 {approx = true} : vector<16x1xf32> -> vector<16x1xf32>
    %55 = vector.broadcast %54 : vector<16x1xf32> to vector<16x16xf32>
    %56 = arith.mulf %51, %55 : vector<16x16xf32>
    %57 = arith.truncf %56 : vector<16x16xf32> to vector<16x16xbf16>
    %cst_32 = arith.constant dense<0.000000e+00> : vector<16x64xf32>
    %58 = tpu.matmul %57, %45, %cst_32 {dimension_numbers = #tpu.dot_dimension_numbers<[1], [0], [0], [1], [0, 0, 1, 1], [], []>} : vector<16x16xbf16>, vector<16x64xbf16>, vector<16x64xf32> -> vector<16x64xf32>
    %c0_33 = arith.constant 0 : index
    %c128_34 = arith.constant 128 : index
    %59 = vector.load %arg5[%c0_33, %c128_34] : memref<16x512xf32, #tpu.memory_space<vmem>>, vector<16x64xf32>
    tpu.vector_store %arg5[%c0_33, %c128_34], %58 {strides = array<i32>} : memref<16x512xf32, #tpu.memory_space<vmem>>, vector<16x64xf32>,
    %c0_35 = arith.constant 0 : index
    %c0_36 = arith.constant 0 : index
    %c192 = arith.constant 192 : index
    %60 = vector.load %arg2[%c0_35, %c0_36, %c192] : memref<1x16x1536xbf16, #tpu.memory_space<vmem>>, vector<1x16x64xbf16>
    %61 = vector.shape_cast %60 : vector<1x16x64xbf16> to vector<16x64xbf16>
    %c0_37 = arith.constant 0 : index
    %c0_38 = arith.constant 0 : index
    %c704 = arith.constant 704 : index
    %62 = vector.load %arg3[%c0_37, %c0_38, %c704] : memref<1x16x1536xbf16, #tpu.memory_space<vmem>>, vector<1x16x64xbf16>
    %63 = vector.shape_cast %62 : vector<1x16x64xbf16> to vector<16x64xbf16>
    %c0_39 = arith.constant 0 : index
    %c0_40 = arith.constant 0 : index
    %c1216 = arith.constant 1216 : index
    %64 = vector.load %arg3[%c0_39, %c0_40, %c1216] : memref<1x16x1536xbf16, #tpu.memory_space<vmem>>, vector<1x16x64xbf16>
    %65 = vector.shape_cast %64 : vector<1x16x64xbf16> to vector<16x64xbf16>
    %cst_41 = arith.constant dense<0.000000e+00> : vector<16x16xf32>
    %66 = tpu.matmul %61, %63, %cst_41 {dimension_numbers = #tpu.dot_dimension_numbers<[1], [1], [0], [0], [0, 0, 1, 0], [], []>} : vector<16x64xbf16>, vector<16x64xbf16>, vector<16x16xf32> -> vector<16x16xf32>
    %cst_42 = arith.constant dense<0xFF800000> : vector<16xf32>
    %67 = vector.multi_reduction <maximumf>, %66, %cst_42 [1] : vector<16x16xf32> to vector<16xf32>
    %68 = vector.shape_cast %67 : vector<16xf32> to vector<16x1xf32>
    %69 = vector.broadcast %68 : vector<16x1xf32> to vector<16x16xf32>
    %70 = arith.subf %66, %69 : vector<16x16xf32>
    %71 = math.exp %70 : vector<16x16xf32>
    %cst_43 = arith.constant dense<0.000000e+00> : vector<16xf32>
    %72 = vector.multi_reduction <add>, %71, %cst_43 [1] : vector<16x16xf32> to vector<16xf32>
    %73 = vector.shape_cast %72 : vector<16xf32> to vector<16x1xf32>
    %74 = tpu.reciprocal %73 {approx = true} : vector<16x1xf32> -> vector<16x1xf32>
    %75 = vector.broadcast %74 : vector<16x1xf32> to vector<16x16xf32>
    %76 = arith.mulf %71, %75 : vector<16x16xf32>
    %77 = arith.truncf %76 : vector<16x16xf32> to vector<16x16xbf16>
    %cst_44 = arith.constant dense<0.000000e+00> : vector<16x64xf32>
    %78 = tpu.matmul %77, %65, %cst_44 {dimension_numbers = #tpu.dot_dimension_numbers<[1], [0], [0], [1], [0, 0, 1, 1], [], []>} : vector<16x16xbf16>, vector<16x64xbf16>, vector<16x64xf32> -> vector<16x64xf32>
    %c0_45 = arith.constant 0 : index
    %c192_46 = arith.constant 192 : index
    %79 = vector.load %arg5[%c0_45, %c192_46] : memref<16x512xf32, #tpu.memory_space<vmem>>, vector<16x64xf32>
    tpu.vector_store %arg5[%c0_45, %c192_46], %78 {strides = array<i32>} : memref<16x512xf32, #tpu.memory_space<vmem>>, vector<16x64xf32>,
    %c0_47 = arith.constant 0 : index
    %c0_48 = arith.constant 0 : index
    %c256 = arith.constant 256 : index
    %80 = vector.load %arg2[%c0_47, %c0_48, %c256] : memref<1x16x1536xbf16, #tpu.memory_space<vmem>>, vector<1x16x64xbf16>
    %81 = vector.shape_cast %80 : vector<1x16x64xbf16> to vector<16x64xbf16>
    %c0_49 = arith.constant 0 : index
    %c0_50 = arith.constant 0 : index
    %c768 = arith.constant 768 : index
    %82 = vector.load %arg3[%c0_49, %c0_50, %c768] : memref<1x16x1536xbf16, #tpu.memory_space<vmem>>, vector<1x16x64xbf16>
    %83 = vector.shape_cast %82 : vector<1x16x64xbf16> to vector<16x64xbf16>
    %c0_51 = arith.constant 0 : index
    %c0_52 = arith.constant 0 : index
    %c1280 = arith.constant 1280 : index
    %84 = vector.load %arg3[%c0_51, %c0_52, %c1280] : memref<1x16x1536xbf16, #tpu.memory_space<vmem>>, vector<1x16x64xbf16>
    %85 = vector.shape_cast %84 : vector<1x16x64xbf16> to vector<16x64xbf16>
    %cst_53 = arith.constant dense<0.000000e+00> : vector<16x16xf32>
    %86 = tpu.matmul %81, %83, %cst_53 {dimension_numbers = #tpu.dot_dimension_numbers<[1], [1], [0], [0], [0, 0, 1, 0], [], []>} : vector<16x64xbf16>, vector<16x64xbf16>, vector<16x16xf32> -> vector<16x16xf32>
    %cst_54 = arith.constant dense<0xFF800000> : vector<16xf32>
    %87 = vector.multi_reduction <maximumf>, %86, %cst_54 [1] : vector<16x16xf32> to vector<16xf32>
    %88 = vector.shape_cast %87 : vector<16xf32> to vector<16x1xf32>
    %89 = vector.broadcast %88 : vector<16x1xf32> to vector<16x16xf32>
    %90 = arith.subf %86, %89 : vector<16x16xf32>
    %91 = math.exp %90 : vector<16x16xf32>
    %cst_55 = arith.constant dense<0.000000e+00> : vector<16xf32>
    %92 = vector.multi_reduction <add>, %91, %cst_55 [1] : vector<16x16xf32> to vector<16xf32>
    %93 = vector.shape_cast %92 : vector<16xf32> to vector<16x1xf32>
    %94 = tpu.reciprocal %93 {approx = true} : vector<16x1xf32> -> vector<16x1xf32>
    %95 = vector.broadcast %94 : vector<16x1xf32> to vector<16x16xf32>
    %96 = arith.mulf %91, %95 : vector<16x16xf32>
    %97 = arith.truncf %96 : vector<16x16xf32> to vector<16x16xbf16>
    %cst_56 = arith.constant dense<0.000000e+00> : vector<16x64xf32>
    %98 = tpu.matmul %97, %85, %cst_56 {dimension_numbers = #tpu.dot_dimension_numbers<[1], [0], [0], [1], [0, 0, 1, 1], [], []>} : vector<16x16xbf16>, vector<16x64xbf16>, vector<16x64xf32> -> vector<16x64xf32>
    %c0_57 = arith.constant 0 : index
    %c256_58 = arith.constant 256 : index
    %99 = vector.load %arg5[%c0_57, %c256_58] : memref<16x512xf32, #tpu.memory_space<vmem>>, vector<16x64xf32>
    tpu.vector_store %arg5[%c0_57, %c256_58], %98 {strides = array<i32>} : memref<16x512xf32, #tpu.memory_space<vmem>>, vector<16x64xf32>,
    %c0_59 = arith.constant 0 : index
    %c0_60 = arith.constant 0 : index
    %c320 = arith.constant 320 : index
    %100 = vector.load %arg2[%c0_59, %c0_60, %c320] : memref<1x16x1536xbf16, #tpu.memory_space<vmem>>, vector<1x16x64xbf16>
    %101 = vector.shape_cast %100 : vector<1x16x64xbf16> to vector<16x64xbf16>
    %c0_61 = arith.constant 0 : index
    %c0_62 = arith.constant 0 : index
    %c832 = arith.constant 832 : index
    %102 = vector.load %arg3[%c0_61, %c0_62, %c832] : memref<1x16x1536xbf16, #tpu.memory_space<vmem>>, vector<1x16x64xbf16>
    %103 = vector.shape_cast %102 : vector<1x16x64xbf16> to vector<16x64xbf16>
    %c0_63 = arith.constant 0 : index
    %c0_64 = arith.constant 0 : index
    %c1344 = arith.constant 1344 : index
    %104 = vector.load %arg3[%c0_63, %c0_64, %c1344] : memref<1x16x1536xbf16, #tpu.memory_space<vmem>>, vector<1x16x64xbf16>
    %105 = vector.shape_cast %104 : vector<1x16x64xbf16> to vector<16x64xbf16>
    %cst_65 = arith.constant dense<0.000000e+00> : vector<16x16xf32>
    %106 = tpu.matmul %101, %103, %cst_65 {dimension_numbers = #tpu.dot_dimension_numbers<[1], [1], [0], [0], [0, 0, 1, 0], [], []>} : vector<16x64xbf16>, vector<16x64xbf16>, vector<16x16xf32> -> vector<16x16xf32>
    %cst_66 = arith.constant dense<0xFF800000> : vector<16xf32>
    %107 = vector.multi_reduction <maximumf>, %106, %cst_66 [1] : vector<16x16xf32> to vector<16xf32>
    %108 = vector.shape_cast %107 : vector<16xf32> to vector<16x1xf32>
    %109 = vector.broadcast %108 : vector<16x1xf32> to vector<16x16xf32>
    %110 = arith.subf %106, %109 : vector<16x16xf32>
    %111 = math.exp %110 : vector<16x16xf32>
    %cst_67 = arith.constant dense<0.000000e+00> : vector<16xf32>
    %112 = vector.multi_reduction <add>, %111, %cst_67 [1] : vector<16x16xf32> to vector<16xf32>
    %113 = vector.shape_cast %112 : vector<16xf32> to vector<16x1xf32>
    %114 = tpu.reciprocal %113 {approx = true} : vector<16x1xf32> -> vector<16x1xf32>
    %115 = vector.broadcast %114 : vector<16x1xf32> to vector<16x16xf32>
    %116 = arith.mulf %111, %115 : vector<16x16xf32>
    %117 = arith.truncf %116 : vector<16x16xf32> to vector<16x16xbf16>
    %cst_68 = arith.constant dense<0.000000e+00> : vector<16x64xf32>
    %118 = tpu.matmul %117, %105, %cst_68 {dimension_numbers = #tpu.dot_dimension_numbers<[1], [0], [0], [1], [0, 0, 1, 1], [], []>} : vector<16x16xbf16>, vector<16x64xbf16>, vector<16x64xf32> -> vector<16x64xf32>
    %c0_69 = arith.constant 0 : index
    %c320_70 = arith.constant 320 : index
    %119 = vector.load %arg5[%c0_69, %c320_70] : memref<16x512xf32, #tpu.memory_space<vmem>>, vector<16x64xf32>
    tpu.vector_store %arg5[%c0_69, %c320_70], %118 {strides = array<i32>} : memref<16x512xf32, #tpu.memory_space<vmem>>, vector<16x64xf32>,
    %c0_71 = arith.constant 0 : index
    %c0_72 = arith.constant 0 : index
    %c384 = arith.constant 384 : index
    %120 = vector.load %arg2[%c0_71, %c0_72, %c384] : memref<1x16x1536xbf16, #tpu.memory_space<vmem>>, vector<1x16x64xbf16>
    %121 = vector.shape_cast %120 : vector<1x16x64xbf16> to vector<16x64xbf16>
    %c0_73 = arith.constant 0 : index
    %c0_74 = arith.constant 0 : index
    %c896 = arith.constant 896 : index
    %122 = vector.load %arg3[%c0_73, %c0_74, %c896] : memref<1x16x1536xbf16, #tpu.memory_space<vmem>>, vector<1x16x64xbf16>
    %123 = vector.shape_cast %122 : vector<1x16x64xbf16> to vector<16x64xbf16>
    %c0_75 = arith.constant 0 : index
    %c0_76 = arith.constant 0 : index
    %c1408 = arith.constant 1408 : index
    %124 = vector.load %arg3[%c0_75, %c0_76, %c1408] : memref<1x16x1536xbf16, #tpu.memory_space<vmem>>, vector<1x16x64xbf16>
    %125 = vector.shape_cast %124 : vector<1x16x64xbf16> to vector<16x64xbf16>
    %cst_77 = arith.constant dense<0.000000e+00> : vector<16x16xf32>
    %126 = tpu.matmul %121, %123, %cst_77 {dimension_numbers = #tpu.dot_dimension_numbers<[1], [1], [0], [0], [0, 0, 1, 0], [], []>} : vector<16x64xbf16>, vector<16x64xbf16>, vector<16x16xf32> -> vector<16x16xf32>
    %cst_78 = arith.constant dense<0xFF800000> : vector<16xf32>
    %127 = vector.multi_reduction <maximumf>, %126, %cst_78 [1] : vector<16x16xf32> to vector<16xf32>
    %128 = vector.shape_cast %127 : vector<16xf32> to vector<16x1xf32>
    %129 = vector.broadcast %128 : vector<16x1xf32> to vector<16x16xf32>
    %130 = arith.subf %126, %129 : vector<16x16xf32>
    %131 = math.exp %130 : vector<16x16xf32>
    %cst_79 = arith.constant dense<0.000000e+00> : vector<16xf32>
    %132 = vector.multi_reduction <add>, %131, %cst_79 [1] : vector<16x16xf32> to vector<16xf32>
    %133 = vector.shape_cast %132 : vector<16xf32> to vector<16x1xf32>
    %134 = tpu.reciprocal %133 {approx = true} : vector<16x1xf32> -> vector<16x1xf32>
    %135 = vector.broadcast %134 : vector<16x1xf32> to vector<16x16xf32>
    %136 = arith.mulf %131, %135 : vector<16x16xf32>
    %137 = arith.truncf %136 : vector<16x16xf32> to vector<16x16xbf16>
    %cst_80 = arith.constant dense<0.000000e+00> : vector<16x64xf32>
    %138 = tpu.matmul %137, %125, %cst_80 {dimension_numbers = #tpu.dot_dimension_numbers<[1], [0], [0], [1], [0, 0, 1, 1], [], []>} : vector<16x16xbf16>, vector<16x64xbf16>, vector<16x64xf32> -> vector<16x64xf32>
    %c0_81 = arith.constant 0 : index
    %c384_82 = arith.constant 384 : index
    %139 = vector.load %arg5[%c0_81, %c384_82] : memref<16x512xf32, #tpu.memory_space<vmem>>, vector<16x64xf32>
    tpu.vector_store %arg5[%c0_81, %c384_82], %138 {strides = array<i32>} : memref<16x512xf32, #tpu.memory_space<vmem>>, vector<16x64xf32>,
    %c0_83 = arith.constant 0 : index
    %c0_84 = arith.constant 0 : index
    %c448 = arith.constant 448 : index
    %140 = vector.load %arg2[%c0_83, %c0_84, %c448] : memref<1x16x1536xbf16, #tpu.memory_space<vmem>>, vector<1x16x64xbf16>
    %141 = vector.shape_cast %140 : vector<1x16x64xbf16> to vector<16x64xbf16>
    %c0_85 = arith.constant 0 : index
    %c0_86 = arith.constant 0 : index
    %c960 = arith.constant 960 : index
    %142 = vector.load %arg3[%c0_85, %c0_86, %c960] : memref<1x16x1536xbf16, #tpu.memory_space<vmem>>, vector<1x16x64xbf16>
    %143 = vector.shape_cast %142 : vector<1x16x64xbf16> to vector<16x64xbf16>
    %c0_87 = arith.constant 0 : index
    %c0_88 = arith.constant 0 : index
    %c1472 = arith.constant 1472 : index
    %144 = vector.load %arg3[%c0_87, %c0_88, %c1472] : memref<1x16x1536xbf16, #tpu.memory_space<vmem>>, vector<1x16x64xbf16>
    %145 = vector.shape_cast %144 : vector<1x16x64xbf16> to vector<16x64xbf16>
    %cst_89 = arith.constant dense<0.000000e+00> : vector<16x16xf32>
    %146 = tpu.matmul %141, %143, %cst_89 {dimension_numbers = #tpu.dot_dimension_numbers<[1], [1], [0], [0], [0, 0, 1, 0], [], []>} : vector<16x64xbf16>, vector<16x64xbf16>, vector<16x16xf32> -> vector<16x16xf32>
    %cst_90 = arith.constant dense<0xFF800000> : vector<16xf32>
    %147 = vector.multi_reduction <maximumf>, %146, %cst_90 [1] : vector<16x16xf32> to vector<16xf32>
    %148 = vector.shape_cast %147 : vector<16xf32> to vector<16x1xf32>
    %149 = vector.broadcast %148 : vector<16x1xf32> to vector<16x16xf32>
    %150 = arith.subf %146, %149 : vector<16x16xf32>
    %151 = math.exp %150 : vector<16x16xf32>
    %cst_91 = arith.constant dense<0.000000e+00> : vector<16xf32>
    %152 = vector.multi_reduction <add>, %151, %cst_91 [1] : vector<16x16xf32> to vector<16xf32>
    %153 = vector.shape_cast %152 : vector<16xf32> to vector<16x1xf32>
    %154 = tpu.reciprocal %153 {approx = true} : vector<16x1xf32> -> vector<16x1xf32>
    %155 = vector.broadcast %154 : vector<16x1xf32> to vector<16x16xf32>
    %156 = arith.mulf %151, %155 : vector<16x16xf32>
    %157 = arith.truncf %156 : vector<16x16xf32> to vector<16x16xbf16>
    %cst_92 = arith.constant dense<0.000000e+00> : vector<16x64xf32>
    %158 = tpu.matmul %157, %145, %cst_92 {dimension_numbers = #tpu.dot_dimension_numbers<[1], [0], [0], [1], [0, 0, 1, 1], [], []>} : vector<16x16xbf16>, vector<16x64xbf16>, vector<16x64xf32> -> vector<16x64xf32>
    %c0_93 = arith.constant 0 : index
    %c448_94 = arith.constant 448 : index
    %159 = vector.load %arg5[%c0_93, %c448_94] : memref<16x512xf32, #tpu.memory_space<vmem>>, vector<16x64xf32>
    tpu.vector_store %arg5[%c0_93, %c448_94], %158 {strides = array<i32>} : memref<16x512xf32, #tpu.memory_space<vmem>>, vector<16x64xf32>,
    %c0_95 = arith.constant 0 : index
    %c0_96 = arith.constant 0 : index
    %160 = vector.load %arg5[%c0_95, %c0_96] : memref<16x512xf32, #tpu.memory_space<vmem>>, vector<16x512xf32>
    %161 = arith.truncf %160 : vector<16x512xf32> to vector<16x512xbf16>
    %c0_97 = arith.constant 0 : index
    %c0_98 = arith.constant 0 : index
    %c0_99 = arith.constant 0 : index
    %162 = vector.load %arg4[%c0_97, %c0_98, %c0_99] : memref<1x16x512xbf16, #tpu.memory_space<vmem>>, vector<1x16x512xbf16>
    %163 = vector.shape_cast %162 : vector<1x16x512xbf16> to vector<16x512xbf16>
    %164 = vector.shape_cast %161 : vector<16x512xbf16> to vector<1x16x512xbf16>
    tpu.vector_store %arg4[%c0_97, %c0_98, %c0_99], %164 {strides = array<i32>} : memref<1x16x512xbf16, #tpu.memory_space<vmem>>, vector<1x16x512xbf16>,
    return
  }
  func.func @transform_0(%arg0: i32, %arg1: i32) -> (i32, i32, i32) {
    %c0_i32 = arith.constant 0 : i32
    %c0_i32_0 = arith.constant 0 : i32
    return %arg0, %arg1, %c0_i32 : i32, i32, i32
  }
  func.func @transform_1(%arg0: i32, %arg1: i32) -> (i32, i32, i32) {
    %c0_i32 = arith.constant 0 : i32
    %c0_i32_0 = arith.constant 0 : i32
    %c0_i32_1 = arith.constant 0 : i32
    return %arg0, %c0_i32, %c0_i32_0 : i32, i32, i32
  }
  func.func @transform_2(%arg0: i32, %arg1: i32) -> (i32, i32, i32) {
    %c0_i32 = arith.constant 0 : i32
    %c0_i32_0 = arith.constant 0 : i32
    return %arg0, %arg1, %c0_i32 : i32, i32, i32
  }
}

</mosaic_0001>

<llo_original>
// kernel: attention_forward.5
$region0: #{attention_forward.5}
  #allocation0 [shape = 'u32[]', space=smem, size = 0x4, offset = 0x4, fixed_abs, tag = 'smem constant byte address 0x4 - core index']
  #allocation1 [shape = 'u32[144,128]{1,0:T(1,128)}', space=vmem, size = 0x12000, scoped, tag = 'internal scratch']
  #allocation2 [shape = 'f32[32,512]{1,0:T(8,128)}', space=vmem, size = 0x10000, scoped, tag = 'scratch operand']
  %s0 = inlined_call_operand.vmem [shape: bf16[32,512], index: 0, kind: input, shape index: {}]
  %s1 = inlined_call_operand.vmem [shape: bf16[512,512], index: 1, kind: input, shape index: {}]
  %s2 = inlined_call_operand.vmem [shape: f32[1,512], index: 2, kind: input, shape index: {}]
  %s3 = inlined_call_operand.hbm [shape: f32[32,512], index: 3, kind: output, shape index: {}]
  %s4 = sld [smem:[#allocation0]]
  $region30: #{attention_forward.5} parent=0
    _
  %s6 = ssub.s32 1, %s4
  %s7 = scalar_select 0, %s6, %s4
  $region1: #{attention_forward.5} parent=0
    #allocation3 [shape = 'u8[65536]{0}', space=vmem, size = 0x10000, scoped, tag = 'output window, operand 0, single buffered']
    #allocation4 [shape = 's32[1]{0}', space=sflag, size = 0x4, scoped, tag = 'scoped memory for attention_forward.5']
    %8 = vsyncpa [#allocation4], 0
    // Predicated region
    $region2: #{attention_forward.5} parent=1 // pred_check
      _
    $region3: #{attention_forward.5} parent=1 // pred_check_branch
      %10 = sbr.rel (0) target = $region5
    $region4: #{attention_forward.5} parent=1 // pred_region
      _
    $region5: #{attention_forward.5} parent=1 // pred_fallthru
      _
    // Predicated region
    $region6: #{attention_forward.5} parent=1 // pred_check
      _
    $region7: #{attention_forward.5} parent=1 // pred_check_branch
      %12 = sbr.rel (0) target = $region9
    $region8: #{attention_forward.5} parent=1 // pred_region
      _
    $region9: #{attention_forward.5} parent=1 // pred_fallthru
      _
    // Predicated region
    $region10: #{attention_forward.5} parent=1 // pred_check
      _
    $region11: #{attention_forward.5} parent=1 // pred_check_branch
      %14 = sbr.rel (0) target = $region13
    $region12: #{attention_forward.5} parent=1 // pred_region
      _
    $region13: #{attention_forward.5} parent=1 // pred_fallthru
      _
    %p15 = scmp.eq.s32.totalorder 0, 0
    // Predicated region
    $region14: #{attention_forward.5} parent=1 // pred_check
      %p16 = pneg %p15
    $region15: #{attention_forward.5} parent=1 // pred_check_branch
      %18 = sbr.rel (%p16) target = $region17
    $region16: #{attention_forward.5} parent=1 // pred_region
      %19 = vst [vmem:[#allocation2] sm:$0xff] 0.0
      %20 = vst [vmem:[#allocation2 + $0x8] sm:$0xff] 0.0
      %21 = vst [vmem:[#allocation2 + $0x10] sm:$0xff] 0.0
      %22 = vst [vmem:[#allocation2 + $0x18] sm:$0xff] 0.0
      %23 = vst [vmem:[#allocation2 + $0x20] sm:$0xff] 0.0
      %24 = vst [vmem:[#allocation2 + $0x28] sm:$0xff] 0.0
      %25 = vst [vmem:[#allocation2 + $0x30] sm:$0xff] 0.0
      %26 = vst [vmem:[#allocation2 + $0x38] sm:$0xff] 0.0
      %27 = vst [vmem:[#allocation2 + $0x40] sm:$0xff] 0.0
      %28 = vst [vmem:[#allocation2 + $0x48] sm:$0xff] 0.0
      %29 = vst [vmem:[#allocation2 + $0x50] sm:$0xff] 0.0
      %30 = vst [vmem:[#allocation2 + $0x58] sm:$0xff] 0.0
      %31 = vst [vmem:[#allocation2 + $0x60] sm:$0xff] 0.0
      %32 = vst [vmem:[#allocation2 + $0x68] sm:$0xff] 0.0
      %33 = vst [vmem:[#allocation2 + $0x70] sm:$0xff] 0.0
      %34 = vst [vmem:[#allocation2 + $0x78] sm:$0xff] 0.0
    $region17: #{attention_forward.5} parent=1 // pred_fallthru
      _
    %v35 = vld [vmem:[#allocation2] sm:$0xff]
    %v36 = vld [vmem:[#allocation2 + $0x8] sm:$0xff]
    %v37 = vld [vmem:[#allocation2 + $0x10] sm:$0xff]
    %v38 = vld [vmem:[#allocation2 + $0x18] sm:$0xff]
    %v39 = vld [vmem:[#allocation2 + $0x20] sm:$0xff]
    %v40 = vld [vmem:[#allocation2 + $0x28] sm:$0xff]
    %v41 = vld [vmem:[#allocation2 + $0x30] sm:$0xff]
    %v42 = vld [vmem:[#allocation2 + $0x38] sm:$0xff]
    %v43 = vld [vmem:[#allocation2 + $0x40] sm:$0xff]
    %v44 = vld [vmem:[#allocation2 + $0x48] sm:$0xff]
    %v45 = vld [vmem:[#allocation2 + $0x50] sm:$0xff]
    %v46 = vld [vmem:[#allocation2 + $0x58] sm:$0xff]
    %v47 = vld [vmem:[#allocation2 + $0x60] sm:$0xff]
    %v48 = vld [vmem:[#allocation2 + $0x68] sm:$0xff]
    %v49 = vld [vmem:[#allocation2 + $0x70] sm:$0xff]
    %v50 = vld [vmem:[#allocation2 + $0x78] sm:$0xff]
    %v51 = vld [vmem:[%s0] sm:$0xff]
    %v52 = vld [vmem:[%s0 + $0x8] sm:$0xff]
    %v53 = vld [vmem:[%s0 + $0x10] sm:$0xff]
    %v54 = vld [vmem:[%s0 + $0x18] sm:$0xff]
    %v55 = vld [vmem:[%s0 + $0x20] sm:$0xff]
    %v56 = vld [vmem:[%s0 + $0x28] sm:$0xff]
    %v57 = vld [vmem:[%s0 + $0x30] sm:$0xff]
    %v58 = vld [vmem:[%s0 + $0x38] sm:$0xff]
    %v59 = vld [vmem:[%s1] sm:$0xff]
    %v60 = vld [vmem:[%s1 + $0x8] sm:$0xff]
    %v61 = vld [vmem:[%s1 + $0x10] sm:$0xff]
    %v62 = vld [vmem:[%s1 + $0x18] sm:$0xff]
    %v63 = vld [vmem:[%s1 + $0x20] sm:$0xff]
    %v64 = vld [vmem:[%s1 + $0x28] sm:$0xff]
    %v65 = vld [vmem:[%s1 + $0x30] sm:$0xff]
    %v66 = vld [vmem:[%s1 + $0x38] sm:$0xff]
    %v67 = vld [vmem:[%s1 + $0x40] sm:$0xff]
    %v68 = vld [vmem:[%s1 + $0x48] sm:$0xff]
    %v69 = vld [vmem:[%s1 + $0x50] sm:$0xff]
    %v70 = vld [vmem:[%s1 + $0x58] sm:$0xff]
    %v71 = vld [vmem:[%s1 + $0x60] sm:$0xff]
    %v72 = vld [vmem:[%s1 + $0x68] sm:$0xff]
    %v73 = vld [vmem:[%s1 + $0x70] sm:$0xff]
    %v74 = vld [vmem:[%s1 + $0x78] sm:$0xff]
    %v75 = vld [vmem:[%s1 + $0x80] sm:$0xff]
    %v76 = vld [vmem:[%s1 + $0x88] sm:$0xff]
    %v77 = vld [vmem:[%s1 + $0x90] sm:$0xff]
    %v78 = vld [vmem:[%s1 + $0x98] sm:$0xff]
    %v79 = vld [vmem:[%s1 + $0xa0] sm:$0xff]
    %v80 = vld [vmem:[%s1 + $0xa8] sm:$0xff]
    %v81 = vld [vmem:[%s1 + $0xb0] sm:$0xff]
    %v82 = vld [vmem:[%s1 + $0xb8] sm:$0xff]
    %v83 = vld [vmem:[%s1 + $0xc0] sm:$0xff]
    %v84 = vld [vmem:[%s1 + $0xc8] sm:$0xff]
    %v85 = vld [vmem:[%s1 + $0xd0] sm:$0xff]
    %v86 = vld [vmem:[%s1 + $0xd8] sm:$0xff]
    %v87 = vld [vmem:[%s1 + $0xe0] sm:$0xff]
    %v88 = vld [vmem:[%s1 + $0xe8] sm:$0xff]
    %v89 = vld [vmem:[%s1 + $0xf0] sm:$0xff]
    %v90 = vld [vmem:[%s1 + $0xf8] sm:$0xff]
    %v91 = vld [vmem:[%s1 + $0x100] sm:$0xff]
    %v92 = vld [vmem:[%s1 + $0x108] sm:$0xff]
    %v93 = vld [vmem:[%s1 + $0x110] sm:$0xff]
    %v94 = vld [vmem:[%s1 + $0x118] sm:$0xff]
    %v95 = vld [vmem:[%s1 + $0x120] sm:$0xff]
    %v96 = vld [vmem:[%s1 + $0x128] sm:$0xff]
    %v97 = vld [vmem:[%s1 + $0x130] sm:$0xff]
    %v98 = vld [vmem:[%s1 + $0x138] sm:$0xff]
    %v99 = vld [vmem:[%s1 + $0x140] sm:$0xff]
    %v100 = vld [vmem:[%s1 + $0x148] sm:$0xff]
    %v101 = vld [vmem:[%s1 + $0x150] sm:$0xff]
    %v102 = vld [vmem:[%s1 + $0x158] sm:$0xff]
    %v103 = vld [vmem:[%s1 + $0x160] sm:$0xff]
    %v104 = vld [vmem:[%s1 + $0x168] sm:$0xff]
    %v105 = vld [vmem:[%s1 + $0x170] sm:$0xff]
    %v106 = vld [vmem:[%s1 + $0x178] sm:$0xff]
    %v107 = vld [vmem:[%s1 + $0x180] sm:$0xff]
    %v108 = vld [vmem:[%s1 + $0x188] sm:$0xff]
    %v109 = vld [vmem:[%s1 + $0x190] sm:$0xff]
    %v110 = vld [vmem:[%s1 + $0x198] sm:$0xff]
    %v111 = vld [vmem:[%s1 + $0x1a0] sm:$0xff]
    %v112 = vld [vmem:[%s1 + $0x1a8] sm:$0xff]
    %v113 = vld [vmem:[%s1 + $0x1b0] sm:$0xff]
    %v114 = vld [vmem:[%s1 + $0x1b8] sm:$0xff]
    %v115 = vld [vmem:[%s1 + $0x1c0] sm:$0xff]
    %v116 = vld [vmem:[%s1 + $0x1c8] sm:$0xff]
    %v117 = vld [vmem:[%s1 + $0x1d0] sm:$0xff]
    %v118 = vld [vmem:[%s1 + $0x1d8] sm:$0xff]
    %v119 = vld [vmem:[%s1 + $0x1e0] sm:$0xff]
    %v120 = vld [vmem:[%s1 + $0x1e8] sm:$0xff]
    %v121 = vld [vmem:[%s1 + $0x1f0] sm:$0xff]
    %v122 = vld [vmem:[%s1 + $0x1f8] sm:$0xff]
    %v123 = vld [vmem:[%s1 + $0x200] sm:$0xff]
    %v124 = vld [vmem:[%s1 + $0x208] sm:$0xff]
    %v125 = vld [vmem:[%s1 + $0x210] sm:$0xff]
    %v126 = vld [vmem:[%s1 + $0x218] sm:$0xff]
    %v127 = vld [vmem:[%s1 + $0x220] sm:$0xff]
    %v128 = vld [vmem:[%s1 + $0x228] sm:$0xff]
    %v129 = vld [vmem:[%s1 + $0x230] sm:$0xff]
    %v130 = vld [vmem:[%s1 + $0x238] sm:$0xff]
    %v131 = vld [vmem:[%s1 + $0x240] sm:$0xff]
    %v132 = vld [vmem:[%s1 + $0x248] sm:$0xff]
    %v133 = vld [vmem:[%s1 + $0x250] sm:$0xff]
    %v134 = vld [vmem:[%s1 + $0x258] sm:$0xff]
    %v135 = vld [vmem:[%s1 + $0x260] sm:$0xff]
    %v136 = vld [vmem:[%s1 + $0x268] sm:$0xff]
    %v137 = vld [vmem:[%s1 + $0x270] sm:$0xff]
    %v138 = vld [vmem:[%s1 + $0x278] sm:$0xff]
    %v139 = vld [vmem:[%s1 + $0x280] sm:$0xff]
    %v140 = vld [vmem:[%s1 + $0x288] sm:$0xff]
    %v141 = vld [vmem:[%s1 + $0x290] sm:$0xff]
    %v142 = vld [vmem:[%s1 + $0x298] sm:$0xff]
    %v143 = vld [vmem:[%s1 + $0x2a0] sm:$0xff]
    %v144 = vld [vmem:[%s1 + $0x2a8] sm:$0xff]
    %v145 = vld [vmem:[%s1 + $0x2b0] sm:$0xff]
    %v146 = vld [vmem:[%s1 + $0x2b8] sm:$0xff]
    %v147 = vld [vmem:[%s1 + $0x2c0] sm:$0xff]
    %v148 = vld [vmem:[%s1 + $0x2c8] sm:$0xff]
    %v149 = vld [vmem:[%s1 + $0x2d0] sm:$0xff]
    %v150 = vld [vmem:[%s1 + $0x2d8] sm:$0xff]
    %v151 = vld [vmem:[%s1 + $0x2e0] sm:$0xff]
    %v152 = vld [vmem:[%s1 + $0x2e8] sm:$0xff]
    %v153 = vld [vmem:[%s1 + $0x2f0] sm:$0xff]
    %v154 = vld [vmem:[%s1 + $0x2f8] sm:$0xff]
    %v155 = vld [vmem:[%s1 + $0x300] sm:$0xff]
    %v156 = vld [vmem:[%s1 + $0x308] sm:$0xff]
    %v157 = vld [vmem:[%s1 + $0x310] sm:$0xff]
    %v158 = vld [vmem:[%s1 + $0x318] sm:$0xff]
    %v159 = vld [vmem:[%s1 + $0x320] sm:$0xff]
    %v160 = vld [vmem:[%s1 + $0x328] sm:$0xff]
    %v161 = vld [vmem:[%s1 + $0x330] sm:$0xff]
    %v162 = vld [vmem:[%s1 + $0x338] sm:$0xff]
    %v163 = vld [vmem:[%s1 + $0x340] sm:$0xff]
    %v164 = vld [vmem:[%s1 + $0x348] sm:$0xff]
    %v165 = vld [vmem:[%s1 + $0x350] sm:$0xff]
    %v166 = vld [vmem:[%s1 + $0x358] sm:$0xff]
    %v167 = vld [vmem:[%s1 + $0x360] sm:$0xff]
    %v168 = vld [vmem:[%s1 + $0x368] sm:$0xff]
    %v169 = vld [vmem:[%s1 + $0x370] sm:$0xff]
    %v170 = vld [vmem:[%s1 + $0x378] sm:$0xff]
    %v171 = vld [vmem:[%s1 + $0x380] sm:$0xff]
    %v172 = vld [vmem:[%s1 + $0x388] sm:$0xff]
    %v173 = vld [vmem:[%s1 + $0x390] sm:$0xff]
    %v174 = vld [vmem:[%s1 + $0x398] sm:$0xff]
    %v175 = vld [vmem:[%s1 + $0x3a0] sm:$0xff]
    %v176 = vld [vmem:[%s1 + $0x3a8] sm:$0xff]
    %v177 = vld [vmem:[%s1 + $0x3b0] sm:$0xff]
    %v178 = vld [vmem:[%s1 + $0x3b8] sm:$0xff]
    %v179 = vld [vmem:[%s1 + $0x3c0] sm:$0xff]
    %v180 = vld [vmem:[%s1 + $0x3c8] sm:$0xff]
    %v181 = vld [vmem:[%s1 + $0x3d0] sm:$0xff]
    %v182 = vld [vmem:[%s1 + $0x3d8] sm:$0xff]
    %v183 = vld [vmem:[%s1 + $0x3e0] sm:$0xff]
    %v184 = vld [vmem:[%s1 + $0x3e8] sm:$0xff]
    %v185 = vld [vmem:[%s1 + $0x3f0] sm:$0xff]
    %v186 = vld [vmem:[%s1 + $0x3f8] sm:$0xff]
    %v195 = vunpack.c.l.b16 %v51
    %v196 = vunpack.c.h.b16 %v51
    %v197 = vunpack.c.l.b16 %v52
    %v198 = vunpack.c.h.b16 %v52
    %v199 = vunpack.c.l.b16 %v53
    %v200 = vunpack.c.h.b16 %v53
    %v201 = vunpack.c.l.b16 %v54
    %v202 = vunpack.c.h.b16 %v54
    %v203 = vunpack.c.l.b16 %v55
    %v204 = vunpack.c.h.b16 %v55
    %v205 = vunpack.c.l.b16 %v56
    %v206 = vunpack.c.h.b16 %v56
    %v207 = vunpack.c.l.b16 %v57
    %v208 = vunpack.c.h.b16 %v57
    %v209 = vunpack.c.l.b16 %v58
    %v210 = vunpack.c.h.b16 %v58
    %v211 = vpack.c.b16 %v199, %v195
    %v212 = vpack.c.b16 %v200, %v196
    %v213 = vpack.c.b16 %v201, %v197
    %v214 = vpack.c.b16 %v202, %v198
    %v215 = vpack.c.b16 %v207, %v203
    %v216 = vpack.c.b16 %v208, %v204
    %v217 = vpack.c.b16 %v209, %v205
    %v218 = vpack.c.b16 %v210, %v206
    %v355 = vunpack.c.l.b16 %v59
    %v356 = vunpack.c.h.b16 %v59
    %v357 = vunpack.c.l.b16 %v60
    %v358 = vunpack.c.h.b16 %v60
    %v359 = vunpack.c.l.b16 %v61
    %v360 = vunpack.c.h.b16 %v61
    %v361 = vunpack.c.l.b16 %v62
    %v362 = vunpack.c.h.b16 %v62
    %v363 = vunpack.c.l.b16 %v63
    %v364 = vunpack.c.h.b16 %v63
    %v365 = vunpack.c.l.b16 %v64
    %v366 = vunpack.c.h.b16 %v64
    %v367 = vunpack.c.l.b16 %v65
    %v368 = vunpack.c.h.b16 %v65
    %v369 = vunpack.c.l.b16 %v66
    %v370 = vunpack.c.h.b16 %v66
    %v371 = vunpack.c.l.b16 %v67
    %v372 = vunpack.c.h.b16 %v67
    %v373 = vunpack.c.l.b16 %v68
    %v374 = vunpack.c.h.b16 %v68
    %v375 = vunpack.c.l.b16 %v69
    %v376 = vunpack.c.h.b16 %v69
    %v377 = vunpack.c.l.b16 %v70
    %v378 = vunpack.c.h.b16 %v70
    %v379 = vunpack.c.l.b16 %v71
    %v380 = vunpack.c.h.b16 %v71
    %v381 = vunpack.c.l.b16 %v72
    %v382 = vunpack.c.h.b16 %v72
    %v383 = vunpack.c.l.b16 %v73
    %v384 = vunpack.c.h.b16 %v73
    %v385 = vunpack.c.l.b16 %v74
    %v386 = vunpack.c.h.b16 %v74
    %v387 = vunpack.c.l.b16 %v75
    %v388 = vunpack.c.h.b16 %v75
    %v389 = vunpack.c.l.b16 %v76
    %v390 = vunpack.c.h.b16 %v76
    %v391 = vunpack.c.l.b16 %v77
    %v392 = vunpack.c.h.b16 %v77
    %v393 = vunpack.c.l.b16 %v78
    %v394 = vunpack.c.h.b16 %v78
    %v395 = vunpack.c.l.b16 %v79
    %v396 = vunpack.c.h.b16 %v79
    %v397 = vunpack.c.l.b16 %v80
    %v398 = vunpack.c.h.b16 %v80
    %v399 = vunpack.c.l.b16 %v81
    %v400 = vunpack.c.h.b16 %v81
    %v401 = vunpack.c.l.b16 %v82
    %v402 = vunpack.c.h.b16 %v82
    %v403 = vunpack.c.l.b16 %v83
    %v404 = vunpack.c.h.b16 %v83
    %v405 = vunpack.c.l.b16 %v84
    %v406 = vunpack.c.h.b16 %v84
    %v407 = vunpack.c.l.b16 %v85
    %v408 = vunpack.c.h.b16 %v85
    %v409 = vunpack.c.l.b16 %v86
    %v410 = vunpack.c.h.b16 %v86
    %v411 = vunpack.c.l.b16 %v87
    %v412 = vunpack.c.h.b16 %v87
    %v413 = vunpack.c.l.b16 %v88
    %v414 = vunpack.c.h.b16 %v88
    %v415 = vunpack.c.l.b16 %v89
    %v416 = vunpack.c.h.b16 %v89
    %v417 = vunpack.c.l.b16 %v90
    %v418 = vunpack.c.h.b16 %v90
    %v419 = vunpack.c.l.b16 %v91
    %v420 = vunpack.c.h.b16 %v91
    %v421 = vunpack.c.l.b16 %v92
    %v422 = vunpack.c.h.b16 %v92
    %v423 = vunpack.c.l.b16 %v93
    %v424 = vunpack.c.h.b16 %v93
    %v425 = vunpack.c.l.b16 %v94
    %v426 = vunpack.c.h.b16 %v94
    %v427 = vunpack.c.l.b16 %v95
    %v428 = vunpack.c.h.b16 %v95
    %v429 = vunpack.c.l.b16 %v96
    %v430 = vunpack.c.h.b16 %v96
    %v431 = vunpack.c.l.b16 %v97
    %v432 = vunpack.c.h.b16 %v97
    %v433 = vunpack.c.l.b16 %v98
    %v434 = vunpack.c.h.b16 %v98
    %v435 = vunpack.c.l.b16 %v99
    %v436 = vunpack.c.h.b16 %v99
    %v437 = vunpack.c.l.b16 %v100
    %v438 = vunpack.c.h.b16 %v100
    %v439 = vunpack.c.l.b16 %v101
    %v440 = vunpack.c.h.b16 %v101
    %v441 = vunpack.c.l.b16 %v102
    %v442 = vunpack.c.h.b16 %v102
    %v443 = vunpack.c.l.b16 %v103
    %v444 = vunpack.c.h.b16 %v103
    %v445 = vunpack.c.l.b16 %v104
    %v446 = vunpack.c.h.b16 %v104
    %v447 = vunpack.c.l.b16 %v105
    %v448 = vunpack.c.h.b16 %v105
    %v449 = vunpack.c.l.b16 %v106
    %v450 = vunpack.c.h.b16 %v106
    %v451 = vunpack.c.l.b16 %v107
    %v452 = vunpack.c.h.b16 %v107
    %v453 = vunpack.c.l.b16 %v108
    %v454 = vunpack.c.h.b16 %v108
    %v455 = vunpack.c.l.b16 %v109
    %v456 = vunpack.c.h.b16 %v109
    %v457 = vunpack.c.l.b16 %v110
    %v458 = vunpack.c.h.b16 %v110
    %v459 = vunpack.c.l.b16 %v111
    %v460 = vunpack.c.h.b16 %v111
    %v461 = vunpack.c.l.b16 %v112
    %v462 = vunpack.c.h.b16 %v112
    %v463 = vunpack.c.l.b16 %v113
    %v464 = vunpack.c.h.b16 %v113
    %v465 = vunpack.c.l.b16 %v114
    %v466 = vunpack.c.h.b16 %v114
    %v467 = vunpack.c.l.b16 %v115
    %v468 = vunpack.c.h.b16 %v115
    %v469 = vunpack.c.l.b16 %v116
    %v470 = vunpack.c.h.b16 %v116
    %v471 = vunpack.c.l.b16 %v117
    %v472 = vunpack.c.h.b16 %v117
    %v473 = vunpack.c.l.b16 %v118
    %v474 = vunpack.c.h.b16 %v118
    %v475 = vunpack.c.l.b16 %v119
    %v476 = vunpack.c.h.b16 %v119
    %v477 = vunpack.c.l.b16 %v120
    %v478 = vunpack.c.h.b16 %v120
    %v479 = vunpack.c.l.b16 %v121
    %v480 = vunpack.c.h.b16 %v121
    %v481 = vunpack.c.l.b16 %v122
    %v482 = vunpack.c.h.b16 %v122
    %v483 = vunpack.c.l.b16 %v123
    %v484 = vunpack.c.h.b16 %v123
    %v485 = vunpack.c.l.b16 %v124
    %v486 = vunpack.c.h.b16 %v124
    %v487 = vunpack.c.l.b16 %v125
    %v488 = vunpack.c.h.b16 %v125
    %v489 = vunpack.c.l.b16 %v126
    %v490 = vunpack.c.h.b16 %v126
    %v491 = vunpack.c.l.b16 %v127
    %v492 = vunpack.c.h.b16 %v127
    %v493 = vunpack.c.l.b16 %v128
    %v494 = vunpack.c.h.b16 %v128
    %v495 = vunpack.c.l.b16 %v129
    %v496 = vunpack.c.h.b16 %v129
    %v497 = vunpack.c.l.b16 %v130
    %v498 = vunpack.c.h.b16 %v130
    %v499 = vunpack.c.l.b16 %v131
    %v500 = vunpack.c.h.b16 %v131
    %v501 = vunpack.c.l.b16 %v132
    %v502 = vunpack.c.h.b16 %v132
    %v503 = vunpack.c.l.b16 %v133
    %v504 = vunpack.c.h.b16 %v133
    %v505 = vunpack.c.l.b16 %v134
    %v506 = vunpack.c.h.b16 %v134
    %v507 = vunpack.c.l.b16 %v135
    %v508 = vunpack.c.h.b16 %v135
    %v509 = vunpack.c.l.b16 %v136
    %v510 = vunpack.c.h.b16 %v136
    %v511 = vunpack.c.l.b16 %v137
    %v512 = vunpack.c.h.b16 %v137
    %v513 = vunpack.c.l.b16 %v138
    %v514 = vunpack.c.h.b16 %v138
    %v515 = vunpack.c.l.b16 %v139
    %v516 = vunpack.c.h.b16 %v139
    %v517 = vunpack.c.l.b16 %v140
    %v518 = vunpack.c.h.b16 %v140
    %v519 = vunpack.c.l.b16 %v141
    %v520 = vunpack.c.h.b16 %v141
    %v521 = vunpack.c.l.b16 %v142
    %v522 = vunpack.c.h.b16 %v142
    %v523 = vunpack.c.l.b16 %v143
    %v524 = vunpack.c.h.b16 %v143
    %v525 = vunpack.c.l.b16 %v144
    %v526 = vunpack.c.h.b16 %v144
    %v527 = vunpack.c.l.b16 %v145
    %v528 = vunpack.c.h.b16 %v145
    %v529 = vunpack.c.l.b16 %v146
    %v530 = vunpack.c.h.b16 %v146
    %v531 = vunpack.c.l.b16 %v147
    %v532 = vunpack.c.h.b16 %v147
    %v533 = vunpack.c.l.b16 %v148
    %v534 = vunpack.c.h.b16 %v148
    %v535 = vunpack.c.l.b16 %v149
    %v536 = vunpack.c.h.b16 %v149
    %v537 = vunpack.c.l.b16 %v150
    %v538 = vunpack.c.h.b16 %v150
    %v539 = vunpack.c.l.b16 %v151
    %v540 = vunpack.c.h.b16 %v151
    %v541 = vunpack.c.l.b16 %v152
    %v542 = vunpack.c.h.b16 %v152
    %v543 = vunpack.c.l.b16 %v153
    %v544 = vunpack.c.h.b16 %v153
    %v545 = vunpack.c.l.b16 %v154
    %v546 = vunpack.c.h.b16 %v154
    %v547 = vunpack.c.l.b16 %v155
    %v548 = vunpack.c.h.b16 %v155
    %v549 = vunpack.c.l.b16 %v156
    %v550 = vunpack.c.h.b16 %v156
    %v551 = vunpack.c.l.b16 %v157
    %v552 = vunpack.c.h.b16 %v157
    %v553 = vunpack.c.l.b16 %v158
    %v554 = vunpack.c.h.b16 %v158
    %v555 = vunpack.c.l.b16 %v159
    %v556 = vunpack.c.h.b16 %v159
    %v557 = vunpack.c.l.b16 %v160
    %v558 = vunpack.c.h.b16 %v160
    %v559 = vunpack.c.l.b16 %v161
    %v560 = vunpack.c.h.b16 %v161
    %v561 = vunpack.c.l.b16 %v162
    %v562 = vunpack.c.h.b16 %v162
    %v563 = vunpack.c.l.b16 %v163
    %v564 = vunpack.c.h.b16 %v163
    %v565 = vunpack.c.l.b16 %v164
    %v566 = vunpack.c.h.b16 %v164
    %v567 = vunpack.c.l.b16 %v165
    %v568 = vunpack.c.h.b16 %v165
    %v569 = vunpack.c.l.b16 %v166
    %v570 = vunpack.c.h.b16 %v166
    %v571 = vunpack.c.l.b16 %v167
    %v572 = vunpack.c.h.b16 %v167
    %v573 = vunpack.c.l.b16 %v168
    %v574 = vunpack.c.h.b16 %v168
    %v575 = vunpack.c.l.b16 %v169
    %v576 = vunpack.c.h.b16 %v169
    %v577 = vunpack.c.l.b16 %v170
    %v578 = vunpack.c.h.b16 %v170
    %v579 = vunpack.c.l.b16 %v171
    %v580 = vunpack.c.h.b16 %v171
    %v581 = vunpack.c.l.b16 %v172
    %v582 = vunpack.c.h.b16 %v172
    %v583 = vunpack.c.l.b16 %v173
    %v584 = vunpack.c.h.b16 %v173
    %v585 = vunpack.c.l.b16 %v174
    %v586 = vunpack.c.h.b16 %v174
    %v587 = vunpack.c.l.b16 %v175
    %v588 = vunpack.c.h.b16 %v175
    %v589 = vunpack.c.l.b16 %v176
    %v590 = vunpack.c.h.b16 %v176
    %v591 = vunpack.c.l.b16 %v177
    %v592 = vunpack.c.h.b16 %v177
    %v593 = vunpack.c.l.b16 %v178
    %v594 = vunpack.c.h.b16 %v178
    %v595 = vunpack.c.l.b16 %v179
    %v596 = vunpack.c.h.b16 %v179
    %v597 = vunpack.c.l.b16 %v180
    %v598 = vunpack.c.h.b16 %v180
    %v599 = vunpack.c.l.b16 %v181
    %v600 = vunpack.c.h.b16 %v181
    %v601 = vunpack.c.l.b16 %v182
    %v602 = vunpack.c.h.b16 %v182
    %v603 = vunpack.c.l.b16 %v183
    %v604 = vunpack.c.h.b16 %v183
    %v605 = vunpack.c.l.b16 %v184
    %v606 = vunpack.c.h.b16 %v184
    %v607 = vunpack.c.l.b16 %v185
    %v608 = vunpack.c.h.b16 %v185
    %v609 = vunpack.c.l.b16 %v186
    %v610 = vunpack.c.h.b16 %v186
    %v611 = vpack.c.b16 %v359, %v355
    %v612 = vpack.c.b16 %v360, %v356
    %v613 = vpack.c.b16 %v361, %v357
    %v614 = vpack.c.b16 %v362, %v358
    %v615 = vpack.c.b16 %v367, %v363
    %v616 = vpack.c.b16 %v368, %v364
    %v617 = vpack.c.b16 %v369, %v365
    %v618 = vpack.c.b16 %v370, %v366
    %v619 = vpack.c.b16 %v375, %v371
    %v620 = vpack.c.b16 %v376, %v372
    %v621 = vpack.c.b16 %v377, %v373
    %v622 = vpack.c.b16 %v378, %v374
    %v623 = vpack.c.b16 %v383, %v379
    %v624 = vpack.c.b16 %v384, %v380
    %v625 = vpack.c.b16 %v385, %v381
    %v626 = vpack.c.b16 %v386, %v382
    %v627 = vpack.c.b16 %v391, %v387
    %v628 = vpack.c.b16 %v392, %v388
    %v629 = vpack.c.b16 %v393, %v389
    %v630 = vpack.c.b16 %v394, %v390
    %v631 = vpack.c.b16 %v399, %v395
    %v632 = vpack.c.b16 %v400, %v396
    %v633 = vpack.c.b16 %v401, %v397
    %v634 = vpack.c.b16 %v402, %v398
    %v635 = vpack.c.b16 %v407, %v403
    %v636 = vpack.c.b16 %v408, %v404
    %v637 = vpack.c.b16 %v409, %v405
    %v638 = vpack.c.b16 %v410, %v406
    %v639 = vpack.c.b16 %v415, %v411
    %v640 = vpack.c.b16 %v416, %v412
    %v641 = vpack.c.b16 %v417, %v413
    %v642 = vpack.c.b16 %v418, %v414
    %v643 = vpack.c.b16 %v423, %v419
    %v644 = vpack.c.b16 %v424, %v420
    %v645 = vpack.c.b16 %v425, %v421
    %v646 = vpack.c.b16 %v426, %v422
    %v647 = vpack.c.b16 %v431, %v427
    %v648 = vpack.c.b16 %v432, %v428
    %v649 = vpack.c.b16 %v433, %v429
    %v650 = vpack.c.b16 %v434, %v430
    %v651 = vpack.c.b16 %v439, %v435
    %v652 = vpack.c.b16 %v440, %v436
    %v653 = vpack.c.b16 %v441, %v437
    %v654 = vpack.c.b16 %v442, %v438
    %v655 = vpack.c.b16 %v447, %v443
    %v656 = vpack.c.b16 %v448, %v444
    %v657 = vpack.c.b16 %v449, %v445
    %v658 = vpack.c.b16 %v450, %v446
    %v659 = vpack.c.b16 %v455, %v451
    %v660 = vpack.c.b16 %v456, %v452
    %v661 = vpack.c.b16 %v457, %v453
    %v662 = vpack.c.b16 %v458, %v454
    %v663 = vpack.c.b16 %v463, %v459
    %v664 = vpack.c.b16 %v464, %v460
    %v665 = vpack.c.b16 %v465, %v461
    %v666 = vpack.c.b16 %v466, %v462
    %v667 = vpack.c.b16 %v471, %v467
    %v668 = vpack.c.b16 %v472, %v468
    %v669 = vpack.c.b16 %v473, %v469
    %v670 = vpack.c.b16 %v474, %v470
    %v671 = vpack.c.b16 %v479, %v475
    %v672 = vpack.c.b16 %v480, %v476
    %v673 = vpack.c.b16 %v481, %v477
    %v674 = vpack.c.b16 %v482, %v478
    %v675 = vpack.c.b16 %v487, %v483
    %v676 = vpack.c.b16 %v488, %v484
    %v677 = vpack.c.b16 %v489, %v485
    %v678 = vpack.c.b16 %v490, %v486
    %v679 = vpack.c.b16 %v495, %v491
    %v680 = vpack.c.b16 %v496, %v492
    %v681 = vpack.c.b16 %v497, %v493
    %v682 = vpack.c.b16 %v498, %v494
    %v683 = vpack.c.b16 %v503, %v499
    %v684 = vpack.c.b16 %v504, %v500
    %v685 = vpack.c.b16 %v505, %v501
    %v686 = vpack.c.b16 %v506, %v502
    %v687 = vpack.c.b16 %v511, %v507
    %v688 = vpack.c.b16 %v512, %v508
    %v689 = vpack.c.b16 %v513, %v509
    %v690 = vpack.c.b16 %v514, %v510
    %v691 = vpack.c.b16 %v519, %v515
    %v692 = vpack.c.b16 %v520, %v516
    %v693 = vpack.c.b16 %v521, %v517
    %v694 = vpack.c.b16 %v522, %v518
    %v695 = vpack.c.b16 %v527, %v523
    %v696 = vpack.c.b16 %v528, %v524
    %v697 = vpack.c.b16 %v529, %v525
    %v698 = vpack.c.b16 %v530, %v526
    %v699 = vpack.c.b16 %v535, %v531
    %v700 = vpack.c.b16 %v536, %v532
    %v701 = vpack.c.b16 %v537, %v533
    %v702 = vpack.c.b16 %v538, %v534
    %v703 = vpack.c.b16 %v543, %v539
    %v704 = vpack.c.b16 %v544, %v540
    %v705 = vpack.c.b16 %v545, %v541
    %v706 = vpack.c.b16 %v546, %v542
    %v707 = vpack.c.b16 %v551, %v547
    %v708 = vpack.c.b16 %v552, %v548
    %v709 = vpack.c.b16 %v553, %v549
    %v710 = vpack.c.b16 %v554, %v550
    %v711 = vpack.c.b16 %v559, %v555
    %v712 = vpack.c.b16 %v560, %v556
    %v713 = vpack.c.b16 %v561, %v557
    %v714 = vpack.c.b16 %v562, %v558
    %v715 = vpack.c.b16 %v567, %v563
    %v716 = vpack.c.b16 %v568, %v564
    %v717 = vpack.c.b16 %v569, %v565
    %v718 = vpack.c.b16 %v570, %v566
    %v719 = vpack.c.b16 %v575, %v571
    %v720 = vpack.c.b16 %v576, %v572
    %v721 = vpack.c.b16 %v577, %v573
    %v722 = vpack.c.b16 %v578, %v574
    %v723 = vpack.c.b16 %v583, %v579
    %v724 = vpack.c.b16 %v584, %v580
    %v725 = vpack.c.b16 %v585, %v581
    %v726 = vpack.c.b16 %v586, %v582
    %v727 = vpack.c.b16 %v591, %v587
    %v728 = vpack.c.b16 %v592, %v588
    %v729 = vpack.c.b16 %v593, %v589
    %v730 = vpack.c.b16 %v594, %v590
    %v731 = vpack.c.b16 %v599, %v595
    %v732 = vpack.c.b16 %v600, %v596
    %v733 = vpack.c.b16 %v601, %v597
    %v734 = vpack.c.b16 %v602, %v598
    %v735 = vpack.c.b16 %v607, %v603
    %v736 = vpack.c.b16 %v608, %v604
    %v737 = vpack.c.b16 %v609, %v605
    %v738 = vpack.c.b16 %v610, %v606
    %867 = vmatprep.subr.bf16.mxu0 %v640
    %868 = vmatpush1.bf16.msra.mxu0 %v639
    %869 = vmatprep.subr.bf16.mxu0 %v636
    %870 = vmatpush1.bf16.msra.mxu0 %v635
    %871 = vmatprep.subr.bf16.mxu0 %v632
    %872 = vmatpush1.bf16.msra.mxu0 %v631
    %873 = vmatprep.subr.bf16.mxu0 %v628
    %874 = vmatpush1.bf16.msra.mxu0 %v627
    %875 = vmatprep.subr.bf16.mxu0 %v624
    %876 = vmatpush1.bf16.msra.mxu0 %v623
    %877 = vmatprep.subr.bf16.mxu0 %v620
    %878 = vmatpush1.bf16.msra.mxu0 %v619
    %879 = vmatprep.subr.bf16.mxu0 %v616
    %880 = vmatpush1.bf16.msra.mxu0 %v615
    %881 = vmatprep.subr.bf16.mxu0 %v612
    %882 = vmatpush1.bf16.msra.mxu0 %v611
    %883 = vmatprep.subr.bf16.mxu0 %v672
    %884 = vmatpush2.bf16.msra.mxu0 %v671
    %885 = vmatprep.subr.bf16.mxu0 %v668
    %886 = vmatpush2.bf16.msra.mxu0 %v667
    %887 = vmatprep.subr.bf16.mxu0 %v664
    %888 = vmatpush2.bf16.msra.mxu0 %v663
    %889 = vmatprep.subr.bf16.mxu0 %v660
    %890 = vmatpush2.bf16.msra.mxu0 %v659
    %891 = vmatprep.subr.bf16.mxu0 %v656
    %892 = vmatpush2.bf16.msra.mxu0 %v655
    %893 = vmatprep.subr.bf16.mxu0 %v652
    %894 = vmatpush2.bf16.msra.mxu0 %v651
    %895 = vmatprep.subr.bf16.mxu0 %v648
    %896 = vmatpush2.bf16.msra.mxu0 %v647
    %897 = vmatprep.subr.bf16.mxu0 %v644
    %898 = vmatpush2.bf16.msra.mxu0 %v643
    %899 = vmatprep.mubr.bf16.mxu0 %v212
    %900 = vmatmul.mubr.bf16.gmra.mxu0 %v211
    %v901 = vpop.f32.mrf.mxu0
    %v902 = vadd.f32 0.0, %v901
    %v903 = vpop.f32.mrf.mxu0
    %v904 = vadd.f32 0.0, %v903
    %v905 = vpop.f32.mrf.mxu0
    %v906 = vadd.f32 0.0, %v905
    %v907 = vpop.f32.mrf.mxu0
    %v908 = vadd.f32 0.0, %v907
    %909 = vmatprep.mubr.bf16.mxu0 %v216
    %910 = vmatmul.mubr.bf16.gmra.mxu0 %v215
    %v911 = vpop.f32.mrf.mxu0
    %v912 = vadd.f32 0.0, %v911
    %v913 = vpop.f32.mrf.mxu0
    %v914 = vadd.f32 0.0, %v913
    %v915 = vpop.f32.mrf.mxu0
    %v916 = vadd.f32 0.0, %v915
    %v917 = vpop.f32.mrf.mxu0
    %v918 = vadd.f32 0.0, %v917
    %919 = vdwg.mxu0
    %920 = vmatprep.subr.bf16.mxu0 %v704
    %921 = vmatpush1.bf16.msra.mxu0 %v703
    %922 = vmatprep.subr.bf16.mxu0 %v700
    %923 = vmatpush1.bf16.msra.mxu0 %v699
    %924 = vmatprep.subr.bf16.mxu0 %v696
    %925 = vmatpush1.bf16.msra.mxu0 %v695
    %926 = vmatprep.subr.bf16.mxu0 %v692
    %927 = vmatpush1.bf16.msra.mxu0 %v691
    %928 = vmatprep.subr.bf16.mxu0 %v688
    %929 = vmatpush1.bf16.msra.mxu0 %v687
    %930 = vmatprep.subr.bf16.mxu0 %v684
    %931 = vmatpush1.bf16.msra.mxu0 %v683
    %932 = vmatprep.subr.bf16.mxu0 %v680
    %933 = vmatpush1.bf16.msra.mxu0 %v679
    %934 = vmatprep.subr.bf16.mxu0 %v676
    %935 = vmatpush1.bf16.msra.mxu0 %v675
    %936 = vmatprep.subr.bf16.mxu0 %v736
    %937 = vmatpush2.bf16.msra.mxu0 %v735
    %938 = vmatprep.subr.bf16.mxu0 %v732
    %939 = vmatpush2.bf16.msra.mxu0 %v731
    %940 = vmatprep.subr.bf16.mxu0 %v728
    %941 = vmatpush2.bf16.msra.mxu0 %v727
    %942 = vmatprep.subr.bf16.mxu0 %v724
    %943 = vmatpush2.bf16.msra.mxu0 %v723
    %944 = vmatprep.subr.bf16.mxu0 %v720
    %945 = vmatpush2.bf16.msra.mxu0 %v719
    %946 = vmatprep.subr.bf16.mxu0 %v716
    %947 = vmatpush2.bf16.msra.mxu0 %v715
    %948 = vmatprep.subr.bf16.mxu0 %v712
    %949 = vmatpush2.bf16.msra.mxu0 %v711
    %950 = vmatprep.subr.bf16.mxu0 %v708
    %951 = vmatpush2.bf16.msra.mxu0 %v707
    %952 = vmatprep.mubr.bf16.mxu0 %v214
    %953 = vmatmul.mubr.bf16.gmra.mxu0 %v213
    %v954 = vpop.f32.mrf.mxu0
    %v955 = vadd.f32 %v902, %v954
    %v956 = vpop.f32.mrf.mxu0
    %v957 = vadd.f32 %v904, %v956
    %v958 = vpop.f32.mrf.mxu0
    %v959 = vadd.f32 %v906, %v958
    %v960 = vpop.f32.mrf.mxu0
    %v961 = vadd.f32 %v908, %v960
    %962 = vmatprep.mubr.bf16.mxu0 %v218
    %963 = vmatmul.mubr.bf16.gmra.mxu0 %v217
    %v964 = vpop.f32.mrf.mxu0
    %v965 = vadd.f32 %v912, %v964
    %v966 = vpop.f32.mrf.mxu0
    %v967 = vadd.f32 %v914, %v966
    %v968 = vpop.f32.mrf.mxu0
    %v969 = vadd.f32 %v916, %v968
    %v970 = vpop.f32.mrf.mxu0
    %v971 = vadd.f32 %v918, %v970
    %972 = vdwg.mxu0
    %973 = vmatprep.subr.bf16.mxu0 %v642
    %974 = vmatpush1.bf16.msra.mxu0 %v641
    %975 = vmatprep.subr.bf16.mxu0 %v638
    %976 = vmatpush1.bf16.msra.mxu0 %v637
    %977 = vmatprep.subr.bf16.mxu0 %v634
    %978 = vmatpush1.bf16.msra.mxu0 %v633
    %979 = vmatprep.subr.bf16.mxu0 %v630
    %980 = vmatpush1.bf16.msra.mxu0 %v629
    %981 = vmatprep.subr.bf16.mxu0 %v626
    %982 = vmatpush1.bf16.msra.mxu0 %v625
    %983 = vmatprep.subr.bf16.mxu0 %v622
    %984 = vmatpush1.bf16.msra.mxu0 %v621
    %985 = vmatprep.subr.bf16.mxu0 %v618
    %986 = vmatpush1.bf16.msra.mxu0 %v617
    %987 = vmatprep.subr.bf16.mxu0 %v614
    %988 = vmatpush1.bf16.msra.mxu0 %v613
    %989 = vmatprep.subr.bf16.mxu0 %v674
    %990 = vmatpush2.bf16.msra.mxu0 %v673
    %991 = vmatprep.subr.bf16.mxu0 %v670
    %992 = vmatpush2.bf16.msra.mxu0 %v669
    %993 = vmatprep.subr.bf16.mxu0 %v666
    %994 = vmatpush2.bf16.msra.mxu0 %v665
    %995 = vmatprep.subr.bf16.mxu0 %v662
    %996 = vmatpush2.bf16.msra.mxu0 %v661
    %997 = vmatprep.subr.bf16.mxu0 %v658
    %998 = vmatpush2.bf16.msra.mxu0 %v657
    %999 = vmatprep.subr.bf16.mxu0 %v654
    %1000 = vmatpush2.bf16.msra.mxu0 %v653
    %1001 = vmatprep.subr.bf16.mxu0 %v650
    %1002 = vmatpush2.bf16.msra.mxu0 %v649
    %1003 = vmatprep.subr.bf16.mxu0 %v646
    %1004 = vmatpush2.bf16.msra.mxu0 %v645
    %1005 = vmatprep.mubr.bf16.mxu0 %v212
    %1006 = vmatmul.mubr.bf16.gmra.mxu0 %v211
    %v1007 = vpop.f32.mrf.mxu0
    %v1008 = vadd.f32 0.0, %v1007
    %v1009 = vpop.f32.mrf.mxu0
    %v1010 = vadd.f32 0.0, %v1009
    %v1011 = vpop.f32.mrf.mxu0
    %v1012 = vadd.f32 0.0, %v1011
    %v1013 = vpop.f32.mrf.mxu0
    %v1014 = vadd.f32 0.0, %v1013
    %1015 = vmatprep.mubr.bf16.mxu0 %v216
    %1016 = vmatmul.mubr.bf16.gmra.mxu0 %v215
    %v1017 = vpop.f32.mrf.mxu0
    %v1018 = vadd.f32 0.0, %v1017
    %v1019 = vpop.f32.mrf.mxu0
    %v1020 = vadd.f32 0.0, %v1019
    %v1021 = vpop.f32.mrf.mxu0
    %v1022 = vadd.f32 0.0, %v1021
    %v1023 = vpop.f32.mrf.mxu0
    %v1024 = vadd.f32 0.0, %v1023
    %1025 = vdwg.mxu0
    %1026 = vmatprep.subr.bf16.mxu0 %v706
    %1027 = vmatpush1.bf16.msra.mxu0 %v705
    %1028 = vmatprep.subr.bf16.mxu0 %v702
    %1029 = vmatpush1.bf16.msra.mxu0 %v701
    %1030 = vmatprep.subr.bf16.mxu0 %v698
    %1031 = vmatpush1.bf16.msra.mxu0 %v697
    %1032 = vmatprep.subr.bf16.mxu0 %v694
    %1033 = vmatpush1.bf16.msra.mxu0 %v693
    %1034 = vmatprep.subr.bf16.mxu0 %v690
    %1035 = vmatpush1.bf16.msra.mxu0 %v689
    %1036 = vmatprep.subr.bf16.mxu0 %v686
    %1037 = vmatpush1.bf16.msra.mxu0 %v685
    %1038 = vmatprep.subr.bf16.mxu0 %v682
    %1039 = vmatpush1.bf16.msra.mxu0 %v681
    %1040 = vmatprep.subr.bf16.mxu0 %v678
    %1041 = vmatpush1.bf16.msra.mxu0 %v677
    %1042 = vmatprep.subr.bf16.mxu0 %v738
    %1043 = vmatpush2.bf16.msra.mxu0 %v737
    %1044 = vmatprep.subr.bf16.mxu0 %v734
    %1045 = vmatpush2.bf16.msra.mxu0 %v733
    %1046 = vmatprep.subr.bf16.mxu0 %v730
    %1047 = vmatpush2.bf16.msra.mxu0 %v729
    %1048 = vmatprep.subr.bf16.mxu0 %v726
    %1049 = vmatpush2.bf16.msra.mxu0 %v725
    %1050 = vmatprep.subr.bf16.mxu0 %v722
    %1051 = vmatpush2.bf16.msra.mxu0 %v721
    %1052 = vmatprep.subr.bf16.mxu0 %v718
    %1053 = vmatpush2.bf16.msra.mxu0 %v717
    %1054 = vmatprep.subr.bf16.mxu0 %v714
    %1055 = vmatpush2.bf16.msra.mxu0 %v713
    %1056 = vmatprep.subr.bf16.mxu0 %v710
    %1057 = vmatpush2.bf16.msra.mxu0 %v709
    %1058 = vmatprep.mubr.bf16.mxu0 %v214
    %1059 = vmatmul.mubr.bf16.gmra.mxu0 %v213
    %v1060 = vpop.f32.mrf.mxu0
    %v1061 = vadd.f32 %v1008, %v1060
    %v1062 = vpop.f32.mrf.mxu0
    %v1063 = vadd.f32 %v1010, %v1062
    %v1064 = vpop.f32.mrf.mxu0
    %v1065 = vadd.f32 %v1012, %v1064
    %v1066 = vpop.f32.mrf.mxu0
    %v1067 = vadd.f32 %v1014, %v1066
    %1068 = vmatprep.mubr.bf16.mxu0 %v218
    %1069 = vmatmul.mubr.bf16.gmra.mxu0 %v217
    %v1070 = vpop.f32.mrf.mxu0
    %v1071 = vadd.f32 %v1018, %v1070
    %v1072 = vpop.f32.mrf.mxu0
    %v1073 = vadd.f32 %v1020, %v1072
    %v1074 = vpop.f32.mrf.mxu0
    %v1075 = vadd.f32 %v1022, %v1074
    %v1076 = vpop.f32.mrf.mxu0
    %v1077 = vadd.f32 %v1024, %v1076
    %1078 = vdwg.mxu0
    %v1079 = vadd.f32 %v35, %v955
    %v1080 = vadd.f32 %v36, %v957
    %v1081 = vadd.f32 %v37, %v1061
    %v1082 = vadd.f32 %v38, %v1063
    %v1083 = vadd.f32 %v39, %v959
    %v1084 = vadd.f32 %v40, %v961
    %v1085 = vadd.f32 %v41, %v1065
    %v1086 = vadd.f32 %v42, %v1067
    %v1087 = vadd.f32 %v43, %v965
    %v1088 = vadd.f32 %v44, %v967
    %v1089 = vadd.f32 %v45, %v1071
    %v1090 = vadd.f32 %v46, %v1073
    %v1091 = vadd.f32 %v47, %v969
    %v1092 = vadd.f32 %v48, %v971
    %v1093 = vadd.f32 %v49, %v1075
    %v1094 = vadd.f32 %v50, %v1077
    %1095 = vst [vmem:[#allocation2] sm:$0xff] %v1079
    %1096 = vst [vmem:[#allocation2 + $0x8] sm:$0xff] %v1080
    %1097 = vst [vmem:[#allocation2 + $0x10] sm:$0xff] %v1081
    %1098 = vst [vmem:[#allocation2 + $0x18] sm:$0xff] %v1082
    %1099 = vst [vmem:[#allocation2 + $0x20] sm:$0xff] %v1083
    %1100 = vst [vmem:[#allocation2 + $0x28] sm:$0xff] %v1084
    %1101 = vst [vmem:[#allocation2 + $0x30] sm:$0xff] %v1085
    %1102 = vst [vmem:[#allocation2 + $0x38] sm:$0xff] %v1086
    %1103 = vst [vmem:[#allocation2 + $0x40] sm:$0xff] %v1087
    %1104 = vst [vmem:[#allocation2 + $0x48] sm:$0xff] %v1088
    %1105 = vst [vmem:[#allocation2 + $0x50] sm:$0xff] %v1089
    %1106 = vst [vmem:[#allocation2 + $0x58] sm:$0xff] %v1090
    %1107 = vst [vmem:[#allocation2 + $0x60] sm:$0xff] %v1091
    %1108 = vst [vmem:[#allocation2 + $0x68] sm:$0xff] %v1092
    %1109 = vst [vmem:[#allocation2 + $0x70] sm:$0xff] %v1093
    %1110 = vst [vmem:[#allocation2 + $0x78] sm:$0xff] %v1094
    // Predicated region
    $region18: #{attention_forward.5} parent=1 // pred_check
      %p1111 = pneg %p15
    $region19: #{attention_forward.5} parent=1 // pred_check_branch
      %1113 = sbr.rel (%p1111) target = $region21
    $region20: #{attention_forward.5} parent=1 // pred_region
      %v1114 = vld [vmem:[#allocation2] sm:$0xff]
      %v1115 = vld [vmem:[#allocation2 + $0x8] sm:$0xff]
      %v1116 = vld [vmem:[#allocation2 + $0x10] sm:$0xff]
      %v1117 = vld [vmem:[#allocation2 + $0x18] sm:$0xff]
      %v1118 = vld [vmem:[#allocation2 + $0x20] sm:$0xff]
      %v1119 = vld [vmem:[#allocation2 + $0x28] sm:$0xff]
      %v1120 = vld [vmem:[#allocation2 + $0x30] sm:$0xff]
      %v1121 = vld [vmem:[#allocation2 + $0x38] sm:$0xff]
      %v1122 = vld [vmem:[#allocation2 + $0x40] sm:$0xff]
      %v1123 = vld [vmem:[#allocation2 + $0x48] sm:$0xff]
      %v1124 = vld [vmem:[#allocation2 + $0x50] sm:$0xff]
      %v1125 = vld [vmem:[#allocation2 + $0x58] sm:$0xff]
      %v1126 = vld [vmem:[#allocation2 + $0x60] sm:$0xff]
      %v1127 = vld [vmem:[#allocation2 + $0x68] sm:$0xff]
      %v1128 = vld [vmem:[#allocation2 + $0x70] sm:$0xff]
      %v1129 = vld [vmem:[#allocation2 + $0x78] sm:$0xff]
      %v1130 = vld [vmem:[%s2] sm:$0xf]
      %v1132 = vlaneseq
      %v1133 = vshrl.u32 %v1132, 7
      %v1134 = vsub.s32 0, %v1133
      %v1135 = vrot.slane %v1130, %v1134
      %v1136 = vlaneseq
      %v1137 = vshrl.u32 %v1136, 7
      %v1138 = vsub.s32 1, %v1137
      %v1139 = vrot.slane %v1130, %v1138
      %v1140 = vlaneseq
      %v1141 = vshrl.u32 %v1140, 7
      %v1142 = vsub.s32 2, %v1141
      %v1143 = vrot.slane %v1130, %v1142
      %v1144 = vlaneseq
      %v1145 = vshrl.u32 %v1144, 7
      %v1146 = vsub.s32 3, %v1145
      %v1147 = vrot.slane %v1130, %v1146
      %v1152 = vadd.f32 %v1114, %v1135
      %v1153 = vadd.f32 %v1115, %v1139
      %v1154 = vadd.f32 %v1116, %v1143
      %v1155 = vadd.f32 %v1117, %v1147
      %v1156 = vadd.f32 %v1118, %v1135
      %v1157 = vadd.f32 %v1119, %v1139
      %v1158 = vadd.f32 %v1120, %v1143
      %v1159 = vadd.f32 %v1121, %v1147
      %v1160 = vadd.f32 %v1122, %v1135
      %v1161 = vadd.f32 %v1123, %v1139
      %v1162 = vadd.f32 %v1124, %v1143
      %v1163 = vadd.f32 %v1125, %v1147
      %v1164 = vadd.f32 %v1126, %v1135
      %v1165 = vadd.f32 %v1127, %v1139
      %v1166 = vadd.f32 %v1128, %v1143
      %v1167 = vadd.f32 %v1129, %v1147
      %1168 = vst [vmem:[#allocation3] sm:$0xff] %v1152
      %1169 = vst [vmem:[#allocation3 + $0x8] sm:$0xff] %v1153
      %1170 = vst [vmem:[#allocation3 + $0x10] sm:$0xff] %v1154
      %1171 = vst [vmem:[#allocation3 + $0x18] sm:$0xff] %v1155
      %1172 = vst [vmem:[#allocation3 + $0x20] sm:$0xff] %v1156
      %1173 = vst [vmem:[#allocation3 + $0x28] sm:$0xff] %v1157
      %1174 = vst [vmem:[#allocation3 + $0x30] sm:$0xff] %v1158
      %1175 = vst [vmem:[#allocation3 + $0x38] sm:$0xff] %v1159
      %1176 = vst [vmem:[#allocation3 + $0x40] sm:$0xff] %v1160
      %1177 = vst [vmem:[#allocation3 + $0x48] sm:$0xff] %v1161
      %1178 = vst [vmem:[#allocation3 + $0x50] sm:$0xff] %v1162
      %1179 = vst [vmem:[#allocation3 + $0x58] sm:$0xff] %v1163
      %1180 = vst [vmem:[#allocation3 + $0x60] sm:$0xff] %v1164
      %1181 = vst [vmem:[#allocation3 + $0x68] sm:$0xff] %v1165
      %1182 = vst [vmem:[#allocation3 + $0x70] sm:$0xff] %v1166
      %1183 = vst [vmem:[#allocation3 + $0x78] sm:$0xff] %v1167
    $region21: #{attention_forward.5} parent=1 // pred_fallthru
      _
    // Predicated region
    $region22: #{attention_forward.5} parent=1 // pred_check
      _
    $region23: #{attention_forward.5} parent=1 // pred_check_branch
      %1185 = sbr.rel (0) target = $region25
    $region24: #{attention_forward.5} parent=1 // pred_region
      %s1187 = ssub.s32 2048, 2048
      %1188 = vsyncadd [#allocation4], %s1187
      %s1189 = sshll.u32 [#allocation3], 4
      %s1190 = int_to_ptr.vmem [resolvable:$true] %s1189
      %1195 = dma.vmem_to_hbm [thread:$0]  %s1190, 2048, %s3, [#allocation4], 512, 512, 32
    $region25: #{attention_forward.5} parent=1 // pred_fallthru
      _
    // Predicated region
    $region26: #{attention_forward.5} parent=1 // pred_check
      _
    $region27: #{attention_forward.5} parent=1 // pred_check_branch
      %1197 = sbr.rel (0) target = $region29
    $region28: #{attention_forward.5} parent=1 // pred_region
      %1198 = dma.done [#allocation4], 2048
    $region29: #{attention_forward.5} parent=1 // pred_fallthru
      _
    %1199 = vsyncpa [#allocation4], 1

// kernel: attention_forward.3
$region0: #{attention_forward.3}
  #allocation0 [shape = 'u32[]', space=smem, size = 0x4, offset = 0x4, fixed_abs, tag = 'smem constant byte address 0x4 - core index']
  #allocation1 [shape = 'u32[144,128]{1,0:T(1,128)}', space=vmem, size = 0x12000, scoped, tag = 'internal scratch']
  #allocation2 [shape = 'f32[32,512]{1,0:T(8,128)}', space=vmem, size = 0x10000, scoped, tag = 'scratch operand']
  %s0 = inlined_call_operand.vmem [shape: bf16[32,512], index: 0, kind: input, shape index: {}]
  %s1 = inlined_call_operand.hbm [shape: bf16[512,1536], index: 1, kind: input, shape index: {}]
  %s2 = inlined_call_operand.vmem [shape: bf16[32,1536], index: 2, kind: output, shape index: {}]
  %s3 = sld [smem:[#allocation0]]
  $region72: #{attention_forward.3} parent=0
    _
  %s5 = ssub.s32 1, %s3
  %s6 = scalar_select 0, %s5, %s3
  $region1: #{attention_forward.3} parent=0
    #allocation3 [shape = 'u8[1048576]{0}', space=vmem, size = 0x100000, scoped, tag = 'input window, operand 1']
    #allocation4 [shape = 's32[2]{0}', space=sflag, size = 0x8, scoped, tag = 'scoped memory for attention_forward.3']
    #allocation5 [shape = 'u8[65536]{0}', space=vmem, size = 0x10000, scoped, tag = 'output window, operand 0']
    %7 = vsyncpa [#allocation4], 0
    %s8 = scalar_lea.sflag [#allocation4], 1
    %9 = vsyncpa %s8, 0
    loop: start=0, step=1, limit=5
    $region2: #{attention_forward.3} parent=1 // loop_pre_header
      _
    $region3: #{attention_forward.3} parent=1 // loop_header
      %s11 = sphi 0, %s15
      %p12 = scmp.ge.s32.totalorder %s11, 5
      %s18 = sphi 0, %s37
      %s19 = sphi 0, %s33
      %s20 = sphi 0, %s29
      %s21 = sphi 0, %s18
      %s22 = sphi 0, %s19
      %s23 = sphi 0, %s20
      %s24 = sphi 0, %s21
      %s25 = sphi 0, %s22
      %s26 = sphi 0, %s23
      %s42 = sphi 0, %s44
      %s45 = sphi 0, %s42
      %s46 = sphi 0, %s45
      %s62 = sphi 0, %s46
      %s70 = sphi 0, %s72
      %s73 = sphi 0, %s70
      %s74 = sphi 0, %s73
      %s90 = sphi 0, %s74
      %s98 = sphi 0, %s100
      %s101 = sphi 0, %s98
      %s102 = sphi 0, %s101
      %s118 = sphi 0, %s102
    $region4: #{attention_forward.3} parent=1 // loop_header_branch
      %14 = sbr.rel (%p12) target = $region8
    $region5: #{attention_forward.3} parent=1 // loop_body
      %s16 = ssub.s32 %s11, 1
      %s17 = ssub.s32 %s11, 2
      %s27 = sadd.s32 1, %s20
      %p28 = scmp.ge.s32.totalorder %s27, 1
      %s29 = scalar_select %p28, 0, %s27
      %s30 = sadd.s32 1, %s19
      %s31 = scalar_select %p28, %s30, %s19
      %p32 = scmp.ge.s32.totalorder %s31, 3
      %s33 = scalar_select %p32, 0, %s31
      %s34 = sadd.s32 1, %s18
      %s35 = scalar_select %p32, %s34, %s18
      %p36 = scmp.ge.s32.totalorder %s35, 1
      %s37 = scalar_select %p36, 0, %s35
      %s38 = ssub.s32 %s18, %s37
      %s39 = ssub.s32 %s20, %s29
      %s40 = sor.u32 %s38, %s39
      %p41 = scmp.eq.s32.totalorder %s40, 0
      %s43 = sadd.s32 %s42, 1
      %s44 = scalar_select %p41, %s42, %s43
      %p47 = pneg %p41
      %p48 = scmp.eq.s32.totalorder %s11, 2
      %p49 = por %p47, %p48
      %p50 = scmp.ne.s32.totalorder %s42, %s45
      %p51 = scmp.eq.s32.totalorder %s11, 0
      %p52 = por %p50, %p51
      %p53 = scmp.ne.s32.totalorder %s42, %s45
      %p54 = scmp.eq.s32.totalorder %s16, 2
      %p55 = por %p53, %p54
      %p56 = scmp.ne.s32.totalorder %s45, %s46
      %p57 = scmp.eq.s32.totalorder %s16, 0
      %p58 = por %p56, %p57
      %p59 = scmp.ne.s32.totalorder %s45, %s46
      %p60 = scmp.eq.s32.totalorder %s17, 2
      %p61 = por %p59, %p60
      %p63 = scmp.ne.s32.totalorder %s46, %s62
      %p64 = scmp.eq.s32.totalorder %s17, 0
      %p65 = por %p63, %p64
      %s66 = ssub.s32 %s20, %s29
      %s67 = ssub.s32 %s19, %s33
      %s68 = sor.u32 %s66, %s67
      %p69 = scmp.eq.s32.totalorder %s68, 0
      %s71 = sadd.s32 %s70, 1
      %s72 = scalar_select %p69, %s70, %s71
      %p75 = pneg %p69
      %p76 = scmp.eq.s32.totalorder %s11, 2
      %p77 = por %p75, %p76
      %p78 = scmp.ne.s32.totalorder %s70, %s73
      %p79 = scmp.eq.s32.totalorder %s11, 0
      %p80 = por %p78, %p79
      %p81 = scmp.ne.s32.totalorder %s70, %s73
      %p82 = scmp.eq.s32.totalorder %s16, 2
      %p83 = por %p81, %p82
      %p84 = scmp.ne.s32.totalorder %s73, %s74
      %p85 = scmp.eq.s32.totalorder %s16, 0
      %p86 = por %p84, %p85
      %p87 = scmp.ne.s32.totalorder %s73, %s74
      %p88 = scmp.eq.s32.totalorder %s17, 2
      %p89 = por %p87, %p88
      %p91 = scmp.ne.s32.totalorder %s74, %s90
      %p92 = scmp.eq.s32.totalorder %s17, 0
      %p93 = por %p91, %p92
      %s94 = ssub.s32 %s18, %s37
      %s95 = ssub.s32 %s19, %s33
      %s96 = sor.u32 %s94, %s95
      %p97 = scmp.eq.s32.totalorder %s96, 0
      %s99 = sadd.s32 %s98, 1
      %s100 = scalar_select %p97, %s98, %s99
      %p103 = pneg %p97
      %p104 = scmp.eq.s32.totalorder %s11, 2
      %p105 = por %p103, %p104
      %p106 = scmp.ne.s32.totalorder %s98, %s101
      %p107 = scmp.eq.s32.totalorder %s11, 0
      %p108 = por %p106, %p107
      %p109 = scmp.ne.s32.totalorder %s98, %s101
      %p110 = scmp.eq.s32.totalorder %s16, 2
      %p111 = por %p109, %p110
      %p112 = scmp.ne.s32.totalorder %s101, %s102
      %p113 = scmp.eq.s32.totalorder %s16, 0
      %p114 = por %p112, %p113
      %p115 = scmp.ne.s32.totalorder %s101, %s102
      %p116 = scmp.eq.s32.totalorder %s17, 2
      %p117 = por %p115, %p116
      %p119 = scmp.ne.s32.totalorder %s102, %s118
      %p120 = scmp.eq.s32.totalorder %s17, 0
      %p121 = por %p119, %p120
      %p122 = scmp.le.s32.totalorder 1, %s11
      %p123 = scmp.lt.s32.totalorder %s11, 4
      %p124 = pnand %p122, %p123
      %p125 = pneg %p124
      // Predicated region
      $region9: #{attention_forward.3} parent=5 // pred_check
        _
      $region10: #{attention_forward.3} parent=5 // pred_check_branch
        %127 = sbr.rel (%p124) target = $region12
      $region11: #{attention_forward.3} parent=5 // pred_region
        %s128 = ssub.s32 %s11, 1
        // Predicated region
        $region13: #{attention_forward.3} parent=11 // pred_check
          %p129 = pneg %p58
        $region14: #{attention_forward.3} parent=11 // pred_check_branch
          %131 = sbr.rel (%p129) target = $region16
        $region15: #{attention_forward.3} parent=11 // pred_region
          %s132 = smul.u32 4, %s21
          %s133 = smul.u32 4, %s23
          %p134 = scmp.lt.s32.totalorder %s132, 3
          %s135 = scalar_select %p134, %s132, 3
          %p136 = scmp.lt.s32.totalorder %s133, 3
          %s137 = scalar_select %p136, %s133, 3
          %s138 = smul.addr %s135, 4
          %s139 = sadd.s32 %s137, %s138
          %s140 = smul.addr %s139, 4
          %s141 = scalar_lea.vmem %s0, %s140
          %s142 = smul.u32 4, %s21
          %s143 = smul.u32 4, %s23
        $region16: #{attention_forward.3} parent=11 // pred_fallthru
          _
      $region12: #{attention_forward.3} parent=5 // pred_fallthru
        _
      %p144 = scmp.lt.s32.totalorder %s11, 3
      // Predicated region
      $region17: #{attention_forward.3} parent=5 // pred_check
        %p145 = pneg %p144
      $region18: #{attention_forward.3} parent=5 // pred_check_branch
        %147 = sbr.rel (%p145) target = $region20
      $region19: #{attention_forward.3} parent=5 // pred_region
        // Predicated region
        $region21: #{attention_forward.3} parent=19 // pred_check
          %p148 = pneg %p80
        $region22: #{attention_forward.3} parent=19 // pred_check_branch
          %150 = sbr.rel (%p148) target = $region24
        $region23: #{attention_forward.3} parent=19 // pred_region
          %s151 = sand.u32 %s70, 1
          %s152 = scalar_lea.sflag [#allocation4], %s151
          %s153 = sand.u32 %s70, 1
          %s154 = smul.addr %s153, 1024
          %s155 = scalar_lea.vmem [#allocation3], %s154
          %s156 = smul.u32 64, %s20
          %s157 = smul.u32 4, %s19
          %s159 = ssub.s32 16384, 16384
          %160 = vsyncadd %s152, %s159
          %s161 = smul.addr %s156, 12
          %s162 = sadd.s32 %s157, %s161
          %s163 = smul.addr %s162, 64
          %s164 = scalar_lea.hbm %s1, %s163
          %s165 = sshll.u32 %s155, 4
          %s166 = int_to_ptr.vmem [resolvable:$true] %s165
          %171 = dma.hbm_to_vmem [thread:$0]  %s164, 16384, %s166, %s152, 768, 256, 16
        $region24: #{attention_forward.3} parent=19 // pred_fallthru
          _
      $region20: #{attention_forward.3} parent=5 // pred_fallthru
        _
      %p172 = scmp.le.s32.totalorder 1, %s11
      %p173 = scmp.lt.s32.totalorder %s11, 4
      %p174 = pnand %p172, %p173
      %p175 = pneg %p174
      // Predicated region
      $region25: #{attention_forward.3} parent=5 // pred_check
        _
      $region26: #{attention_forward.3} parent=5 // pred_check_branch
        %177 = sbr.rel (%p174) target = $region28
      $region27: #{attention_forward.3} parent=5 // pred_region
        %s178 = ssub.s32 %s11, 1
        %s179 = sand.u32 %s73, 1
        %s180 = scalar_lea.sflag [#allocation4], %s179
        %s181 = sand.u32 %s73, 1
        %s182 = smul.addr %s181, 1024
        %s183 = scalar_lea.vmem [#allocation3], %s182
        // Predicated region
        $region29: #{attention_forward.3} parent=27 // pred_check
          %p184 = pneg %p86
        $region30: #{attention_forward.3} parent=27 // pred_check_branch
          %186 = sbr.rel (%p184) target = $region32
        $region31: #{attention_forward.3} parent=27 // pred_region
          %187 = dma.done %s180, 16384
        $region32: #{attention_forward.3} parent=27 // pred_fallthru
          _
        %s188 = smul.u32 4, %s21
        %s189 = smul.u32 4, %s23
        %p190 = scmp.lt.s32.totalorder %s188, 3
        %s191 = scalar_select %p190, %s188, 3
        %p192 = scmp.lt.s32.totalorder %s189, 3
        %s193 = scalar_select %p192, %s189, 3
        %s194 = smul.addr %s191, 4
        %s195 = sadd.s32 %s193, %s194
        %s196 = smul.addr %s195, 4
        %s197 = scalar_lea.vmem %s0, %s196
        %p198 = pneg %p58
        %p199 = pneg %p55
        %s200 = sand.u32 %s73, 1
        %s201 = scalar_lea.sflag [#allocation4], %s200
        %s202 = sand.u32 %s73, 1
        %s203 = smul.addr %s202, 1024
        %s204 = scalar_lea.vmem [#allocation3], %s203
        %p205 = pneg %p86
        %p206 = pneg %p83
        %p207 = pneg %p114
        %p208 = pneg %p111
        %s209 = sand.u32 %s101, 1
        %s210 = sand.u32 %s101, 1
        %s211 = smul.addr %s210, 64
        %s212 = scalar_lea.vmem [#allocation5], %s211
        %s213 = smul.u32 4, %s21
        %s214 = smul.u32 4, %s23
        %p215 = scmp.lt.s32.totalorder %s213, 3
        %s216 = scalar_select %p215, %s213, 3
        %p217 = scmp.lt.s32.totalorder %s214, 3
        %s218 = scalar_select %p217, %s214, 3
        %s219 = smul.addr %s216, 4
        %s220 = sadd.s32 %s218, %s219
        %s221 = smul.addr %s220, 4
        %s222 = scalar_lea.vmem %s0, %s221
        %s223 = smul.u32 4, %s21
        %s224 = smul.u32 4, %s23
        %s225 = smul.u32 64, %s23
        %s226 = smul.u32 4, %s22
        %s227 = smul.u32 4, %s21
        %s228 = smul.u32 4, %s22
        %p229 = scmp.eq.s32.totalorder %s23, 0
        // Predicated region
        $region33: #{attention_forward.3} parent=27 // pred_check
          %p230 = pneg %p229
        $region34: #{attention_forward.3} parent=27 // pred_check_branch
          %232 = sbr.rel (%p230) target = $region36
        $region35: #{attention_forward.3} parent=27 // pred_region
          %233 = vst [vmem:[#allocation2] sm:$0xff] 0.0
          %234 = vst [vmem:[#allocation2 + $0x8] sm:$0xff] 0.0
          %235 = vst [vmem:[#allocation2 + $0x10] sm:$0xff] 0.0
          %236 = vst [vmem:[#allocation2 + $0x18] sm:$0xff] 0.0
          %237 = vst [vmem:[#allocation2 + $0x20] sm:$0xff] 0.0
          %238 = vst [vmem:[#allocation2 + $0x28] sm:$0xff] 0.0
          %239 = vst [vmem:[#allocation2 + $0x30] sm:$0xff] 0.0
          %240 = vst [vmem:[#allocation2 + $0x38] sm:$0xff] 0.0
          %241 = vst [vmem:[#allocation2 + $0x40] sm:$0xff] 0.0
          %242 = vst [vmem:[#allocation2 + $0x48] sm:$0xff] 0.0
          %243 = vst [vmem:[#allocation2 + $0x50] sm:$0xff] 0.0
          %244 = vst [vmem:[#allocation2 + $0x58] sm:$0xff] 0.0
          %245 = vst [vmem:[#allocation2 + $0x60] sm:$0xff] 0.0
          %246 = vst [vmem:[#allocation2 + $0x68] sm:$0xff] 0.0
          %247 = vst [vmem:[#allocation2 + $0x70] sm:$0xff] 0.0
          %248 = vst [vmem:[#allocation2 + $0x78] sm:$0xff] 0.0
        $region36: #{attention_forward.3} parent=27 // pred_fallthru
          _
        %v249 = vld [vmem:[#allocation2] sm:$0xff]
        %v250 = vld [vmem:[#allocation2 + $0x8] sm:$0xff]
        %v251 = vld [vmem:[#allocation2 + $0x10] sm:$0xff]
        %v252 = vld [vmem:[#allocation2 + $0x18] sm:$0xff]
        %v253 = vld [vmem:[#allocation2 + $0x20] sm:$0xff]
        %v254 = vld [vmem:[#allocation2 + $0x28] sm:$0xff]
        %v255 = vld [vmem:[#allocation2 + $0x30] sm:$0xff]
        %v256 = vld [vmem:[#allocation2 + $0x38] sm:$0xff]
        %v257 = vld [vmem:[#allocation2 + $0x40] sm:$0xff]
        %v258 = vld [vmem:[#allocation2 + $0x48] sm:$0xff]
        %v259 = vld [vmem:[#allocation2 + $0x50] sm:$0xff]
        %v260 = vld [vmem:[#allocation2 + $0x58] sm:$0xff]
        %v261 = vld [vmem:[#allocation2 + $0x60] sm:$0xff]
        %v262 = vld [vmem:[#allocation2 + $0x68] sm:$0xff]
        %v263 = vld [vmem:[#allocation2 + $0x70] sm:$0xff]
        %v264 = vld [vmem:[#allocation2 + $0x78] sm:$0xff]
        %v265 = vld [vmem:[%s222] sm:$0xff]
        %v266 = vld [vmem:[%s222 + $0x8] sm:$0xff]
        %v267 = vld [vmem:[%s222 + $0x10] sm:$0xff]
        %v268 = vld [vmem:[%s222 + $0x18] sm:$0xff]
        %v269 = vld [vmem:[%s222 + $0x20] sm:$0xff]
        %v270 = vld [vmem:[%s222 + $0x28] sm:$0xff]
        %v271 = vld [vmem:[%s222 + $0x30] sm:$0xff]
        %v272 = vld [vmem:[%s222 + $0x38] sm:$0xff]
        %v273 = vld [vmem:[%s183] sm:$0xff]
        %v274 = vld [vmem:[%s183 + $0x8] sm:$0xff]
        %v275 = vld [vmem:[%s183 + $0x10] sm:$0xff]
        %v276 = vld [vmem:[%s183 + $0x18] sm:$0xff]
        %v277 = vld [vmem:[%s183 + $0x20] sm:$0xff]
        %v278 = vld [vmem:[%s183 + $0x28] sm:$0xff]
        %v279 = vld [vmem:[%s183 + $0x30] sm:$0xff]
        %v280 = vld [vmem:[%s183 + $0x38] sm:$0xff]
        %v281 = vld [vmem:[%s183 + $0x40] sm:$0xff]
        %v282 = vld [vmem:[%s183 + $0x48] sm:$0xff]
        %v283 = vld [vmem:[%s183 + $0x50] sm:$0xff]
        %v284 = vld [vmem:[%s183 + $0x58] sm:$0xff]
        %v285 = vld [vmem:[%s183 + $0x60] sm:$0xff]
        %v286 = vld [vmem:[%s183 + $0x68] sm:$0xff]
        %v287 = vld [vmem:[%s183 + $0x70] sm:$0xff]
        %v288 = vld [vmem:[%s183 + $0x78] sm:$0xff]
        %v289 = vld [vmem:[%s183 + $0x80] sm:$0xff]
        %v290 = vld [vmem:[%s183 + $0x88] sm:$0xff]
        %v291 = vld [vmem:[%s183 + $0x90] sm:$0xff]
        %v292 = vld [vmem:[%s183 + $0x98] sm:$0xff]
        %v293 = vld [vmem:[%s183 + $0xa0] sm:$0xff]
        %v294 = vld [vmem:[%s183 + $0xa8] sm:$0xff]
        %v295 = vld [vmem:[%s183 + $0xb0] sm:$0xff]
        %v296 = vld [vmem:[%s183 + $0xb8] sm:$0xff]
        %v297 = vld [vmem:[%s183 + $0xc0] sm:$0xff]
        %v298 = vld [vmem:[%s183 + $0xc8] sm:$0xff]
        %v299 = vld [vmem:[%s183 + $0xd0] sm:$0xff]
        %v300 = vld [vmem:[%s183 + $0xd8] sm:$0xff]
        %v301 = vld [vmem:[%s183 + $0xe0] sm:$0xff]
        %v302 = vld [vmem:[%s183 + $0xe8] sm:$0xff]
        %v303 = vld [vmem:[%s183 + $0xf0] sm:$0xff]
        %v304 = vld [vmem:[%s183 + $0xf8] sm:$0xff]
        %v305 = vld [vmem:[%s183 + $0x100] sm:$0xff]
        %v306 = vld [vmem:[%s183 + $0x108] sm:$0xff]
        %v307 = vld [vmem:[%s183 + $0x110] sm:$0xff]
        %v308 = vld [vmem:[%s183 + $0x118] sm:$0xff]
        %v309 = vld [vmem:[%s183 + $0x120] sm:$0xff]
        %v310 = vld [vmem:[%s183 + $0x128] sm:$0xff]
        %v311 = vld [vmem:[%s183 + $0x130] sm:$0xff]
        %v312 = vld [vmem:[%s183 + $0x138] sm:$0xff]
        %v313 = vld [vmem:[%s183 + $0x140] sm:$0xff]
        %v314 = vld [vmem:[%s183 + $0x148] sm:$0xff]
        %v315 = vld [vmem:[%s183 + $0x150] sm:$0xff]
        %v316 = vld [vmem:[%s183 + $0x158] sm:$0xff]
        %v317 = vld [vmem:[%s183 + $0x160] sm:$0xff]
        %v318 = vld [vmem:[%s183 + $0x168] sm:$0xff]
        %v319 = vld [vmem:[%s183 + $0x170] sm:$0xff]
        %v320 = vld [vmem:[%s183 + $0x178] sm:$0xff]
        %v321 = vld [vmem:[%s183 + $0x180] sm:$0xff]
        %v322 = vld [vmem:[%s183 + $0x188] sm:$0xff]
        %v323 = vld [vmem:[%s183 + $0x190] sm:$0xff]
        %v324 = vld [vmem:[%s183 + $0x198] sm:$0xff]
        %v325 = vld [vmem:[%s183 + $0x1a0] sm:$0xff]
        %v326 = vld [vmem:[%s183 + $0x1a8] sm:$0xff]
        %v327 = vld [vmem:[%s183 + $0x1b0] sm:$0xff]
        %v328 = vld [vmem:[%s183 + $0x1b8] sm:$0xff]
        %v329 = vld [vmem:[%s183 + $0x1c0] sm:$0xff]
        %v330 = vld [vmem:[%s183 + $0x1c8] sm:$0xff]
        %v331 = vld [vmem:[%s183 + $0x1d0] sm:$0xff]
        %v332 = vld [vmem:[%s183 + $0x1d8] sm:$0xff]
        %v333 = vld [vmem:[%s183 + $0x1e0] sm:$0xff]
        %v334 = vld [vmem:[%s183 + $0x1e8] sm:$0xff]
        %v335 = vld [vmem:[%s183 + $0x1f0] sm:$0xff]
        %v336 = vld [vmem:[%s183 + $0x1f8] sm:$0xff]
        %v337 = vld [vmem:[%s183 + $0x200] sm:$0xff]
        %v338 = vld [vmem:[%s183 + $0x208] sm:$0xff]
        %v339 = vld [vmem:[%s183 + $0x210] sm:$0xff]
        %v340 = vld [vmem:[%s183 + $0x218] sm:$0xff]
        %v341 = vld [vmem:[%s183 + $0x220] sm:$0xff]
        %v342 = vld [vmem:[%s183 + $0x228] sm:$0xff]
        %v343 = vld [vmem:[%s183 + $0x230] sm:$0xff]
        %v344 = vld [vmem:[%s183 + $0x238] sm:$0xff]
        %v345 = vld [vmem:[%s183 + $0x240] sm:$0xff]
        %v346 = vld [vmem:[%s183 + $0x248] sm:$0xff]
        %v347 = vld [vmem:[%s183 + $0x250] sm:$0xff]
        %v348 = vld [vmem:[%s183 + $0x258] sm:$0xff]
        %v349 = vld [vmem:[%s183 + $0x260] sm:$0xff]
        %v350 = vld [vmem:[%s183 + $0x268] sm:$0xff]
        %v351 = vld [vmem:[%s183 + $0x270] sm:$0xff]
        %v352 = vld [vmem:[%s183 + $0x278] sm:$0xff]
        %v353 = vld [vmem:[%s183 + $0x280] sm:$0xff]
        %v354 = vld [vmem:[%s183 + $0x288] sm:$0xff]
        %v355 = vld [vmem:[%s183 + $0x290] sm:$0xff]
        %v356 = vld [vmem:[%s183 + $0x298] sm:$0xff]
        %v357 = vld [vmem:[%s183 + $0x2a0] sm:$0xff]
        %v358 = vld [vmem:[%s183 + $0x2a8] sm:$0xff]
        %v359 = vld [vmem:[%s183 + $0x2b0] sm:$0xff]
        %v360 = vld [vmem:[%s183 + $0x2b8] sm:$0xff]
        %v361 = vld [vmem:[%s183 + $0x2c0] sm:$0xff]
        %v362 = vld [vmem:[%s183 + $0x2c8] sm:$0xff]
        %v363 = vld [vmem:[%s183 + $0x2d0] sm:$0xff]
        %v364 = vld [vmem:[%s183 + $0x2d8] sm:$0xff]
        %v365 = vld [vmem:[%s183 + $0x2e0] sm:$0xff]
        %v366 = vld [vmem:[%s183 + $0x2e8] sm:$0xff]
        %v367 = vld [vmem:[%s183 + $0x2f0] sm:$0xff]
        %v368 = vld [vmem:[%s183 + $0x2f8] sm:$0xff]
        %v369 = vld [vmem:[%s183 + $0x300] sm:$0xff]
        %v370 = vld [vmem:[%s183 + $0x308] sm:$0xff]
        %v371 = vld [vmem:[%s183 + $0x310] sm:$0xff]
        %v372 = vld [vmem:[%s183 + $0x318] sm:$0xff]
        %v373 = vld [vmem:[%s183 + $0x320] sm:$0xff]
        %v374 = vld [vmem:[%s183 + $0x328] sm:$0xff]
        %v375 = vld [vmem:[%s183 + $0x330] sm:$0xff]
        %v376 = vld [vmem:[%s183 + $0x338] sm:$0xff]
        %v377 = vld [vmem:[%s183 + $0x340] sm:$0xff]
        %v378 = vld [vmem:[%s183 + $0x348] sm:$0xff]
        %v379 = vld [vmem:[%s183 + $0x350] sm:$0xff]
        %v380 = vld [vmem:[%s183 + $0x358] sm:$0xff]
        %v381 = vld [vmem:[%s183 + $0x360] sm:$0xff]
        %v382 = vld [vmem:[%s183 + $0x368] sm:$0xff]
        %v383 = vld [vmem:[%s183 + $0x370] sm:$0xff]
        %v384 = vld [vmem:[%s183 + $0x378] sm:$0xff]
        %v385 = vld [vmem:[%s183 + $0x380] sm:$0xff]
        %v386 = vld [vmem:[%s183 + $0x388] sm:$0xff]
        %v387 = vld [vmem:[%s183 + $0x390] sm:$0xff]
        %v388 = vld [vmem:[%s183 + $0x398] sm:$0xff]
        %v389 = vld [vmem:[%s183 + $0x3a0] sm:$0xff]
        %v390 = vld [vmem:[%s183 + $0x3a8] sm:$0xff]
        %v391 = vld [vmem:[%s183 + $0x3b0] sm:$0xff]
        %v392 = vld [vmem:[%s183 + $0x3b8] sm:$0xff]
        %v393 = vld [vmem:[%s183 + $0x3c0] sm:$0xff]
        %v394 = vld [vmem:[%s183 + $0x3c8] sm:$0xff]
        %v395 = vld [vmem:[%s183 + $0x3d0] sm:$0xff]
        %v396 = vld [vmem:[%s183 + $0x3d8] sm:$0xff]
        %v397 = vld [vmem:[%s183 + $0x3e0] sm:$0xff]
        %v398 = vld [vmem:[%s183 + $0x3e8] sm:$0xff]
        %v399 = vld [vmem:[%s183 + $0x3f0] sm:$0xff]
        %v400 = vld [vmem:[%s183 + $0x3f8] sm:$0xff]
        %v409 = vunpack.c.l.b16 %v265
        %v410 = vunpack.c.h.b16 %v265
        %v411 = vunpack.c.l.b16 %v266
        %v412 = vunpack.c.h.b16 %v266
        %v413 = vunpack.c.l.b16 %v267
        %v414 = vunpack.c.h.b16 %v267
        %v415 = vunpack.c.l.b16 %v268
        %v416 = vunpack.c.h.b16 %v268
        %v417 = vunpack.c.l.b16 %v269
        %v418 = vunpack.c.h.b16 %v269
        %v419 = vunpack.c.l.b16 %v270
        %v420 = vunpack.c.h.b16 %v270
        %v421 = vunpack.c.l.b16 %v271
        %v422 = vunpack.c.h.b16 %v271
        %v423 = vunpack.c.l.b16 %v272
        %v424 = vunpack.c.h.b16 %v272
        %v425 = vpack.c.b16 %v413, %v409
        %v426 = vpack.c.b16 %v414, %v410
        %v427 = vpack.c.b16 %v415, %v411
        %v428 = vpack.c.b16 %v416, %v412
        %v429 = vpack.c.b16 %v421, %v417
        %v430 = vpack.c.b16 %v422, %v418
        %v431 = vpack.c.b16 %v423, %v419
        %v432 = vpack.c.b16 %v424, %v420
        %v569 = vunpack.c.l.b16 %v273
        %v570 = vunpack.c.h.b16 %v273
        %v571 = vunpack.c.l.b16 %v274
        %v572 = vunpack.c.h.b16 %v274
        %v573 = vunpack.c.l.b16 %v275
        %v574 = vunpack.c.h.b16 %v275
        %v575 = vunpack.c.l.b16 %v276
        %v576 = vunpack.c.h.b16 %v276
        %v577 = vunpack.c.l.b16 %v277
        %v578 = vunpack.c.h.b16 %v277
        %v579 = vunpack.c.l.b16 %v278
        %v580 = vunpack.c.h.b16 %v278
        %v581 = vunpack.c.l.b16 %v279
        %v582 = vunpack.c.h.b16 %v279
        %v583 = vunpack.c.l.b16 %v280
        %v584 = vunpack.c.h.b16 %v280
        %v585 = vunpack.c.l.b16 %v281
        %v586 = vunpack.c.h.b16 %v281
        %v587 = vunpack.c.l.b16 %v282
        %v588 = vunpack.c.h.b16 %v282
        %v589 = vunpack.c.l.b16 %v283
        %v590 = vunpack.c.h.b16 %v283
        %v591 = vunpack.c.l.b16 %v284
        %v592 = vunpack.c.h.b16 %v284
        %v593 = vunpack.c.l.b16 %v285
        %v594 = vunpack.c.h.b16 %v285
        %v595 = vunpack.c.l.b16 %v286
        %v596 = vunpack.c.h.b16 %v286
        %v597 = vunpack.c.l.b16 %v287
        %v598 = vunpack.c.h.b16 %v287
        %v599 = vunpack.c.l.b16 %v288
        %v600 = vunpack.c.h.b16 %v288
        %v601 = vunpack.c.l.b16 %v289
        %v602 = vunpack.c.h.b16 %v289
        %v603 = vunpack.c.l.b16 %v290
        %v604 = vunpack.c.h.b16 %v290
        %v605 = vunpack.c.l.b16 %v291
        %v606 = vunpack.c.h.b16 %v291
        %v607 = vunpack.c.l.b16 %v292
        %v608 = vunpack.c.h.b16 %v292
        %v609 = vunpack.c.l.b16 %v293
        %v610 = vunpack.c.h.b16 %v293
        %v611 = vunpack.c.l.b16 %v294
        %v612 = vunpack.c.h.b16 %v294
        %v613 = vunpack.c.l.b16 %v295
        %v614 = vunpack.c.h.b16 %v295
        %v615 = vunpack.c.l.b16 %v296
        %v616 = vunpack.c.h.b16 %v296
        %v617 = vunpack.c.l.b16 %v297
        %v618 = vunpack.c.h.b16 %v297
        %v619 = vunpack.c.l.b16 %v298
        %v620 = vunpack.c.h.b16 %v298
        %v621 = vunpack.c.l.b16 %v299
        %v622 = vunpack.c.h.b16 %v299
        %v623 = vunpack.c.l.b16 %v300
        %v624 = vunpack.c.h.b16 %v300
        %v625 = vunpack.c.l.b16 %v301
        %v626 = vunpack.c.h.b16 %v301
        %v627 = vunpack.c.l.b16 %v302
        %v628 = vunpack.c.h.b16 %v302
        %v629 = vunpack.c.l.b16 %v303
        %v630 = vunpack.c.h.b16 %v303
        %v631 = vunpack.c.l.b16 %v304
        %v632 = vunpack.c.h.b16 %v304
        %v633 = vunpack.c.l.b16 %v305
        %v634 = vunpack.c.h.b16 %v305
        %v635 = vunpack.c.l.b16 %v306
        %v636 = vunpack.c.h.b16 %v306
        %v637 = vunpack.c.l.b16 %v307
        %v638 = vunpack.c.h.b16 %v307
        %v639 = vunpack.c.l.b16 %v308
        %v640 = vunpack.c.h.b16 %v308
        %v641 = vunpack.c.l.b16 %v309
        %v642 = vunpack.c.h.b16 %v309
        %v643 = vunpack.c.l.b16 %v310
        %v644 = vunpack.c.h.b16 %v310
        %v645 = vunpack.c.l.b16 %v311
        %v646 = vunpack.c.h.b16 %v311
        %v647 = vunpack.c.l.b16 %v312
        %v648 = vunpack.c.h.b16 %v312
        %v649 = vunpack.c.l.b16 %v313
        %v650 = vunpack.c.h.b16 %v313
        %v651 = vunpack.c.l.b16 %v314
        %v652 = vunpack.c.h.b16 %v314
        %v653 = vunpack.c.l.b16 %v315
        %v654 = vunpack.c.h.b16 %v315
        %v655 = vunpack.c.l.b16 %v316
        %v656 = vunpack.c.h.b16 %v316
        %v657 = vunpack.c.l.b16 %v317
        %v658 = vunpack.c.h.b16 %v317
        %v659 = vunpack.c.l.b16 %v318
        %v660 = vunpack.c.h.b16 %v318
        %v661 = vunpack.c.l.b16 %v319
        %v662 = vunpack.c.h.b16 %v319
        %v663 = vunpack.c.l.b16 %v320
        %v664 = vunpack.c.h.b16 %v320
        %v665 = vunpack.c.l.b16 %v321
        %v666 = vunpack.c.h.b16 %v321
        %v667 = vunpack.c.l.b16 %v322
        %v668 = vunpack.c.h.b16 %v322
        %v669 = vunpack.c.l.b16 %v323
        %v670 = vunpack.c.h.b16 %v323
        %v671 = vunpack.c.l.b16 %v324
        %v672 = vunpack.c.h.b16 %v324
        %v673 = vunpack.c.l.b16 %v325
        %v674 = vunpack.c.h.b16 %v325
        %v675 = vunpack.c.l.b16 %v326
        %v676 = vunpack.c.h.b16 %v326
        %v677 = vunpack.c.l.b16 %v327
        %v678 = vunpack.c.h.b16 %v327
        %v679 = vunpack.c.l.b16 %v328
        %v680 = vunpack.c.h.b16 %v328
        %v681 = vunpack.c.l.b16 %v329
        %v682 = vunpack.c.h.b16 %v329
        %v683 = vunpack.c.l.b16 %v330
        %v684 = vunpack.c.h.b16 %v330
        %v685 = vunpack.c.l.b16 %v331
        %v686 = vunpack.c.h.b16 %v331
        %v687 = vunpack.c.l.b16 %v332
        %v688 = vunpack.c.h.b16 %v332
        %v689 = vunpack.c.l.b16 %v333
        %v690 = vunpack.c.h.b16 %v333
        %v691 = vunpack.c.l.b16 %v334
        %v692 = vunpack.c.h.b16 %v334
        %v693 = vunpack.c.l.b16 %v335
        %v694 = vunpack.c.h.b16 %v335
        %v695 = vunpack.c.l.b16 %v336
        %v696 = vunpack.c.h.b16 %v336
        %v697 = vunpack.c.l.b16 %v337
        %v698 = vunpack.c.h.b16 %v337
        %v699 = vunpack.c.l.b16 %v338
        %v700 = vunpack.c.h.b16 %v338
        %v701 = vunpack.c.l.b16 %v339
        %v702 = vunpack.c.h.b16 %v339
        %v703 = vunpack.c.l.b16 %v340
        %v704 = vunpack.c.h.b16 %v340
        %v705 = vunpack.c.l.b16 %v341
        %v706 = vunpack.c.h.b16 %v341
        %v707 = vunpack.c.l.b16 %v342
        %v708 = vunpack.c.h.b16 %v342
        %v709 = vunpack.c.l.b16 %v343
        %v710 = vunpack.c.h.b16 %v343
        %v711 = vunpack.c.l.b16 %v344
        %v712 = vunpack.c.h.b16 %v344
        %v713 = vunpack.c.l.b16 %v345
        %v714 = vunpack.c.h.b16 %v345
        %v715 = vunpack.c.l.b16 %v346
        %v716 = vunpack.c.h.b16 %v346
        %v717 = vunpack.c.l.b16 %v347
        %v718 = vunpack.c.h.b16 %v347
        %v719 = vunpack.c.l.b16 %v348
        %v720 = vunpack.c.h.b16 %v348
        %v721 = vunpack.c.l.b16 %v349
        %v722 = vunpack.c.h.b16 %v349
        %v723 = vunpack.c.l.b16 %v350
        %v724 = vunpack.c.h.b16 %v350
        %v725 = vunpack.c.l.b16 %v351
        %v726 = vunpack.c.h.b16 %v351
        %v727 = vunpack.c.l.b16 %v352
        %v728 = vunpack.c.h.b16 %v352
        %v729 = vunpack.c.l.b16 %v353
        %v730 = vunpack.c.h.b16 %v353
        %v731 = vunpack.c.l.b16 %v354
        %v732 = vunpack.c.h.b16 %v354
        %v733 = vunpack.c.l.b16 %v355
        %v734 = vunpack.c.h.b16 %v355
        %v735 = vunpack.c.l.b16 %v356
        %v736 = vunpack.c.h.b16 %v356
        %v737 = vunpack.c.l.b16 %v357
        %v738 = vunpack.c.h.b16 %v357
        %v739 = vunpack.c.l.b16 %v358
        %v740 = vunpack.c.h.b16 %v358
        %v741 = vunpack.c.l.b16 %v359
        %v742 = vunpack.c.h.b16 %v359
        %v743 = vunpack.c.l.b16 %v360
        %v744 = vunpack.c.h.b16 %v360
        %v745 = vunpack.c.l.b16 %v361
        %v746 = vunpack.c.h.b16 %v361
        %v747 = vunpack.c.l.b16 %v362
        %v748 = vunpack.c.h.b16 %v362
        %v749 = vunpack.c.l.b16 %v363
        %v750 = vunpack.c.h.b16 %v363
        %v751 = vunpack.c.l.b16 %v364
        %v752 = vunpack.c.h.b16 %v364
        %v753 = vunpack.c.l.b16 %v365
        %v754 = vunpack.c.h.b16 %v365
        %v755 = vunpack.c.l.b16 %v366
        %v756 = vunpack.c.h.b16 %v366
        %v757 = vunpack.c.l.b16 %v367
        %v758 = vunpack.c.h.b16 %v367
        %v759 = vunpack.c.l.b16 %v368
        %v760 = vunpack.c.h.b16 %v368
        %v761 = vunpack.c.l.b16 %v369
        %v762 = vunpack.c.h.b16 %v369
        %v763 = vunpack.c.l.b16 %v370
        %v764 = vunpack.c.h.b16 %v370
        %v765 = vunpack.c.l.b16 %v371
        %v766 = vunpack.c.h.b16 %v371
        %v767 = vunpack.c.l.b16 %v372
        %v768 = vunpack.c.h.b16 %v372
        %v769 = vunpack.c.l.b16 %v373
        %v770 = vunpack.c.h.b16 %v373
        %v771 = vunpack.c.l.b16 %v374
        %v772 = vunpack.c.h.b16 %v374
        %v773 = vunpack.c.l.b16 %v375
        %v774 = vunpack.c.h.b16 %v375
        %v775 = vunpack.c.l.b16 %v376
        %v776 = vunpack.c.h.b16 %v376
        %v777 = vunpack.c.l.b16 %v377
        %v778 = vunpack.c.h.b16 %v377
        %v779 = vunpack.c.l.b16 %v378
        %v780 = vunpack.c.h.b16 %v378
        %v781 = vunpack.c.l.b16 %v379
        %v782 = vunpack.c.h.b16 %v379
        %v783 = vunpack.c.l.b16 %v380
        %v784 = vunpack.c.h.b16 %v380
        %v785 = vunpack.c.l.b16 %v381
        %v786 = vunpack.c.h.b16 %v381
        %v787 = vunpack.c.l.b16 %v382
        %v788 = vunpack.c.h.b16 %v382
        %v789 = vunpack.c.l.b16 %v383
        %v790 = vunpack.c.h.b16 %v383
        %v791 = vunpack.c.l.b16 %v384
        %v792 = vunpack.c.h.b16 %v384
        %v793 = vunpack.c.l.b16 %v385
        %v794 = vunpack.c.h.b16 %v385
        %v795 = vunpack.c.l.b16 %v386
        %v796 = vunpack.c.h.b16 %v386
        %v797 = vunpack.c.l.b16 %v387
        %v798 = vunpack.c.h.b16 %v387
        %v799 = vunpack.c.l.b16 %v388
        %v800 = vunpack.c.h.b16 %v388
        %v801 = vunpack.c.l.b16 %v389
        %v802 = vunpack.c.h.b16 %v389
        %v803 = vunpack.c.l.b16 %v390
        %v804 = vunpack.c.h.b16 %v390
        %v805 = vunpack.c.l.b16 %v391
        %v806 = vunpack.c.h.b16 %v391
        %v807 = vunpack.c.l.b16 %v392
        %v808 = vunpack.c.h.b16 %v392
        %v809 = vunpack.c.l.b16 %v393
        %v810 = vunpack.c.h.b16 %v393
        %v811 = vunpack.c.l.b16 %v394
        %v812 = vunpack.c.h.b16 %v394
        %v813 = vunpack.c.l.b16 %v395
        %v814 = vunpack.c.h.b16 %v395
        %v815 = vunpack.c.l.b16 %v396
        %v816 = vunpack.c.h.b16 %v396
        %v817 = vunpack.c.l.b16 %v397
        %v818 = vunpack.c.h.b16 %v397
        %v819 = vunpack.c.l.b16 %v398
        %v820 = vunpack.c.h.b16 %v398
        %v821 = vunpack.c.l.b16 %v399
        %v822 = vunpack.c.h.b16 %v399
        %v823 = vunpack.c.l.b16 %v400
        %v824 = vunpack.c.h.b16 %v400
        %v825 = vpack.c.b16 %v573, %v569
        %v826 = vpack.c.b16 %v574, %v570
        %v827 = vpack.c.b16 %v575, %v571
        %v828 = vpack.c.b16 %v576, %v572
        %v829 = vpack.c.b16 %v581, %v577
        %v830 = vpack.c.b16 %v582, %v578
        %v831 = vpack.c.b16 %v583, %v579
        %v832 = vpack.c.b16 %v584, %v580
        %v833 = vpack.c.b16 %v589, %v585
        %v834 = vpack.c.b16 %v590, %v586
        %v835 = vpack.c.b16 %v591, %v587
        %v836 = vpack.c.b16 %v592, %v588
        %v837 = vpack.c.b16 %v597, %v593
        %v838 = vpack.c.b16 %v598, %v594
        %v839 = vpack.c.b16 %v599, %v595
        %v840 = vpack.c.b16 %v600, %v596
        %v841 = vpack.c.b16 %v605, %v601
        %v842 = vpack.c.b16 %v606, %v602
        %v843 = vpack.c.b16 %v607, %v603
        %v844 = vpack.c.b16 %v608, %v604
        %v845 = vpack.c.b16 %v613, %v609
        %v846 = vpack.c.b16 %v614, %v610
        %v847 = vpack.c.b16 %v615, %v611
        %v848 = vpack.c.b16 %v616, %v612
        %v849 = vpack.c.b16 %v621, %v617
        %v850 = vpack.c.b16 %v622, %v618
        %v851 = vpack.c.b16 %v623, %v619
        %v852 = vpack.c.b16 %v624, %v620
        %v853 = vpack.c.b16 %v629, %v625
        %v854 = vpack.c.b16 %v630, %v626
        %v855 = vpack.c.b16 %v631, %v627
        %v856 = vpack.c.b16 %v632, %v628
        %v857 = vpack.c.b16 %v637, %v633
        %v858 = vpack.c.b16 %v638, %v634
        %v859 = vpack.c.b16 %v639, %v635
        %v860 = vpack.c.b16 %v640, %v636
        %v861 = vpack.c.b16 %v645, %v641
        %v862 = vpack.c.b16 %v646, %v642
        %v863 = vpack.c.b16 %v647, %v643
        %v864 = vpack.c.b16 %v648, %v644
        %v865 = vpack.c.b16 %v653, %v649
        %v866 = vpack.c.b16 %v654, %v650
        %v867 = vpack.c.b16 %v655, %v651
        %v868 = vpack.c.b16 %v656, %v652
        %v869 = vpack.c.b16 %v661, %v657
        %v870 = vpack.c.b16 %v662, %v658
        %v871 = vpack.c.b16 %v663, %v659
        %v872 = vpack.c.b16 %v664, %v660
        %v873 = vpack.c.b16 %v669, %v665
        %v874 = vpack.c.b16 %v670, %v666
        %v875 = vpack.c.b16 %v671, %v667
        %v876 = vpack.c.b16 %v672, %v668
        %v877 = vpack.c.b16 %v677, %v673
        %v878 = vpack.c.b16 %v678, %v674
        %v879 = vpack.c.b16 %v679, %v675
        %v880 = vpack.c.b16 %v680, %v676
        %v881 = vpack.c.b16 %v685, %v681
        %v882 = vpack.c.b16 %v686, %v682
        %v883 = vpack.c.b16 %v687, %v683
        %v884 = vpack.c.b16 %v688, %v684
        %v885 = vpack.c.b16 %v693, %v689
        %v886 = vpack.c.b16 %v694, %v690
        %v887 = vpack.c.b16 %v695, %v691
        %v888 = vpack.c.b16 %v696, %v692
        %v889 = vpack.c.b16 %v701, %v697
        %v890 = vpack.c.b16 %v702, %v698
        %v891 = vpack.c.b16 %v703, %v699
        %v892 = vpack.c.b16 %v704, %v700
        %v893 = vpack.c.b16 %v709, %v705
        %v894 = vpack.c.b16 %v710, %v706
        %v895 = vpack.c.b16 %v711, %v707
        %v896 = vpack.c.b16 %v712, %v708
        %v897 = vpack.c.b16 %v717, %v713
        %v898 = vpack.c.b16 %v718, %v714
        %v899 = vpack.c.b16 %v719, %v715
        %v900 = vpack.c.b16 %v720, %v716
        %v901 = vpack.c.b16 %v725, %v721
        %v902 = vpack.c.b16 %v726, %v722
        %v903 = vpack.c.b16 %v727, %v723
        %v904 = vpack.c.b16 %v728, %v724
        %v905 = vpack.c.b16 %v733, %v729
        %v906 = vpack.c.b16 %v734, %v730
        %v907 = vpack.c.b16 %v735, %v731
        %v908 = vpack.c.b16 %v736, %v732
        %v909 = vpack.c.b16 %v741, %v737
        %v910 = vpack.c.b16 %v742, %v738
        %v911 = vpack.c.b16 %v743, %v739
        %v912 = vpack.c.b16 %v744, %v740
        %v913 = vpack.c.b16 %v749, %v745
        %v914 = vpack.c.b16 %v750, %v746
        %v915 = vpack.c.b16 %v751, %v747
        %v916 = vpack.c.b16 %v752, %v748
        %v917 = vpack.c.b16 %v757, %v753
        %v918 = vpack.c.b16 %v758, %v754
        %v919 = vpack.c.b16 %v759, %v755
        %v920 = vpack.c.b16 %v760, %v756
        %v921 = vpack.c.b16 %v765, %v761
        %v922 = vpack.c.b16 %v766, %v762
        %v923 = vpack.c.b16 %v767, %v763
        %v924 = vpack.c.b16 %v768, %v764
        %v925 = vpack.c.b16 %v773, %v769
        %v926 = vpack.c.b16 %v774, %v770
        %v927 = vpack.c.b16 %v775, %v771
        %v928 = vpack.c.b16 %v776, %v772
        %v929 = vpack.c.b16 %v781, %v777
        %v930 = vpack.c.b16 %v782, %v778
        %v931 = vpack.c.b16 %v783, %v779
        %v932 = vpack.c.b16 %v784, %v780
        %v933 = vpack.c.b16 %v789, %v785
        %v934 = vpack.c.b16 %v790, %v786
        %v935 = vpack.c.b16 %v791, %v787
        %v936 = vpack.c.b16 %v792, %v788
        %v937 = vpack.c.b16 %v797, %v793
        %v938 = vpack.c.b16 %v798, %v794
        %v939 = vpack.c.b16 %v799, %v795
        %v940 = vpack.c.b16 %v800, %v796
        %v941 = vpack.c.b16 %v805, %v801
        %v942 = vpack.c.b16 %v806, %v802
        %v943 = vpack.c.b16 %v807, %v803
        %v944 = vpack.c.b16 %v808, %v804
        %v945 = vpack.c.b16 %v813, %v809
        %v946 = vpack.c.b16 %v814, %v810
        %v947 = vpack.c.b16 %v815, %v811
        %v948 = vpack.c.b16 %v816, %v812
        %v949 = vpack.c.b16 %v821, %v817
        %v950 = vpack.c.b16 %v822, %v818
        %v951 = vpack.c.b16 %v823, %v819
        %v952 = vpack.c.b16 %v824, %v820
        %1081 = vmatprep.subr.bf16.mxu0 %v854
        %1082 = vmatpush1.bf16.msra.mxu0 %v853
        %1083 = vmatprep.subr.bf16.mxu0 %v850
        %1084 = vmatpush1.bf16.msra.mxu0 %v849
        %1085 = vmatprep.subr.bf16.mxu0 %v846
        %1086 = vmatpush1.bf16.msra.mxu0 %v845
        %1087 = vmatprep.subr.bf16.mxu0 %v842
        %1088 = vmatpush1.bf16.msra.mxu0 %v841
        %1089 = vmatprep.subr.bf16.mxu0 %v838
        %1090 = vmatpush1.bf16.msra.mxu0 %v837
        %1091 = vmatprep.subr.bf16.mxu0 %v834
        %1092 = vmatpush1.bf16.msra.mxu0 %v833
        %1093 = vmatprep.subr.bf16.mxu0 %v830
        %1094 = vmatpush1.bf16.msra.mxu0 %v829
        %1095 = vmatprep.subr.bf16.mxu0 %v826
        %1096 = vmatpush1.bf16.msra.mxu0 %v825
        %1097 = vmatprep.subr.bf16.mxu0 %v886
        %1098 = vmatpush2.bf16.msra.mxu0 %v885
        %1099 = vmatprep.subr.bf16.mxu0 %v882
        %1100 = vmatpush2.bf16.msra.mxu0 %v881
        %1101 = vmatprep.subr.bf16.mxu0 %v878
        %1102 = vmatpush2.bf16.msra.mxu0 %v877
        %1103 = vmatprep.subr.bf16.mxu0 %v874
        %1104 = vmatpush2.bf16.msra.mxu0 %v873
        %1105 = vmatprep.subr.bf16.mxu0 %v870
        %1106 = vmatpush2.bf16.msra.mxu0 %v869
        %1107 = vmatprep.subr.bf16.mxu0 %v866
        %1108 = vmatpush2.bf16.msra.mxu0 %v865
        %1109 = vmatprep.subr.bf16.mxu0 %v862
        %1110 = vmatpush2.bf16.msra.mxu0 %v861
        %1111 = vmatprep.subr.bf16.mxu0 %v858
        %1112 = vmatpush2.bf16.msra.mxu0 %v857
        %1113 = vmatprep.mubr.bf16.mxu0 %v426
        %1114 = vmatmul.mubr.bf16.gmra.mxu0 %v425
        %v1115 = vpop.f32.mrf.mxu0
        %v1116 = vadd.f32 0.0, %v1115
        %v1117 = vpop.f32.mrf.mxu0
        %v1118 = vadd.f32 0.0, %v1117
        %v1119 = vpop.f32.mrf.mxu0
        %v1120 = vadd.f32 0.0, %v1119
        %v1121 = vpop.f32.mrf.mxu0
        %v1122 = vadd.f32 0.0, %v1121
        %1123 = vmatprep.mubr.bf16.mxu0 %v430
        %1124 = vmatmul.mubr.bf16.gmra.mxu0 %v429
        %v1125 = vpop.f32.mrf.mxu0
        %v1126 = vadd.f32 0.0, %v1125
        %v1127 = vpop.f32.mrf.mxu0
        %v1128 = vadd.f32 0.0, %v1127
        %v1129 = vpop.f32.mrf.mxu0
        %v1130 = vadd.f32 0.0, %v1129
        %v1131 = vpop.f32.mrf.mxu0
        %v1132 = vadd.f32 0.0, %v1131
        %1133 = vdwg.mxu0
        %1134 = vmatprep.subr.bf16.mxu0 %v918
        %1135 = vmatpush1.bf16.msra.mxu0 %v917
        %1136 = vmatprep.subr.bf16.mxu0 %v914
        %1137 = vmatpush1.bf16.msra.mxu0 %v913
        %1138 = vmatprep.subr.bf16.mxu0 %v910
        %1139 = vmatpush1.bf16.msra.mxu0 %v909
        %1140 = vmatprep.subr.bf16.mxu0 %v906
        %1141 = vmatpush1.bf16.msra.mxu0 %v905
        %1142 = vmatprep.subr.bf16.mxu0 %v902
        %1143 = vmatpush1.bf16.msra.mxu0 %v901
        %1144 = vmatprep.subr.bf16.mxu0 %v898
        %1145 = vmatpush1.bf16.msra.mxu0 %v897
        %1146 = vmatprep.subr.bf16.mxu0 %v894
        %1147 = vmatpush1.bf16.msra.mxu0 %v893
        %1148 = vmatprep.subr.bf16.mxu0 %v890
        %1149 = vmatpush1.bf16.msra.mxu0 %v889
        %1150 = vmatprep.subr.bf16.mxu0 %v950
        %1151 = vmatpush2.bf16.msra.mxu0 %v949
        %1152 = vmatprep.subr.bf16.mxu0 %v946
        %1153 = vmatpush2.bf16.msra.mxu0 %v945
        %1154 = vmatprep.subr.bf16.mxu0 %v942
        %1155 = vmatpush2.bf16.msra.mxu0 %v941
        %1156 = vmatprep.subr.bf16.mxu0 %v938
        %1157 = vmatpush2.bf16.msra.mxu0 %v937
        %1158 = vmatprep.subr.bf16.mxu0 %v934
        %1159 = vmatpush2.bf16.msra.mxu0 %v933
        %1160 = vmatprep.subr.bf16.mxu0 %v930
        %1161 = vmatpush2.bf16.msra.mxu0 %v929
        %1162 = vmatprep.subr.bf16.mxu0 %v926
        %1163 = vmatpush2.bf16.msra.mxu0 %v925
        %1164 = vmatprep.subr.bf16.mxu0 %v922
        %1165 = vmatpush2.bf16.msra.mxu0 %v921
        %1166 = vmatprep.mubr.bf16.mxu0 %v428
        %1167 = vmatmul.mubr.bf16.gmra.mxu0 %v427
        %v1168 = vpop.f32.mrf.mxu0
        %v1169 = vadd.f32 %v1116, %v1168
        %v1170 = vpop.f32.mrf.mxu0
        %v1171 = vadd.f32 %v1118, %v1170
        %v1172 = vpop.f32.mrf.mxu0
        %v1173 = vadd.f32 %v1120, %v1172
        %v1174 = vpop.f32.mrf.mxu0
        %v1175 = vadd.f32 %v1122, %v1174
        %1176 = vmatprep.mubr.bf16.mxu0 %v432
        %1177 = vmatmul.mubr.bf16.gmra.mxu0 %v431
        %v1178 = vpop.f32.mrf.mxu0
        %v1179 = vadd.f32 %v1126, %v1178
        %v1180 = vpop.f32.mrf.mxu0
        %v1181 = vadd.f32 %v1128, %v1180
        %v1182 = vpop.f32.mrf.mxu0
        %v1183 = vadd.f32 %v1130, %v1182
        %v1184 = vpop.f32.mrf.mxu0
        %v1185 = vadd.f32 %v1132, %v1184
        %1186 = vdwg.mxu0
        %1187 = vmatprep.subr.bf16.mxu0 %v856
        %1188 = vmatpush1.bf16.msra.mxu0 %v855
        %1189 = vmatprep.subr.bf16.mxu0 %v852
        %1190 = vmatpush1.bf16.msra.mxu0 %v851
        %1191 = vmatprep.subr.bf16.mxu0 %v848
        %1192 = vmatpush1.bf16.msra.mxu0 %v847
        %1193 = vmatprep.subr.bf16.mxu0 %v844
        %1194 = vmatpush1.bf16.msra.mxu0 %v843
        %1195 = vmatprep.subr.bf16.mxu0 %v840
        %1196 = vmatpush1.bf16.msra.mxu0 %v839
        %1197 = vmatprep.subr.bf16.mxu0 %v836
        %1198 = vmatpush1.bf16.msra.mxu0 %v835
        %1199 = vmatprep.subr.bf16.mxu0 %v832
        %1200 = vmatpush1.bf16.msra.mxu0 %v831
        %1201 = vmatprep.subr.bf16.mxu0 %v828
        %1202 = vmatpush1.bf16.msra.mxu0 %v827
        %1203 = vmatprep.subr.bf16.mxu0 %v888
        %1204 = vmatpush2.bf16.msra.mxu0 %v887
        %1205 = vmatprep.subr.bf16.mxu0 %v884
        %1206 = vmatpush2.bf16.msra.mxu0 %v883
        %1207 = vmatprep.subr.bf16.mxu0 %v880
        %1208 = vmatpush2.bf16.msra.mxu0 %v879
        %1209 = vmatprep.subr.bf16.mxu0 %v876
        %1210 = vmatpush2.bf16.msra.mxu0 %v875
        %1211 = vmatprep.subr.bf16.mxu0 %v872
        %1212 = vmatpush2.bf16.msra.mxu0 %v871
        %1213 = vmatprep.subr.bf16.mxu0 %v868
        %1214 = vmatpush2.bf16.msra.mxu0 %v867
        %1215 = vmatprep.subr.bf16.mxu0 %v864
        %1216 = vmatpush2.bf16.msra.mxu0 %v863
        %1217 = vmatprep.subr.bf16.mxu0 %v860
        %1218 = vmatpush2.bf16.msra.mxu0 %v859
        %1219 = vmatprep.mubr.bf16.mxu0 %v426
        %1220 = vmatmul.mubr.bf16.gmra.mxu0 %v425
        %v1221 = vpop.f32.mrf.mxu0
        %v1222 = vadd.f32 0.0, %v1221
        %v1223 = vpop.f32.mrf.mxu0
        %v1224 = vadd.f32 0.0, %v1223
        %v1225 = vpop.f32.mrf.mxu0
        %v1226 = vadd.f32 0.0, %v1225
        %v1227 = vpop.f32.mrf.mxu0
        %v1228 = vadd.f32 0.0, %v1227
        %1229 = vmatprep.mubr.bf16.mxu0 %v430
        %1230 = vmatmul.mubr.bf16.gmra.mxu0 %v429
        %v1231 = vpop.f32.mrf.mxu0
        %v1232 = vadd.f32 0.0, %v1231
        %v1233 = vpop.f32.mrf.mxu0
        %v1234 = vadd.f32 0.0, %v1233
        %v1235 = vpop.f32.mrf.mxu0
        %v1236 = vadd.f32 0.0, %v1235
        %v1237 = vpop.f32.mrf.mxu0
        %v1238 = vadd.f32 0.0, %v1237
        %1239 = vdwg.mxu0
        %1240 = vmatprep.subr.bf16.mxu0 %v920
        %1241 = vmatpush1.bf16.msra.mxu0 %v919
        %1242 = vmatprep.subr.bf16.mxu0 %v916
        %1243 = vmatpush1.bf16.msra.mxu0 %v915
        %1244 = vmatprep.subr.bf16.mxu0 %v912
        %1245 = vmatpush1.bf16.msra.mxu0 %v911
        %1246 = vmatprep.subr.bf16.mxu0 %v908
        %1247 = vmatpush1.bf16.msra.mxu0 %v907
        %1248 = vmatprep.subr.bf16.mxu0 %v904
        %1249 = vmatpush1.bf16.msra.mxu0 %v903
        %1250 = vmatprep.subr.bf16.mxu0 %v900
        %1251 = vmatpush1.bf16.msra.mxu0 %v899
        %1252 = vmatprep.subr.bf16.mxu0 %v896
        %1253 = vmatpush1.bf16.msra.mxu0 %v895
        %1254 = vmatprep.subr.bf16.mxu0 %v892
        %1255 = vmatpush1.bf16.msra.mxu0 %v891
        %1256 = vmatprep.subr.bf16.mxu0 %v952
        %1257 = vmatpush2.bf16.msra.mxu0 %v951
        %1258 = vmatprep.subr.bf16.mxu0 %v948
        %1259 = vmatpush2.bf16.msra.mxu0 %v947
        %1260 = vmatprep.subr.bf16.mxu0 %v944
        %1261 = vmatpush2.bf16.msra.mxu0 %v943
        %1262 = vmatprep.subr.bf16.mxu0 %v940
        %1263 = vmatpush2.bf16.msra.mxu0 %v939
        %1264 = vmatprep.subr.bf16.mxu0 %v936
        %1265 = vmatpush2.bf16.msra.mxu0 %v935
        %1266 = vmatprep.subr.bf16.mxu0 %v932
        %1267 = vmatpush2.bf16.msra.mxu0 %v931
        %1268 = vmatprep.subr.bf16.mxu0 %v928
        %1269 = vmatpush2.bf16.msra.mxu0 %v927
        %1270 = vmatprep.subr.bf16.mxu0 %v924
        %1271 = vmatpush2.bf16.msra.mxu0 %v923
        %1272 = vmatprep.mubr.bf16.mxu0 %v428
        %1273 = vmatmul.mubr.bf16.gmra.mxu0 %v427
        %v1274 = vpop.f32.mrf.mxu0
        %v1275 = vadd.f32 %v1222, %v1274
        %v1276 = vpop.f32.mrf.mxu0
        %v1277 = vadd.f32 %v1224, %v1276
        %v1278 = vpop.f32.mrf.mxu0
        %v1279 = vadd.f32 %v1226, %v1278
        %v1280 = vpop.f32.mrf.mxu0
        %v1281 = vadd.f32 %v1228, %v1280
        %1282 = vmatprep.mubr.bf16.mxu0 %v432
        %1283 = vmatmul.mubr.bf16.gmra.mxu0 %v431
        %v1284 = vpop.f32.mrf.mxu0
        %v1285 = vadd.f32 %v1232, %v1284
        %v1286 = vpop.f32.mrf.mxu0
        %v1287 = vadd.f32 %v1234, %v1286
        %v1288 = vpop.f32.mrf.mxu0
        %v1289 = vadd.f32 %v1236, %v1288
        %v1290 = vpop.f32.mrf.mxu0
        %v1291 = vadd.f32 %v1238, %v1290
        %1292 = vdwg.mxu0
        %v1293 = vadd.f32 %v249, %v1169
        %v1294 = vadd.f32 %v250, %v1171
        %v1295 = vadd.f32 %v251, %v1275
        %v1296 = vadd.f32 %v252, %v1277
        %v1297 = vadd.f32 %v253, %v1173
        %v1298 = vadd.f32 %v254, %v1175
        %v1299 = vadd.f32 %v255, %v1279
        %v1300 = vadd.f32 %v256, %v1281
        %v1301 = vadd.f32 %v257, %v1179
        %v1302 = vadd.f32 %v258, %v1181
        %v1303 = vadd.f32 %v259, %v1285
        %v1304 = vadd.f32 %v260, %v1287
        %v1305 = vadd.f32 %v261, %v1183
        %v1306 = vadd.f32 %v262, %v1185
        %v1307 = vadd.f32 %v263, %v1289
        %v1308 = vadd.f32 %v264, %v1291
        %1309 = vst [vmem:[#allocation2] sm:$0xff] %v1293
        %1310 = vst [vmem:[#allocation2 + $0x8] sm:$0xff] %v1294
        %1311 = vst [vmem:[#allocation2 + $0x10] sm:$0xff] %v1295
        %1312 = vst [vmem:[#allocation2 + $0x18] sm:$0xff] %v1296
        %1313 = vst [vmem:[#allocation2 + $0x20] sm:$0xff] %v1297
        %1314 = vst [vmem:[#allocation2 + $0x28] sm:$0xff] %v1298
        %1315 = vst [vmem:[#allocation2 + $0x30] sm:$0xff] %v1299
        %1316 = vst [vmem:[#allocation2 + $0x38] sm:$0xff] %v1300
        %1317 = vst [vmem:[#allocation2 + $0x40] sm:$0xff] %v1301
        %1318 = vst [vmem:[#allocation2 + $0x48] sm:$0xff] %v1302
        %1319 = vst [vmem:[#allocation2 + $0x50] sm:$0xff] %v1303
        %1320 = vst [vmem:[#allocation2 + $0x58] sm:$0xff] %v1304
        %1321 = vst [vmem:[#allocation2 + $0x60] sm:$0xff] %v1305
        %1322 = vst [vmem:[#allocation2 + $0x68] sm:$0xff] %v1306
        %1323 = vst [vmem:[#allocation2 + $0x70] sm:$0xff] %v1307
        %1324 = vst [vmem:[#allocation2 + $0x78] sm:$0xff] %v1308
        // Predicated region
        $region37: #{attention_forward.3} parent=27 // pred_check
          %p1325 = pneg %p229
        $region38: #{attention_forward.3} parent=27 // pred_check_branch
          %1327 = sbr.rel (%p1325) target = $region40
        $region39: #{attention_forward.3} parent=27 // pred_region
          %v1328 = vld [vmem:[#allocation2] sm:$0xff]
          %v1329 = vld [vmem:[#allocation2 + $0x8] sm:$0xff]
          %v1330 = vld [vmem:[#allocation2 + $0x10] sm:$0xff]
          %v1331 = vld [vmem:[#allocation2 + $0x18] sm:$0xff]
          %v1332 = vld [vmem:[#allocation2 + $0x20] sm:$0xff]
          %v1333 = vld [vmem:[#allocation2 + $0x28] sm:$0xff]
          %v1334 = vld [vmem:[#allocation2 + $0x30] sm:$0xff]
          %v1335 = vld [vmem:[#allocation2 + $0x38] sm:$0xff]
          %v1336 = vld [vmem:[#allocation2 + $0x40] sm:$0xff]
          %v1337 = vld [vmem:[#allocation2 + $0x48] sm:$0xff]
          %v1338 = vld [vmem:[#allocation2 + $0x50] sm:$0xff]
          %v1339 = vld [vmem:[#allocation2 + $0x58] sm:$0xff]
          %v1340 = vld [vmem:[#allocation2 + $0x60] sm:$0xff]
          %v1341 = vld [vmem:[#allocation2 + $0x68] sm:$0xff]
          %v1342 = vld [vmem:[#allocation2 + $0x70] sm:$0xff]
          %v1343 = vld [vmem:[#allocation2 + $0x78] sm:$0xff]
          %v1344 = vpack.c.bf16 %v1332, %v1328
          %v1345 = vpack.c.bf16 %v1333, %v1329
          %v1346 = vpack.c.bf16 %v1334, %v1330
          %v1347 = vpack.c.bf16 %v1335, %v1331
          %v1348 = vpack.c.bf16 %v1340, %v1336
          %v1349 = vpack.c.bf16 %v1341, %v1337
          %v1350 = vpack.c.bf16 %v1342, %v1338
          %v1351 = vpack.c.bf16 %v1343, %v1339
          %v1360 = vunpack.c.l.b16 %v1344
          %v1361 = vunpack.c.l.b16 %v1345
          %v1362 = vunpack.c.l.b16 %v1346
          %v1363 = vunpack.c.l.b16 %v1347
          %v1364 = vunpack.c.h.b16 %v1344
          %v1365 = vunpack.c.h.b16 %v1345
          %v1366 = vunpack.c.h.b16 %v1346
          %v1367 = vunpack.c.h.b16 %v1347
          %v1368 = vunpack.c.l.b16 %v1348
          %v1369 = vunpack.c.l.b16 %v1349
          %v1370 = vunpack.c.l.b16 %v1350
          %v1371 = vunpack.c.l.b16 %v1351
          %v1372 = vunpack.c.h.b16 %v1348
          %v1373 = vunpack.c.h.b16 %v1349
          %v1374 = vunpack.c.h.b16 %v1350
          %v1375 = vunpack.c.h.b16 %v1351
          %v1376 = vpack.c.b16 %v1361, %v1360
          %v1377 = vpack.c.b16 %v1363, %v1362
          %v1378 = vpack.c.b16 %v1365, %v1364
          %v1379 = vpack.c.b16 %v1367, %v1366
          %v1380 = vpack.c.b16 %v1369, %v1368
          %v1381 = vpack.c.b16 %v1371, %v1370
          %v1382 = vpack.c.b16 %v1373, %v1372
          %v1383 = vpack.c.b16 %v1375, %v1374
          %1392 = vst [vmem:[%s212] sm:$0xff] %v1376
          %1393 = vst [vmem:[%s212 + $0x8] sm:$0xff] %v1377
          %1394 = vst [vmem:[%s212 + $0x10] sm:$0xff] %v1378
          %1395 = vst [vmem:[%s212 + $0x18] sm:$0xff] %v1379
          %1396 = vst [vmem:[%s212 + $0x20] sm:$0xff] %v1380
          %1397 = vst [vmem:[%s212 + $0x28] sm:$0xff] %v1381
          %1398 = vst [vmem:[%s212 + $0x30] sm:$0xff] %v1382
          %1399 = vst [vmem:[%s212 + $0x38] sm:$0xff] %v1383
        $region40: #{attention_forward.3} parent=27 // pred_fallthru
          _
        %s1400 = sand.u32 %s101, 1
        %s1401 = sand.u32 %s101, 1
        %s1402 = smul.addr %s1401, 64
        %s1403 = scalar_lea.vmem [#allocation5], %s1402
        // Predicated region
        $region41: #{attention_forward.3} parent=27 // pred_check
          %p1404 = pneg %p111
        $region42: #{attention_forward.3} parent=27 // pred_check_branch
          %1406 = sbr.rel (%p1404) target = $region44
        $region43: #{attention_forward.3} parent=27 // pred_region
          %s1407 = smul.u32 4, %s21
          %s1408 = smul.u32 4, %s22
          %s1409 = smul.addr %s1407, 12
          %s1410 = sadd.s32 %s1408, %s1409
          %s1411 = smul.addr %s1410, 4
          %s1412 = scalar_lea.vmem %s2, %s1411
          // Predicated region
          $region45: #{attention_forward.3} parent=43 // pred_check
            _
          $region46: #{attention_forward.3} parent=43 // pred_check_branch
            %1414 = sbr.rel (0) target = $region48
          $region47: #{attention_forward.3} parent=43 // pred_region
            // Predicated region
            $region49: #{attention_forward.3} parent=47 // pred_check
              _
            $region50: #{attention_forward.3} parent=47 // pred_check_branch
              %1416 = sbr.rel (0) target = $region52
            $region51: #{attention_forward.3} parent=47 // pred_region
              loop: start=0, step=1, limit=1
              $region53: #{attention_forward.3} parent=51 // loop_pre_header
                _
              $region54: #{attention_forward.3} parent=51 // loop_header
                %s1418 = sphi 0, %s1422
                %p1419 = scmp.ge.s32.totalorder %s1418, 1
                %s1423 = sphi %s1403, %s1403
                %s1424 = sphi %s1412, %s1412
              $region55: #{attention_forward.3} parent=51 // loop_header_branch
                %1421 = sbr.rel (%p1419) target = $region59
              $region56: #{attention_forward.3} parent=51 // loop_body
                %v1425 = vld [vmem:[%s1423] sm:$0xff]
                %1426 = vst [vmem:[%s1424] sm:$0xff] %v1425
                %v1427 = vld [vmem:[%s1423 + $0x8] sm:$0xff]
                %1428 = vst [vmem:[%s1424 + $0x8] sm:$0xff] %v1427
                %v1429 = vld [vmem:[%s1423 + $0x10] sm:$0xff]
                %1430 = vst [vmem:[%s1424 + $0x30] sm:$0xff] %v1429
                %v1431 = vld [vmem:[%s1423 + $0x18] sm:$0xff]
                %1432 = vst [vmem:[%s1424 + $0x38] sm:$0xff] %v1431
                %v1433 = vld [vmem:[%s1423 + $0x20] sm:$0xff]
                %1434 = vst [vmem:[%s1424 + $0x60] sm:$0xff] %v1433
                %v1435 = vld [vmem:[%s1423 + $0x28] sm:$0xff]
                %1436 = vst [vmem:[%s1424 + $0x68] sm:$0xff] %v1435
                %v1437 = vld [vmem:[%s1423 + $0x30] sm:$0xff]
                %1438 = vst [vmem:[%s1424 + $0x90] sm:$0xff] %v1437
                %v1439 = vld [vmem:[%s1423 + $0x38] sm:$0xff]
                %1440 = vst [vmem:[%s1424 + $0x98] sm:$0xff] %v1439
              $region57: #{attention_forward.3} parent=51 // loop_footer
                %s1422 = sadd.s32 1, %s1418
              $region58: #{attention_forward.3} parent=51 // loop_footer_branch
                %1417 = sbr.rel target = $region54
              $region59: #{attention_forward.3} parent=51 // loop_exit
                _
            $region52: #{attention_forward.3} parent=47 // pred_fallthru
              _
            // Predicated region
            $region60: #{attention_forward.3} parent=47 // pred_check
              _
            $region61: #{attention_forward.3} parent=47 // pred_check_branch
              %1442 = sbr.rel target = $region63
            $region62: #{attention_forward.3} parent=47 // pred_region
              _
            $region63: #{attention_forward.3} parent=47 // pred_fallthru
              _
          $region48: #{attention_forward.3} parent=43 // pred_fallthru
            _
          %1443 = vnop
        $region44: #{attention_forward.3} parent=27 // pred_fallthru
          _
      $region28: #{attention_forward.3} parent=5 // pred_fallthru
        _
      %p1444 = scmp.le.s32.totalorder 2, %s11
      // Predicated region
      $region64: #{attention_forward.3} parent=5 // pred_check
        %p1445 = pneg %p1444
      $region65: #{attention_forward.3} parent=5 // pred_check_branch
        %1447 = sbr.rel (%p1445) target = $region67
      $region66: #{attention_forward.3} parent=5 // pred_region
        %s1448 = ssub.s32 %s11, 2
        // Predicated region
        $region68: #{attention_forward.3} parent=66 // pred_check
          %p1449 = pneg %p117
        $region69: #{attention_forward.3} parent=66 // pred_check_branch
          %1451 = sbr.rel (%p1449) target = $region71
        $region70: #{attention_forward.3} parent=66 // pred_region
          %s1452 = sand.u32 %s102, 1
          %s1453 = sand.u32 %s102, 1
          %s1454 = smul.addr %s1453, 64
          %s1455 = scalar_lea.vmem [#allocation5], %s1454
        $region71: #{attention_forward.3} parent=66 // pred_fallthru
          _
      $region67: #{attention_forward.3} parent=5 // pred_fallthru
        _
    $region6: #{attention_forward.3} parent=1 // loop_footer
      %s15 = sadd.s32 1, %s11
    $region7: #{attention_forward.3} parent=1 // loop_footer_branch
      %10 = sbr.rel target = $region3
    $region8: #{attention_forward.3} parent=1 // loop_exit
      _
    %1456 = vsyncpa [#allocation4], 1
    %s1457 = scalar_lea.sflag [#allocation4], 1
    %1458 = vsyncpa %s1457, 1

// kernel: attention_forward.4
$region0: #{attention_forward.4}
  #allocation0 [shape = 'u32[]', space=smem, size = 0x4, offset = 0x4, fixed_abs, tag = 'smem constant byte address 0x4 - core index']
  #allocation1 [shape = 'u32[144,128]{1,0:T(1,128)}', space=vmem, size = 0x12000, scoped, tag = 'internal scratch']
  #allocation2 [shape = 'f32[16,512]{1,0:T(8,128)}', space=vmem, size = 0x8000, scoped, tag = 'scratch operand']
  %s0 = inlined_call_operand.vmem [shape: bf16[2,16,1536], index: 0, kind: input, shape index: {}, may-alias: {0,1}]
  %s1 = inlined_call_operand.vmem [shape: bf16[2,16,1536], index: 1, kind: input, shape index: {}, may-alias: {0,1}]
  %s2 = inlined_call_operand.vmem [shape: bf16[2,16,512], index: 2, kind: output, shape index: {}]
  %s3 = sld [smem:[#allocation0]]
  $region41: #{attention_forward.4} parent=0
    _
  %s5 = ssub.s32 1, %s3
  %s6 = scalar_select 0, %s5, %s3
  loop: start=0, step=1, limit=4
  $region2: #{attention_forward.4} parent=0 // loop_pre_header
    _
  $region3: #{attention_forward.4} parent=0 // loop_header
    %s8 = sphi 0, %s12
    %p9 = scmp.ge.s32.totalorder %s8, 4
    %s15 = sphi 0, %s27
    %s16 = sphi 0, %s23
    %s17 = sphi 0, %s15
    %s18 = sphi 0, %s16
    %s19 = sphi 0, %s17
    %s20 = sphi 0, %s18
    %s32 = sphi 0, %s34
    %s35 = sphi 0, %s32
    %s36 = sphi 0, %s35
    %s52 = sphi 0, %s36
    %s58 = sphi 0, %s60
    %s61 = sphi 0, %s58
    %s62 = sphi 0, %s61
    %s78 = sphi 0, %s62
    %s86 = sphi 0, %s88
    %s89 = sphi 0, %s86
    %s90 = sphi 0, %s89
    %s106 = sphi 0, %s90
  $region4: #{attention_forward.4} parent=0 // loop_header_branch
    %11 = sbr.rel (%p9) target = $region8
  $region5: #{attention_forward.4} parent=0 // loop_body
    %s13 = ssub.s32 %s8, 1
    %s14 = ssub.s32 %s8, 2
    %s21 = sadd.s32 1, %s16
    %p22 = scmp.ge.s32.totalorder %s21, 1
    %s23 = scalar_select %p22, 0, %s21
    %s24 = sadd.s32 1, %s15
    %s25 = scalar_select %p22, %s24, %s15
    %p26 = scmp.ge.s32.totalorder %s25, 2
    %s27 = scalar_select %p26, 0, %s25
    %s28 = ssub.s32 %s15, %s27
    %s29 = ssub.s32 %s16, %s23
    %s30 = sor.u32 %s28, %s29
    %p31 = scmp.eq.s32.totalorder %s30, 0
    %s33 = sadd.s32 %s32, 1
    %s34 = scalar_select %p31, %s32, %s33
    %p37 = pneg %p31
    %p38 = scmp.eq.s32.totalorder %s8, 1
    %p39 = por %p37, %p38
    %p40 = scmp.ne.s32.totalorder %s32, %s35
    %p41 = scmp.eq.s32.totalorder %s8, 0
    %p42 = por %p40, %p41
    %p43 = scmp.ne.s32.totalorder %s32, %s35
    %p44 = scmp.eq.s32.totalorder %s13, 1
    %p45 = por %p43, %p44
    %p46 = scmp.ne.s32.totalorder %s35, %s36
    %p47 = scmp.eq.s32.totalorder %s13, 0
    %p48 = por %p46, %p47
    %p49 = scmp.ne.s32.totalorder %s35, %s36
    %p50 = scmp.eq.s32.totalorder %s14, 1
    %p51 = por %p49, %p50
    %p53 = scmp.ne.s32.totalorder %s36, %s52
    %p54 = scmp.eq.s32.totalorder %s14, 0
    %p55 = por %p53, %p54
    %s56 = ssub.s32 %s15, %s27
    %p57 = scmp.eq.s32.totalorder %s56, 0
    %s59 = sadd.s32 %s58, 1
    %s60 = scalar_select %p57, %s58, %s59
    %p63 = pneg %p57
    %p64 = scmp.eq.s32.totalorder %s8, 1
    %p65 = por %p63, %p64
    %p66 = scmp.ne.s32.totalorder %s58, %s61
    %p67 = scmp.eq.s32.totalorder %s8, 0
    %p68 = por %p66, %p67
    %p69 = scmp.ne.s32.totalorder %s58, %s61
    %p70 = scmp.eq.s32.totalorder %s13, 1
    %p71 = por %p69, %p70
    %p72 = scmp.ne.s32.totalorder %s61, %s62
    %p73 = scmp.eq.s32.totalorder %s13, 0
    %p74 = por %p72, %p73
    %p75 = scmp.ne.s32.totalorder %s61, %s62
    %p76 = scmp.eq.s32.totalorder %s14, 1
    %p77 = por %p75, %p76
    %p79 = scmp.ne.s32.totalorder %s62, %s78
    %p80 = scmp.eq.s32.totalorder %s14, 0
    %p81 = por %p79, %p80
    %s82 = ssub.s32 %s15, %s27
    %s83 = ssub.s32 %s16, %s23
    %s84 = sor.u32 %s82, %s83
    %p85 = scmp.eq.s32.totalorder %s84, 0
    %s87 = sadd.s32 %s86, 1
    %s88 = scalar_select %p85, %s86, %s87
    %p91 = pneg %p85
    %p92 = scmp.eq.s32.totalorder %s8, 1
    %p93 = por %p91, %p92
    %p94 = scmp.ne.s32.totalorder %s86, %s89
    %p95 = scmp.eq.s32.totalorder %s8, 0
    %p96 = por %p94, %p95
    %p97 = scmp.ne.s32.totalorder %s86, %s89
    %p98 = scmp.eq.s32.totalorder %s13, 1
    %p99 = por %p97, %p98
    %p100 = scmp.ne.s32.totalorder %s89, %s90
    %p101 = scmp.eq.s32.totalorder %s13, 0
    %p102 = por %p100, %p101
    %p103 = scmp.ne.s32.totalorder %s89, %s90
    %p104 = scmp.eq.s32.totalorder %s14, 1
    %p105 = por %p103, %p104
    %p107 = scmp.ne.s32.totalorder %s90, %s106
    %p108 = scmp.eq.s32.totalorder %s14, 0
    %p109 = por %p107, %p108
    %p110 = scmp.le.s32.totalorder 1, %s8
    %p111 = scmp.lt.s32.totalorder %s8, 3
    %p112 = pnand %p110, %p111
    %p113 = pneg %p112
    // Predicated region
    $region9: #{attention_forward.4} parent=5 // pred_check
      _
    $region10: #{attention_forward.4} parent=5 // pred_check_branch
      %115 = sbr.rel (%p112) target = $region12
    $region11: #{attention_forward.4} parent=5 // pred_region
      %s116 = ssub.s32 %s8, 1
    $region12: #{attention_forward.4} parent=5 // pred_fallthru
      _
    %p117 = scmp.lt.s32.totalorder %s8, 2
    // Predicated region
    $region13: #{attention_forward.4} parent=5 // pred_check
      %p118 = pneg %p117
    $region14: #{attention_forward.4} parent=5 // pred_check_branch
      %120 = sbr.rel (%p118) target = $region16
    $region15: #{attention_forward.4} parent=5 // pred_region
      // Predicated region
      $region17: #{attention_forward.4} parent=15 // pred_check
        %p121 = pneg %p42
      $region18: #{attention_forward.4} parent=15 // pred_check_branch
        %123 = sbr.rel (%p121) target = $region20
      $region19: #{attention_forward.4} parent=15 // pred_region
        %s124 = smul.u32 2, %s16
        %p125 = scmp.lt.s32.totalorder %s15, 1
        %s126 = scalar_select %p125, %s15, 1
        %p127 = scmp.lt.s32.totalorder %s124, 1
        %s128 = scalar_select %p127, %s124, 1
        %s129 = smul.addr %s128, 12
        %s130 = smul.addr %s126, 24
        %s131 = sadd.s32 %s129, %s130
        %s132 = smul.addr %s131, 4
        %s133 = scalar_lea.vmem %s0, %s132
        %s134 = smul.u32 2, %s16
      $region20: #{attention_forward.4} parent=15 // pred_fallthru
        _
      // Predicated region
      $region21: #{attention_forward.4} parent=15 // pred_check
        %p135 = pneg %p68
      $region22: #{attention_forward.4} parent=15 // pred_check_branch
        %137 = sbr.rel (%p135) target = $region24
      $region23: #{attention_forward.4} parent=15 // pred_region
        %p138 = scmp.lt.s32.totalorder %s15, 1
        %s139 = scalar_select %p138, %s15, 1
        %s140 = smul.addr %s139, 24
        %s141 = smul.addr %s140, 4
        %s142 = scalar_lea.vmem %s1, %s141
      $region24: #{attention_forward.4} parent=15 // pred_fallthru
        _
    $region16: #{attention_forward.4} parent=5 // pred_fallthru
      _
    %p143 = scmp.le.s32.totalorder 1, %s8
    %p144 = scmp.lt.s32.totalorder %s8, 3
    %p145 = pnand %p143, %p144
    %p146 = pneg %p145
    // Predicated region
    $region25: #{attention_forward.4} parent=5 // pred_check
      _
    $region26: #{attention_forward.4} parent=5 // pred_check_branch
      %148 = sbr.rel (%p145) target = $region28
    $region27: #{attention_forward.4} parent=5 // pred_region
      %s149 = ssub.s32 %s8, 1
      %s150 = smul.u32 2, %s18
      %p151 = scmp.lt.s32.totalorder %s17, 1
      %s152 = scalar_select %p151, %s17, 1
      %p153 = scmp.lt.s32.totalorder %s150, 1
      %s154 = scalar_select %p153, %s150, 1
      %s155 = smul.addr %s154, 12
      %s156 = smul.addr %s152, 24
      %s157 = sadd.s32 %s155, %s156
      %s158 = smul.addr %s157, 4
      %s159 = scalar_lea.vmem %s0, %s158
      %p160 = pneg %p48
      %p161 = pneg %p45
      %p162 = scmp.lt.s32.totalorder %s17, 1
      %s163 = scalar_select %p162, %s17, 1
      %s164 = smul.addr %s163, 24
      %s165 = smul.addr %s164, 4
      %s166 = scalar_lea.vmem %s1, %s165
      %p167 = pneg %p74
      %p168 = pneg %p71
      %p169 = pneg %p102
      %p170 = pneg %p99
      %s171 = smul.u32 2, %s18
      %p172 = scmp.lt.s32.totalorder %s17, 1
      %s173 = scalar_select %p172, %s17, 1
      %p174 = scmp.lt.s32.totalorder %s171, 1
      %s175 = scalar_select %p174, %s171, 1
      %s176 = smul.addr %s175, 4
      %s177 = smul.addr %s173, 8
      %s178 = sadd.s32 %s176, %s177
      %s179 = smul.addr %s178, 4
      %s180 = scalar_lea.vmem %s2, %s179
      %s181 = smul.u32 2, %s18
      %p182 = scmp.lt.s32.totalorder %s17, 1
      %s183 = scalar_select %p182, %s17, 1
      %p184 = scmp.lt.s32.totalorder %s181, 1
      %s185 = scalar_select %p184, %s181, 1
      %s186 = smul.addr %s185, 12
      %s187 = smul.addr %s183, 24
      %s188 = sadd.s32 %s186, %s187
      %s189 = smul.addr %s188, 4
      %s190 = scalar_lea.vmem %s0, %s189
      %s191 = smul.u32 2, %s18
      %p192 = scmp.lt.s32.totalorder %s17, 1
      %s193 = scalar_select %p192, %s17, 1
      %s194 = smul.addr %s193, 24
      %s195 = smul.addr %s194, 4
      %s196 = scalar_lea.vmem %s1, %s195
      %s197 = smul.u32 2, %s18
      %p198 = scmp.lt.s32.totalorder %s17, 1
      %s199 = scalar_select %p198, %s17, 1
      %p200 = scmp.lt.s32.totalorder %s197, 1
      %s201 = scalar_select %p200, %s197, 1
      %s202 = smul.addr %s201, 4
      %s203 = smul.addr %s199, 8
      %s204 = sadd.s32 %s202, %s203
      %s205 = smul.addr %s204, 4
      %s206 = scalar_lea.vmem %s2, %s205
      %s207 = smul.u32 2, %s18
      %v209 = vld [vmem:[%s190] sm:$0xf]
      %v210 = vld [vmem:[%s190 + $0x30] sm:$0xf]
      %v211 = vld [vmem:[%s196 + $0x10] sm:$0xf]
      %v212 = vld [vmem:[%s196 + $0x40] sm:$0xf]
      %v213 = vld [vmem:[%s196 + $0x20] sm:$0xf]
      %v214 = vld [vmem:[%s196 + $0x50] sm:$0xf]
      %v217 = vunpack.c.l.b16 %v209
      %v218 = vunpack.c.l.b16 %v210
      %v219 = vpack.c.b16 %v218, %v217
      %v222 = vunpack.c.l.b16 %v211
      %v223 = vunpack.c.l.b16 %v212
      %v224 = vpack.c.b16 %v223, %v222
      %vm225 = vcmask 523264
      %v227 = vsel %vm225, %v219, 0
      %v230 = vsel %vm225, %v224, 0
      %232 = vmatprep.subr.bf16.mxu0 0
      %233 = vmatpush1.bf16.xpose.msra.mxu0 0
      %234 = vmatprep.subr.bf16.mxu0 0
      %235 = vmatpush1.bf16.xpose.msra.mxu0 0
      %236 = vmatprep.subr.bf16.mxu0 0
      %237 = vmatpush1.bf16.xpose.msra.mxu0 0
      %238 = vmatprep.subr.bf16.mxu0 0
      %239 = vmatpush1.bf16.xpose.msra.mxu0 0
      %240 = vmatprep.subr.bf16.mxu0 0
      %241 = vmatpush1.bf16.xpose.msra.mxu0 0
      %242 = vmatprep.subr.bf16.mxu0 0
      %243 = vmatpush1.bf16.xpose.msra.mxu0 0
      %244 = vmatprep.subr.bf16.mxu0 0
      %245 = vmatpush1.bf16.xpose.msra.mxu0 0
      %246 = vmatprep.subr.bf16.mxu0 0
      %247 = vmatpush1.bf16.xpose.msra.mxu0 %v230
      %248 = vmatprep.subr.bf16.mxu0 0
      %249 = vmatpush2.bf16.xpose.msra.mxu0 0
      %250 = vmatprep.subr.bf16.mxu0 0
      %251 = vmatpush2.bf16.xpose.msra.mxu0 0
      %252 = vmatprep.subr.bf16.mxu0 0
      %253 = vmatpush2.bf16.xpose.msra.mxu0 0
      %254 = vmatprep.subr.bf16.mxu0 0
      %255 = vmatpush2.bf16.xpose.msra.mxu0 0
      %256 = vmatprep.subr.bf16.mxu0 0
      %257 = vmatpush2.bf16.xpose.msra.mxu0 0
      %258 = vmatprep.subr.bf16.mxu0 0
      %259 = vmatpush2.bf16.xpose.msra.mxu0 0
      %260 = vmatprep.subr.bf16.mxu0 0
      %261 = vmatpush2.bf16.xpose.msra.mxu0 0
      %262 = vmatprep.subr.bf16.mxu0 0
      %263 = vmatpush2.bf16.xpose.msra.mxu0 0
      %264 = vmatprep.mubr.bf16.mxu0 0
      %265 = vmatmul.mubr.bf16.gmra.mxu0 %v227
      %v266 = vpop.f32.mrf.mxu0
      %v267 = vadd.f32 0.0, %v266
      %v268 = vpop.f32.mrf.mxu0
      %v269 = vpop.f32.mrf.mxu0
      %v270 = vadd.f32 0.0, %v269
      %v271 = vpop.f32.mrf.mxu0
      %272 = vdwg.mxu0
      %vm273 = vcmask 130048
      %v274 = vsel %vm273, %v267, -inf
      %275 = vmax.xlane.f32.xlu0 %v274
      %v276 = vpop.xlane.xlu0 %275
      %v277 = vsel %vm273, %v270, -inf
      %278 = vmax.xlane.f32.xlu0 %v277
      %v279 = vpop.xlane.xlu0 %278
      %v280 = vsub.f32 %v267, %v276
      %v281 = vsub.f32 %v270, %v279
      %v282 = vmul.f32 %v280, 1.442695
      %v283 = vpow.pop %v282
      %v284 = vmul.f32 %v281, 1.442695
      %v285 = vpow.pop %v284
      %v286 = vsel %vm273, %v283, 0.0
      %287 = vadd.xlane.f32.xlu0 %v286
      %v288 = vpop.xlane.xlu0 %287
      %v289 = vsel %vm273, %v285, 0.0
      %290 = vadd.xlane.f32.xlu0 %v289
      %v291 = vpop.xlane.xlu0 %290
      %v292 = vrcp.pop %v288
      %v293 = vrcp.pop %v291
      %v294 = vmul.f32 %v283, %v292
      %v295 = vmul.f32 %v285, %v293
      %v296 = vpack.c.bf16 %v295, %v294
      %v299 = vunpack.c.l.b16 %v213
      %v300 = vunpack.c.l.b16 %v214
      %v301 = vpack.c.b16 %v300, %v299
      %v304 = vsel %vm273, %v296, 0
      %306 = vmatprep.subr.bf16.mxu0 0
      %307 = vmatpush1.bf16.msra.mxu0 0
      %308 = vmatprep.subr.bf16.mxu0 0
      %309 = vmatpush1.bf16.msra.mxu0 0
      %310 = vmatprep.subr.bf16.mxu0 0
      %311 = vmatpush1.bf16.msra.mxu0 0
      %312 = vmatprep.subr.bf16.mxu0 0
      %313 = vmatpush1.bf16.msra.mxu0 0
      %314 = vmatprep.subr.bf16.mxu0 0
      %315 = vmatpush1.bf16.msra.mxu0 0
      %316 = vmatprep.subr.bf16.mxu0 0
      %317 = vmatpush1.bf16.msra.mxu0 0
      %318 = vmatprep.subr.bf16.mxu0 0
      %319 = vmatpush1.bf16.msra.mxu0 0
      %320 = vmatprep.subr.bf16.mxu0 0
      %321 = vmatpush1.bf16.msra.mxu0 %v301
      %322 = vmatprep.subr.bf16.mxu0 0
      %323 = vmatpush2.bf16.msra.mxu0 0
      %324 = vmatprep.subr.bf16.mxu0 0
      %325 = vmatpush2.bf16.msra.mxu0 0
      %326 = vmatprep.subr.bf16.mxu0 0
      %327 = vmatpush2.bf16.msra.mxu0 0
      %328 = vmatprep.subr.bf16.mxu0 0
      %329 = vmatpush2.bf16.msra.mxu0 0
      %330 = vmatprep.subr.bf16.mxu0 0
      %331 = vmatpush2.bf16.msra.mxu0 0
      %332 = vmatprep.subr.bf16.mxu0 0
      %333 = vmatpush2.bf16.msra.mxu0 0
      %334 = vmatprep.subr.bf16.mxu0 0
      %335 = vmatpush2.bf16.msra.mxu0 0
      %336 = vmatprep.subr.bf16.mxu0 0
      %337 = vmatpush2.bf16.msra.mxu0 0
      %338 = vmatprep.mubr.bf16.mxu0 0
      %339 = vmatmul.mubr.bf16.gmra.mxu0 %v304
      %v340 = vpop.f32.mrf.mxu0
      %v341 = vadd.f32 0.0, %v340
      %v342 = vpop.f32.mrf.mxu0
      %v343 = vpop.f32.mrf.mxu0
      %v344 = vadd.f32 0.0, %v343
      %v345 = vpop.f32.mrf.mxu0
      %346 = vdwg.mxu0
      %347 = vst.msk [vmem:[#allocation2] sm:$0xff] %vm225, %v341
      %348 = vst.msk [vmem:[#allocation2 + $0x20] sm:$0xff] %vm225, %v344
      %v349 = vld [vmem:[%s190] sm:$0xf]
      %v350 = vld [vmem:[%s190 + $0x30] sm:$0xf]
      %v351 = vld [vmem:[%s196 + $0x10] sm:$0xf]
      %v352 = vld [vmem:[%s196 + $0x40] sm:$0xf]
      %v353 = vld [vmem:[%s196 + $0x20] sm:$0xf]
      %v354 = vld [vmem:[%s196 + $0x50] sm:$0xf]
      %v357 = vunpack.c.l.b16 %v349
      %v358 = vunpack.c.l.b16 %v350
      %v359 = vpack.c.b16 %v358, %v357
      %360 = vrot.lane.b32.xlu0 %v359, 64
      %v361 = vpop.permute.xlu0 %360
      %v364 = vunpack.c.l.b16 %v351
      %v365 = vunpack.c.l.b16 %v352
      %v366 = vpack.c.b16 %v365, %v364
      %367 = vrot.lane.b32.xlu0 %v366, 64
      %v368 = vpop.permute.xlu0 %367
      %v370 = vsel %vm225, %v361, 0
      %v373 = vsel %vm225, %v368, 0
      %375 = vmatprep.subr.bf16.mxu0 0
      %376 = vmatpush1.bf16.xpose.msra.mxu0 0
      %377 = vmatprep.subr.bf16.mxu0 0
      %378 = vmatpush1.bf16.xpose.msra.mxu0 0
      %379 = vmatprep.subr.bf16.mxu0 0
      %380 = vmatpush1.bf16.xpose.msra.mxu0 0
      %381 = vmatprep.subr.bf16.mxu0 0
      %382 = vmatpush1.bf16.xpose.msra.mxu0 0
      %383 = vmatprep.subr.bf16.mxu0 0
      %384 = vmatpush1.bf16.xpose.msra.mxu0 0
      %385 = vmatprep.subr.bf16.mxu0 0
      %386 = vmatpush1.bf16.xpose.msra.mxu0 0
      %387 = vmatprep.subr.bf16.mxu0 0
      %388 = vmatpush1.bf16.xpose.msra.mxu0 0
      %389 = vmatprep.subr.bf16.mxu0 0
      %390 = vmatpush1.bf16.xpose.msra.mxu0 %v373
      %391 = vmatprep.subr.bf16.mxu0 0
      %392 = vmatpush2.bf16.xpose.msra.mxu0 0
      %393 = vmatprep.subr.bf16.mxu0 0
      %394 = vmatpush2.bf16.xpose.msra.mxu0 0
      %395 = vmatprep.subr.bf16.mxu0 0
      %396 = vmatpush2.bf16.xpose.msra.mxu0 0
      %397 = vmatprep.subr.bf16.mxu0 0
      %398 = vmatpush2.bf16.xpose.msra.mxu0 0
      %399 = vmatprep.subr.bf16.mxu0 0
      %400 = vmatpush2.bf16.xpose.msra.mxu0 0
      %401 = vmatprep.subr.bf16.mxu0 0
      %402 = vmatpush2.bf16.xpose.msra.mxu0 0
      %403 = vmatprep.subr.bf16.mxu0 0
      %404 = vmatpush2.bf16.xpose.msra.mxu0 0
      %405 = vmatprep.subr.bf16.mxu0 0
      %406 = vmatpush2.bf16.xpose.msra.mxu0 0
      %407 = vmatprep.mubr.bf16.mxu0 0
      %408 = vmatmul.mubr.bf16.gmra.mxu0 %v370
      %v409 = vpop.f32.mrf.mxu0
      %v410 = vadd.f32 0.0, %v409
      %v411 = vpop.f32.mrf.mxu0
      %v412 = vpop.f32.mrf.mxu0
      %v413 = vadd.f32 0.0, %v412
      %v414 = vpop.f32.mrf.mxu0
      %415 = vdwg.mxu0
      %v416 = vsel %vm273, %v410, -inf
      %417 = vmax.xlane.f32.xlu0 %v416
      %v418 = vpop.xlane.xlu0 %417
      %v419 = vsel %vm273, %v413, -inf
      %420 = vmax.xlane.f32.xlu0 %v419
      %v421 = vpop.xlane.xlu0 %420
      %v422 = vsub.f32 %v410, %v418
      %v423 = vsub.f32 %v413, %v421
      %v424 = vmul.f32 %v422, 1.442695
      %v425 = vpow.pop %v424
      %v426 = vmul.f32 %v423, 1.442695
      %v427 = vpow.pop %v426
      %v428 = vsel %vm273, %v425, 0.0
      %429 = vadd.xlane.f32.xlu0 %v428
      %v430 = vpop.xlane.xlu0 %429
      %v431 = vsel %vm273, %v427, 0.0
      %432 = vadd.xlane.f32.xlu0 %v431
      %v433 = vpop.xlane.xlu0 %432
      %v434 = vrcp.pop %v430
      %v435 = vrcp.pop %v433
      %v436 = vmul.f32 %v425, %v434
      %v437 = vmul.f32 %v427, %v435
      %v438 = vpack.c.bf16 %v437, %v436
      %v441 = vunpack.c.l.b16 %v353
      %v442 = vunpack.c.l.b16 %v354
      %v443 = vpack.c.b16 %v442, %v441
      %444 = vrot.lane.b32.xlu0 %v443, 64
      %v445 = vpop.permute.xlu0 %444
      %v448 = vsel %vm273, %v438, 0
      %450 = vmatprep.subr.bf16.mxu0 0
      %451 = vmatpush1.bf16.msra.mxu0 0
      %452 = vmatprep.subr.bf16.mxu0 0
      %453 = vmatpush1.bf16.msra.mxu0 0
      %454 = vmatprep.subr.bf16.mxu0 0
      %455 = vmatpush1.bf16.msra.mxu0 0
      %456 = vmatprep.subr.bf16.mxu0 0
      %457 = vmatpush1.bf16.msra.mxu0 0
      %458 = vmatprep.subr.bf16.mxu0 0
      %459 = vmatpush1.bf16.msra.mxu0 0
      %460 = vmatprep.subr.bf16.mxu0 0
      %461 = vmatpush1.bf16.msra.mxu0 0
      %462 = vmatprep.subr.bf16.mxu0 0
      %463 = vmatpush1.bf16.msra.mxu0 0
      %464 = vmatprep.subr.bf16.mxu0 0
      %465 = vmatpush1.bf16.msra.mxu0 %v445
      %466 = vmatprep.subr.bf16.mxu0 0
      %467 = vmatpush2.bf16.msra.mxu0 0
      %468 = vmatprep.subr.bf16.mxu0 0
      %469 = vmatpush2.bf16.msra.mxu0 0
      %470 = vmatprep.subr.bf16.mxu0 0
      %471 = vmatpush2.bf16.msra.mxu0 0
      %472 = vmatprep.subr.bf16.mxu0 0
      %473 = vmatpush2.bf16.msra.mxu0 0
      %474 = vmatprep.subr.bf16.mxu0 0
      %475 = vmatpush2.bf16.msra.mxu0 0
      %476 = vmatprep.subr.bf16.mxu0 0
      %477 = vmatpush2.bf16.msra.mxu0 0
      %478 = vmatprep.subr.bf16.mxu0 0
      %479 = vmatpush2.bf16.msra.mxu0 0
      %480 = vmatprep.subr.bf16.mxu0 0
      %481 = vmatpush2.bf16.msra.mxu0 0
      %482 = vmatprep.mubr.bf16.mxu0 0
      %483 = vmatmul.mubr.bf16.gmra.mxu0 %v448
      %v484 = vpop.f32.mrf.mxu0
      %v485 = vadd.f32 0.0, %v484
      %v486 = vpop.f32.mrf.mxu0
      %v487 = vpop.f32.mrf.mxu0
      %v488 = vadd.f32 0.0, %v487
      %v489 = vpop.f32.mrf.mxu0
      %490 = vdwg.mxu0
      %493 = vrot.lane.b32.xlu0 %v485, 64
      %v494 = vpop.permute.xlu0 %493
      %495 = vrot.lane.b32.xlu0 %v488, 64
      %v496 = vpop.permute.xlu0 %495
      %vm499 = vcmask 1048064
      %500 = vst.msk [vmem:[#allocation2] sm:$0xff] %vm499, %v494
      %501 = vst.msk [vmem:[#allocation2 + $0x20] sm:$0xff] %vm499, %v496
      %v502 = vld [vmem:[%s190 + $0x4] sm:$0xf]
      %v503 = vld [vmem:[%s190 + $0x34] sm:$0xf]
      %v504 = vld [vmem:[%s196 + $0x14] sm:$0xf]
      %v505 = vld [vmem:[%s196 + $0x44] sm:$0xf]
      %v506 = vld [vmem:[%s196 + $0x24] sm:$0xf]
      %v507 = vld [vmem:[%s196 + $0x54] sm:$0xf]
      %v510 = vunpack.c.l.b16 %v502
      %v511 = vunpack.c.l.b16 %v503
      %v512 = vpack.c.b16 %v511, %v510
      %v515 = vunpack.c.l.b16 %v504
      %v516 = vunpack.c.l.b16 %v505
      %v517 = vpack.c.b16 %v516, %v515
      %v519 = vsel %vm225, %v512, 0
      %v522 = vsel %vm225, %v517, 0
      %524 = vmatprep.subr.bf16.mxu0 0
      %525 = vmatpush1.bf16.xpose.msra.mxu0 0
      %526 = vmatprep.subr.bf16.mxu0 0
      %527 = vmatpush1.bf16.xpose.msra.mxu0 0
      %528 = vmatprep.subr.bf16.mxu0 0
      %529 = vmatpush1.bf16.xpose.msra.mxu0 0
      %530 = vmatprep.subr.bf16.mxu0 0
      %531 = vmatpush1.bf16.xpose.msra.mxu0 0
      %532 = vmatprep.subr.bf16.mxu0 0
      %533 = vmatpush1.bf16.xpose.msra.mxu0 0
      %534 = vmatprep.subr.bf16.mxu0 0
      %535 = vmatpush1.bf16.xpose.msra.mxu0 0
      %536 = vmatprep.subr.bf16.mxu0 0
      %537 = vmatpush1.bf16.xpose.msra.mxu0 0
      %538 = vmatprep.subr.bf16.mxu0 0
      %539 = vmatpush1.bf16.xpose.msra.mxu0 %v522
      %540 = vmatprep.subr.bf16.mxu0 0
      %541 = vmatpush2.bf16.xpose.msra.mxu0 0
      %542 = vmatprep.subr.bf16.mxu0 0
      %543 = vmatpush2.bf16.xpose.msra.mxu0 0
      %544 = vmatprep.subr.bf16.mxu0 0
      %545 = vmatpush2.bf16.xpose.msra.mxu0 0
      %546 = vmatprep.subr.bf16.mxu0 0
      %547 = vmatpush2.bf16.xpose.msra.mxu0 0
      %548 = vmatprep.subr.bf16.mxu0 0
      %549 = vmatpush2.bf16.xpose.msra.mxu0 0
      %550 = vmatprep.subr.bf16.mxu0 0
      %551 = vmatpush2.bf16.xpose.msra.mxu0 0
      %552 = vmatprep.subr.bf16.mxu0 0
      %553 = vmatpush2.bf16.xpose.msra.mxu0 0
      %554 = vmatprep.subr.bf16.mxu0 0
      %555 = vmatpush2.bf16.xpose.msra.mxu0 0
      %556 = vmatprep.mubr.bf16.mxu0 0
      %557 = vmatmul.mubr.bf16.gmra.mxu0 %v519
      %v558 = vpop.f32.mrf.mxu0
      %v559 = vadd.f32 0.0, %v558
      %v560 = vpop.f32.mrf.mxu0
      %v561 = vpop.f32.mrf.mxu0
      %v562 = vadd.f32 0.0, %v561
      %v563 = vpop.f32.mrf.mxu0
      %564 = vdwg.mxu0
      %v565 = vsel %vm273, %v559, -inf
      %566 = vmax.xlane.f32.xlu0 %v565
      %v567 = vpop.xlane.xlu0 %566
      %v568 = vsel %vm273, %v562, -inf
      %569 = vmax.xlane.f32.xlu0 %v568
      %v570 = vpop.xlane.xlu0 %569
      %v571 = vsub.f32 %v559, %v567
      %v572 = vsub.f32 %v562, %v570
      %v573 = vmul.f32 %v571, 1.442695
      %v574 = vpow.pop %v573
      %v575 = vmul.f32 %v572, 1.442695
      %v576 = vpow.pop %v575
      %v577 = vsel %vm273, %v574, 0.0
      %578 = vadd.xlane.f32.xlu0 %v577
      %v579 = vpop.xlane.xlu0 %578
      %v580 = vsel %vm273, %v576, 0.0
      %581 = vadd.xlane.f32.xlu0 %v580
      %v582 = vpop.xlane.xlu0 %581
      %v583 = vrcp.pop %v579
      %v584 = vrcp.pop %v582
      %v585 = vmul.f32 %v574, %v583
      %v586 = vmul.f32 %v576, %v584
      %v587 = vpack.c.bf16 %v586, %v585
      %v590 = vunpack.c.l.b16 %v506
      %v591 = vunpack.c.l.b16 %v507
      %v592 = vpack.c.b16 %v591, %v590
      %v595 = vsel %vm273, %v587, 0
      %597 = vmatprep.subr.bf16.mxu0 0
      %598 = vmatpush1.bf16.msra.mxu0 0
      %599 = vmatprep.subr.bf16.mxu0 0
      %600 = vmatpush1.bf16.msra.mxu0 0
      %601 = vmatprep.subr.bf16.mxu0 0
      %602 = vmatpush1.bf16.msra.mxu0 0
      %603 = vmatprep.subr.bf16.mxu0 0
      %604 = vmatpush1.bf16.msra.mxu0 0
      %605 = vmatprep.subr.bf16.mxu0 0
      %606 = vmatpush1.bf16.msra.mxu0 0
      %607 = vmatprep.subr.bf16.mxu0 0
      %608 = vmatpush1.bf16.msra.mxu0 0
      %609 = vmatprep.subr.bf16.mxu0 0
      %610 = vmatpush1.bf16.msra.mxu0 0
      %611 = vmatprep.subr.bf16.mxu0 0
      %612 = vmatpush1.bf16.msra.mxu0 %v592
      %613 = vmatprep.subr.bf16.mxu0 0
      %614 = vmatpush2.bf16.msra.mxu0 0
      %615 = vmatprep.subr.bf16.mxu0 0
      %616 = vmatpush2.bf16.msra.mxu0 0
      %617 = vmatprep.subr.bf16.mxu0 0
      %618 = vmatpush2.bf16.msra.mxu0 0
      %619 = vmatprep.subr.bf16.mxu0 0
      %620 = vmatpush2.bf16.msra.mxu0 0
      %621 = vmatprep.subr.bf16.mxu0 0
      %622 = vmatpush2.bf16.msra.mxu0 0
      %623 = vmatprep.subr.bf16.mxu0 0
      %624 = vmatpush2.bf16.msra.mxu0 0
      %625 = vmatprep.subr.bf16.mxu0 0
      %626 = vmatpush2.bf16.msra.mxu0 0
      %627 = vmatprep.subr.bf16.mxu0 0
      %628 = vmatpush2.bf16.msra.mxu0 0
      %629 = vmatprep.mubr.bf16.mxu0 0
      %630 = vmatmul.mubr.bf16.gmra.mxu0 %v595
      %v631 = vpop.f32.mrf.mxu0
      %v632 = vadd.f32 0.0, %v631
      %v633 = vpop.f32.mrf.mxu0
      %v634 = vpop.f32.mrf.mxu0
      %v635 = vadd.f32 0.0, %v634
      %v636 = vpop.f32.mrf.mxu0
      %637 = vdwg.mxu0
      %638 = vst.msk [vmem:[#allocation2 + $0x8] sm:$0xff] %vm225, %v632
      %639 = vst.msk [vmem:[#allocation2 + $0x28] sm:$0xff] %vm225, %v635
      %v640 = vld [vmem:[%s190 + $0x4] sm:$0xf]
      %v641 = vld [vmem:[%s190 + $0x34] sm:$0xf]
      %v642 = vld [vmem:[%s196 + $0x14] sm:$0xf]
      %v643 = vld [vmem:[%s196 + $0x44] sm:$0xf]
      %v644 = vld [vmem:[%s196 + $0x24] sm:$0xf]
      %v645 = vld [vmem:[%s196 + $0x54] sm:$0xf]
      %v648 = vunpack.c.l.b16 %v640
      %v649 = vunpack.c.l.b16 %v641
      %v650 = vpack.c.b16 %v649, %v648
      %651 = vrot.lane.b32.xlu0 %v650, 64
      %v652 = vpop.permute.xlu0 %651
      %v655 = vunpack.c.l.b16 %v642
      %v656 = vunpack.c.l.b16 %v643
      %v657 = vpack.c.b16 %v656, %v655
      %658 = vrot.lane.b32.xlu0 %v657, 64
      %v659 = vpop.permute.xlu0 %658
      %v661 = vsel %vm225, %v652, 0
      %v664 = vsel %vm225, %v659, 0
      %666 = vmatprep.subr.bf16.mxu0 0
      %667 = vmatpush1.bf16.xpose.msra.mxu0 0
      %668 = vmatprep.subr.bf16.mxu0 0
      %669 = vmatpush1.bf16.xpose.msra.mxu0 0
      %670 = vmatprep.subr.bf16.mxu0 0
      %671 = vmatpush1.bf16.xpose.msra.mxu0 0
      %672 = vmatprep.subr.bf16.mxu0 0
      %673 = vmatpush1.bf16.xpose.msra.mxu0 0
      %674 = vmatprep.subr.bf16.mxu0 0
      %675 = vmatpush1.bf16.xpose.msra.mxu0 0
      %676 = vmatprep.subr.bf16.mxu0 0
      %677 = vmatpush1.bf16.xpose.msra.mxu0 0
      %678 = vmatprep.subr.bf16.mxu0 0
      %679 = vmatpush1.bf16.xpose.msra.mxu0 0
      %680 = vmatprep.subr.bf16.mxu0 0
      %681 = vmatpush1.bf16.xpose.msra.mxu0 %v664
      %682 = vmatprep.subr.bf16.mxu0 0
      %683 = vmatpush2.bf16.xpose.msra.mxu0 0
      %684 = vmatprep.subr.bf16.mxu0 0
      %685 = vmatpush2.bf16.xpose.msra.mxu0 0
      %686 = vmatprep.subr.bf16.mxu0 0
      %687 = vmatpush2.bf16.xpose.msra.mxu0 0
      %688 = vmatprep.subr.bf16.mxu0 0
      %689 = vmatpush2.bf16.xpose.msra.mxu0 0
      %690 = vmatprep.subr.bf16.mxu0 0
      %691 = vmatpush2.bf16.xpose.msra.mxu0 0
      %692 = vmatprep.subr.bf16.mxu0 0
      %693 = vmatpush2.bf16.xpose.msra.mxu0 0
      %694 = vmatprep.subr.bf16.mxu0 0
      %695 = vmatpush2.bf16.xpose.msra.mxu0 0
      %696 = vmatprep.subr.bf16.mxu0 0
      %697 = vmatpush2.bf16.xpose.msra.mxu0 0
      %698 = vmatprep.mubr.bf16.mxu0 0
      %699 = vmatmul.mubr.bf16.gmra.mxu0 %v661
      %v700 = vpop.f32.mrf.mxu0
      %v701 = vadd.f32 0.0, %v700
      %v702 = vpop.f32.mrf.mxu0
      %v703 = vpop.f32.mrf.mxu0
      %v704 = vadd.f32 0.0, %v703
      %v705 = vpop.f32.mrf.mxu0
      %706 = vdwg.mxu0
      %v707 = vsel %vm273, %v701, -inf
      %708 = vmax.xlane.f32.xlu0 %v707
      %v709 = vpop.xlane.xlu0 %708
      %v710 = vsel %vm273, %v704, -inf
      %711 = vmax.xlane.f32.xlu0 %v710
      %v712 = vpop.xlane.xlu0 %711
      %v713 = vsub.f32 %v701, %v709
      %v714 = vsub.f32 %v704, %v712
      %v715 = vmul.f32 %v713, 1.442695
      %v716 = vpow.pop %v715
      %v717 = vmul.f32 %v714, 1.442695
      %v718 = vpow.pop %v717
      %v719 = vsel %vm273, %v716, 0.0
      %720 = vadd.xlane.f32.xlu0 %v719
      %v721 = vpop.xlane.xlu0 %720
      %v722 = vsel %vm273, %v718, 0.0
      %723 = vadd.xlane.f32.xlu0 %v722
      %v724 = vpop.xlane.xlu0 %723
      %v725 = vrcp.pop %v721
      %v726 = vrcp.pop %v724
      %v727 = vmul.f32 %v716, %v725
      %v728 = vmul.f32 %v718, %v726
      %v729 = vpack.c.bf16 %v728, %v727
      %v732 = vunpack.c.l.b16 %v644
      %v733 = vunpack.c.l.b16 %v645
      %v734 = vpack.c.b16 %v733, %v732
      %735 = vrot.lane.b32.xlu0 %v734, 64
      %v736 = vpop.permute.xlu0 %735
      %v739 = vsel %vm273, %v729, 0
      %741 = vmatprep.subr.bf16.mxu0 0
      %742 = vmatpush1.bf16.msra.mxu0 0
      %743 = vmatprep.subr.bf16.mxu0 0
      %744 = vmatpush1.bf16.msra.mxu0 0
      %745 = vmatprep.subr.bf16.mxu0 0
      %746 = vmatpush1.bf16.msra.mxu0 0
      %747 = vmatprep.subr.bf16.mxu0 0
      %748 = vmatpush1.bf16.msra.mxu0 0
      %749 = vmatprep.subr.bf16.mxu0 0
      %750 = vmatpush1.bf16.msra.mxu0 0
      %751 = vmatprep.subr.bf16.mxu0 0
      %752 = vmatpush1.bf16.msra.mxu0 0
      %753 = vmatprep.subr.bf16.mxu0 0
      %754 = vmatpush1.bf16.msra.mxu0 0
      %755 = vmatprep.subr.bf16.mxu0 0
      %756 = vmatpush1.bf16.msra.mxu0 %v736
      %757 = vmatprep.subr.bf16.mxu0 0
      %758 = vmatpush2.bf16.msra.mxu0 0
      %759 = vmatprep.subr.bf16.mxu0 0
      %760 = vmatpush2.bf16.msra.mxu0 0
      %761 = vmatprep.subr.bf16.mxu0 0
      %762 = vmatpush2.bf16.msra.mxu0 0
      %763 = vmatprep.subr.bf16.mxu0 0
      %764 = vmatpush2.bf16.msra.mxu0 0
      %765 = vmatprep.subr.bf16.mxu0 0
      %766 = vmatpush2.bf16.msra.mxu0 0
      %767 = vmatprep.subr.bf16.mxu0 0
      %768 = vmatpush2.bf16.msra.mxu0 0
      %769 = vmatprep.subr.bf16.mxu0 0
      %770 = vmatpush2.bf16.msra.mxu0 0
      %771 = vmatprep.subr.bf16.mxu0 0
      %772 = vmatpush2.bf16.msra.mxu0 0
      %773 = vmatprep.mubr.bf16.mxu0 0
      %774 = vmatmul.mubr.bf16.gmra.mxu0 %v739
      %v775 = vpop.f32.mrf.mxu0
      %v776 = vadd.f32 0.0, %v775
      %v777 = vpop.f32.mrf.mxu0
      %v778 = vpop.f32.mrf.mxu0
      %v779 = vadd.f32 0.0, %v778
      %v780 = vpop.f32.mrf.mxu0
      %781 = vdwg.mxu0
      %784 = vrot.lane.b32.xlu0 %v776, 64
      %v785 = vpop.permute.xlu0 %784
      %786 = vrot.lane.b32.xlu0 %v779, 64
      %v787 = vpop.permute.xlu0 %786
      %790 = vst.msk [vmem:[#allocation2 + $0x8] sm:$0xff] %vm499, %v785
      %791 = vst.msk [vmem:[#allocation2 + $0x28] sm:$0xff] %vm499, %v787
      %v792 = vld [vmem:[%s190 + $0x8] sm:$0xf]
      %v793 = vld [vmem:[%s190 + $0x38] sm:$0xf]
      %v794 = vld [vmem:[%s196 + $0x18] sm:$0xf]
      %v795 = vld [vmem:[%s196 + $0x48] sm:$0xf]
      %v796 = vld [vmem:[%s196 + $0x28] sm:$0xf]
      %v797 = vld [vmem:[%s196 + $0x58] sm:$0xf]
      %v800 = vunpack.c.l.b16 %v792
      %v801 = vunpack.c.l.b16 %v793
      %v802 = vpack.c.b16 %v801, %v800
      %v805 = vunpack.c.l.b16 %v794
      %v806 = vunpack.c.l.b16 %v795
      %v807 = vpack.c.b16 %v806, %v805
      %v809 = vsel %vm225, %v802, 0
      %v812 = vsel %vm225, %v807, 0
      %814 = vmatprep.subr.bf16.mxu0 0
      %815 = vmatpush1.bf16.xpose.msra.mxu0 0
      %816 = vmatprep.subr.bf16.mxu0 0
      %817 = vmatpush1.bf16.xpose.msra.mxu0 0
      %818 = vmatprep.subr.bf16.mxu0 0
      %819 = vmatpush1.bf16.xpose.msra.mxu0 0
      %820 = vmatprep.subr.bf16.mxu0 0
      %821 = vmatpush1.bf16.xpose.msra.mxu0 0
      %822 = vmatprep.subr.bf16.mxu0 0
      %823 = vmatpush1.bf16.xpose.msra.mxu0 0
      %824 = vmatprep.subr.bf16.mxu0 0
      %825 = vmatpush1.bf16.xpose.msra.mxu0 0
      %826 = vmatprep.subr.bf16.mxu0 0
      %827 = vmatpush1.bf16.xpose.msra.mxu0 0
      %828 = vmatprep.subr.bf16.mxu0 0
      %829 = vmatpush1.bf16.xpose.msra.mxu0 %v812
      %830 = vmatprep.subr.bf16.mxu0 0
      %831 = vmatpush2.bf16.xpose.msra.mxu0 0
      %832 = vmatprep.subr.bf16.mxu0 0
      %833 = vmatpush2.bf16.xpose.msra.mxu0 0
      %834 = vmatprep.subr.bf16.mxu0 0
      %835 = vmatpush2.bf16.xpose.msra.mxu0 0
      %836 = vmatprep.subr.bf16.mxu0 0
      %837 = vmatpush2.bf16.xpose.msra.mxu0 0
      %838 = vmatprep.subr.bf16.mxu0 0
      %839 = vmatpush2.bf16.xpose.msra.mxu0 0
      %840 = vmatprep.subr.bf16.mxu0 0
      %841 = vmatpush2.bf16.xpose.msra.mxu0 0
      %842 = vmatprep.subr.bf16.mxu0 0
      %843 = vmatpush2.bf16.xpose.msra.mxu0 0
      %844 = vmatprep.subr.bf16.mxu0 0
      %845 = vmatpush2.bf16.xpose.msra.mxu0 0
      %846 = vmatprep.mubr.bf16.mxu0 0
      %847 = vmatmul.mubr.bf16.gmra.mxu0 %v809
      %v848 = vpop.f32.mrf.mxu0
      %v849 = vadd.f32 0.0, %v848
      %v850 = vpop.f32.mrf.mxu0
      %v851 = vpop.f32.mrf.mxu0
      %v852 = vadd.f32 0.0, %v851
      %v853 = vpop.f32.mrf.mxu0
      %854 = vdwg.mxu0
      %v855 = vsel %vm273, %v849, -inf
      %856 = vmax.xlane.f32.xlu0 %v855
      %v857 = vpop.xlane.xlu0 %856
      %v858 = vsel %vm273, %v852, -inf
      %859 = vmax.xlane.f32.xlu0 %v858
      %v860 = vpop.xlane.xlu0 %859
      %v861 = vsub.f32 %v849, %v857
      %v862 = vsub.f32 %v852, %v860
      %v863 = vmul.f32 %v861, 1.442695
      %v864 = vpow.pop %v863
      %v865 = vmul.f32 %v862, 1.442695
      %v866 = vpow.pop %v865
      %v867 = vsel %vm273, %v864, 0.0
      %868 = vadd.xlane.f32.xlu0 %v867
      %v869 = vpop.xlane.xlu0 %868
      %v870 = vsel %vm273, %v866, 0.0
      %871 = vadd.xlane.f32.xlu0 %v870
      %v872 = vpop.xlane.xlu0 %871
      %v873 = vrcp.pop %v869
      %v874 = vrcp.pop %v872
      %v875 = vmul.f32 %v864, %v873
      %v876 = vmul.f32 %v866, %v874
      %v877 = vpack.c.bf16 %v876, %v875
      %v880 = vunpack.c.l.b16 %v796
      %v881 = vunpack.c.l.b16 %v797
      %v882 = vpack.c.b16 %v881, %v880
      %v885 = vsel %vm273, %v877, 0
      %887 = vmatprep.subr.bf16.mxu0 0
      %888 = vmatpush1.bf16.msra.mxu0 0
      %889 = vmatprep.subr.bf16.mxu0 0
      %890 = vmatpush1.bf16.msra.mxu0 0
      %891 = vmatprep.subr.bf16.mxu0 0
      %892 = vmatpush1.bf16.msra.mxu0 0
      %893 = vmatprep.subr.bf16.mxu0 0
      %894 = vmatpush1.bf16.msra.mxu0 0
      %895 = vmatprep.subr.bf16.mxu0 0
      %896 = vmatpush1.bf16.msra.mxu0 0
      %897 = vmatprep.subr.bf16.mxu0 0
      %898 = vmatpush1.bf16.msra.mxu0 0
      %899 = vmatprep.subr.bf16.mxu0 0
      %900 = vmatpush1.bf16.msra.mxu0 0
      %901 = vmatprep.subr.bf16.mxu0 0
      %902 = vmatpush1.bf16.msra.mxu0 %v882
      %903 = vmatprep.subr.bf16.mxu0 0
      %904 = vmatpush2.bf16.msra.mxu0 0
      %905 = vmatprep.subr.bf16.mxu0 0
      %906 = vmatpush2.bf16.msra.mxu0 0
      %907 = vmatprep.subr.bf16.mxu0 0
      %908 = vmatpush2.bf16.msra.mxu0 0
      %909 = vmatprep.subr.bf16.mxu0 0
      %910 = vmatpush2.bf16.msra.mxu0 0
      %911 = vmatprep.subr.bf16.mxu0 0
      %912 = vmatpush2.bf16.msra.mxu0 0
      %913 = vmatprep.subr.bf16.mxu0 0
      %914 = vmatpush2.bf16.msra.mxu0 0
      %915 = vmatprep.subr.bf16.mxu0 0
      %916 = vmatpush2.bf16.msra.mxu0 0
      %917 = vmatprep.subr.bf16.mxu0 0
      %918 = vmatpush2.bf16.msra.mxu0 0
      %919 = vmatprep.mubr.bf16.mxu0 0
      %920 = vmatmul.mubr.bf16.gmra.mxu0 %v885
      %v921 = vpop.f32.mrf.mxu0
      %v922 = vadd.f32 0.0, %v921
      %v923 = vpop.f32.mrf.mxu0
      %v924 = vpop.f32.mrf.mxu0
      %v925 = vadd.f32 0.0, %v924
      %v926 = vpop.f32.mrf.mxu0
      %927 = vdwg.mxu0
      %928 = vst.msk [vmem:[#allocation2 + $0x10] sm:$0xff] %vm225, %v922
      %929 = vst.msk [vmem:[#allocation2 + $0x30] sm:$0xff] %vm225, %v925
      %v930 = vld [vmem:[%s190 + $0x8] sm:$0xf]
      %v931 = vld [vmem:[%s190 + $0x38] sm:$0xf]
      %v932 = vld [vmem:[%s196 + $0x18] sm:$0xf]
      %v933 = vld [vmem:[%s196 + $0x48] sm:$0xf]
      %v934 = vld [vmem:[%s196 + $0x28] sm:$0xf]
      %v935 = vld [vmem:[%s196 + $0x58] sm:$0xf]
      %v938 = vunpack.c.l.b16 %v930
      %v939 = vunpack.c.l.b16 %v931
      %v940 = vpack.c.b16 %v939, %v938
      %941 = vrot.lane.b32.xlu0 %v940, 64
      %v942 = vpop.permute.xlu0 %941
      %v945 = vunpack.c.l.b16 %v932
      %v946 = vunpack.c.l.b16 %v933
      %v947 = vpack.c.b16 %v946, %v945
      %948 = vrot.lane.b32.xlu0 %v947, 64
      %v949 = vpop.permute.xlu0 %948
      %v951 = vsel %vm225, %v942, 0
      %v954 = vsel %vm225, %v949, 0
      %956 = vmatprep.subr.bf16.mxu0 0
      %957 = vmatpush1.bf16.xpose.msra.mxu0 0
      %958 = vmatprep.subr.bf16.mxu0 0
      %959 = vmatpush1.bf16.xpose.msra.mxu0 0
      %960 = vmatprep.subr.bf16.mxu0 0
      %961 = vmatpush1.bf16.xpose.msra.mxu0 0
      %962 = vmatprep.subr.bf16.mxu0 0
      %963 = vmatpush1.bf16.xpose.msra.mxu0 0
      %964 = vmatprep.subr.bf16.mxu0 0
      %965 = vmatpush1.bf16.xpose.msra.mxu0 0
      %966 = vmatprep.subr.bf16.mxu0 0
      %967 = vmatpush1.bf16.xpose.msra.mxu0 0
      %968 = vmatprep.subr.bf16.mxu0 0
      %969 = vmatpush1.bf16.xpose.msra.mxu0 0
      %970 = vmatprep.subr.bf16.mxu0 0
      %971 = vmatpush1.bf16.xpose.msra.mxu0 %v954
      %972 = vmatprep.subr.bf16.mxu0 0
      %973 = vmatpush2.bf16.xpose.msra.mxu0 0
      %974 = vmatprep.subr.bf16.mxu0 0
      %975 = vmatpush2.bf16.xpose.msra.mxu0 0
      %976 = vmatprep.subr.bf16.mxu0 0
      %977 = vmatpush2.bf16.xpose.msra.mxu0 0
      %978 = vmatprep.subr.bf16.mxu0 0
      %979 = vmatpush2.bf16.xpose.msra.mxu0 0
      %980 = vmatprep.subr.bf16.mxu0 0
      %981 = vmatpush2.bf16.xpose.msra.mxu0 0
      %982 = vmatprep.subr.bf16.mxu0 0
      %983 = vmatpush2.bf16.xpose.msra.mxu0 0
      %984 = vmatprep.subr.bf16.mxu0 0
      %985 = vmatpush2.bf16.xpose.msra.mxu0 0
      %986 = vmatprep.subr.bf16.mxu0 0
      %987 = vmatpush2.bf16.xpose.msra.mxu0 0
      %988 = vmatprep.mubr.bf16.mxu0 0
      %989 = vmatmul.mubr.bf16.gmra.mxu0 %v951
      %v990 = vpop.f32.mrf.mxu0
      %v991 = vadd.f32 0.0, %v990
      %v992 = vpop.f32.mrf.mxu0
      %v993 = vpop.f32.mrf.mxu0
      %v994 = vadd.f32 0.0, %v993
      %v995 = vpop.f32.mrf.mxu0
      %996 = vdwg.mxu0
      %v997 = vsel %vm273, %v991, -inf
      %998 = vmax.xlane.f32.xlu0 %v997
      %v999 = vpop.xlane.xlu0 %998
      %v1000 = vsel %vm273, %v994, -inf
      %1001 = vmax.xlane.f32.xlu0 %v1000
      %v1002 = vpop.xlane.xlu0 %1001
      %v1003 = vsub.f32 %v991, %v999
      %v1004 = vsub.f32 %v994, %v1002
      %v1005 = vmul.f32 %v1003, 1.442695
      %v1006 = vpow.pop %v1005
      %v1007 = vmul.f32 %v1004, 1.442695
      %v1008 = vpow.pop %v1007
      %v1009 = vsel %vm273, %v1006, 0.0
      %1010 = vadd.xlane.f32.xlu0 %v1009
      %v1011 = vpop.xlane.xlu0 %1010
      %v1012 = vsel %vm273, %v1008, 0.0
      %1013 = vadd.xlane.f32.xlu0 %v1012
      %v1014 = vpop.xlane.xlu0 %1013
      %v1015 = vrcp.pop %v1011
      %v1016 = vrcp.pop %v1014
      %v1017 = vmul.f32 %v1006, %v1015
      %v1018 = vmul.f32 %v1008, %v1016
      %v1019 = vpack.c.bf16 %v1018, %v1017
      %v1022 = vunpack.c.l.b16 %v934
      %v1023 = vunpack.c.l.b16 %v935
      %v1024 = vpack.c.b16 %v1023, %v1022
      %1025 = vrot.lane.b32.xlu0 %v1024, 64
      %v1026 = vpop.permute.xlu0 %1025
      %v1029 = vsel %vm273, %v1019, 0
      %1031 = vmatprep.subr.bf16.mxu0 0
      %1032 = vmatpush1.bf16.msra.mxu0 0
      %1033 = vmatprep.subr.bf16.mxu0 0
      %1034 = vmatpush1.bf16.msra.mxu0 0
      %1035 = vmatprep.subr.bf16.mxu0 0
      %1036 = vmatpush1.bf16.msra.mxu0 0
      %1037 = vmatprep.subr.bf16.mxu0 0
      %1038 = vmatpush1.bf16.msra.mxu0 0
      %1039 = vmatprep.subr.bf16.mxu0 0
      %1040 = vmatpush1.bf16.msra.mxu0 0
      %1041 = vmatprep.subr.bf16.mxu0 0
      %1042 = vmatpush1.bf16.msra.mxu0 0
      %1043 = vmatprep.subr.bf16.mxu0 0
      %1044 = vmatpush1.bf16.msra.mxu0 0
      %1045 = vmatprep.subr.bf16.mxu0 0
      %1046 = vmatpush1.bf16.msra.mxu0 %v1026
      %1047 = vmatprep.subr.bf16.mxu0 0
      %1048 = vmatpush2.bf16.msra.mxu0 0
      %1049 = vmatprep.subr.bf16.mxu0 0
      %1050 = vmatpush2.bf16.msra.mxu0 0
      %1051 = vmatprep.subr.bf16.mxu0 0
      %1052 = vmatpush2.bf16.msra.mxu0 0
      %1053 = vmatprep.subr.bf16.mxu0 0
      %1054 = vmatpush2.bf16.msra.mxu0 0
      %1055 = vmatprep.subr.bf16.mxu0 0
      %1056 = vmatpush2.bf16.msra.mxu0 0
      %1057 = vmatprep.subr.bf16.mxu0 0
      %1058 = vmatpush2.bf16.msra.mxu0 0
      %1059 = vmatprep.subr.bf16.mxu0 0
      %1060 = vmatpush2.bf16.msra.mxu0 0
      %1061 = vmatprep.subr.bf16.mxu0 0
      %1062 = vmatpush2.bf16.msra.mxu0 0
      %1063 = vmatprep.mubr.bf16.mxu0 0
      %1064 = vmatmul.mubr.bf16.gmra.mxu0 %v1029
      %v1065 = vpop.f32.mrf.mxu0
      %v1066 = vadd.f32 0.0, %v1065
      %v1067 = vpop.f32.mrf.mxu0
      %v1068 = vpop.f32.mrf.mxu0
      %v1069 = vadd.f32 0.0, %v1068
      %v1070 = vpop.f32.mrf.mxu0
      %1071 = vdwg.mxu0
      %1074 = vrot.lane.b32.xlu0 %v1066, 64
      %v1075 = vpop.permute.xlu0 %1074
      %1076 = vrot.lane.b32.xlu0 %v1069, 64
      %v1077 = vpop.permute.xlu0 %1076
      %1080 = vst.msk [vmem:[#allocation2 + $0x10] sm:$0xff] %vm499, %v1075
      %1081 = vst.msk [vmem:[#allocation2 + $0x30] sm:$0xff] %vm499, %v1077
      %v1082 = vld [vmem:[%s190 + $0xc] sm:$0xf]
      %v1083 = vld [vmem:[%s190 + $0x3c] sm:$0xf]
      %v1084 = vld [vmem:[%s196 + $0x1c] sm:$0xf]
      %v1085 = vld [vmem:[%s196 + $0x4c] sm:$0xf]
      %v1086 = vld [vmem:[%s196 + $0x2c] sm:$0xf]
      %v1087 = vld [vmem:[%s196 + $0x5c] sm:$0xf]
      %v1090 = vunpack.c.l.b16 %v1082
      %v1091 = vunpack.c.l.b16 %v1083
      %v1092 = vpack.c.b16 %v1091, %v1090
      %v1095 = vunpack.c.l.b16 %v1084
      %v1096 = vunpack.c.l.b16 %v1085
      %v1097 = vpack.c.b16 %v1096, %v1095
      %v1099 = vsel %vm225, %v1092, 0
      %v1102 = vsel %vm225, %v1097, 0
      %1104 = vmatprep.subr.bf16.mxu0 0
      %1105 = vmatpush1.bf16.xpose.msra.mxu0 0
      %1106 = vmatprep.subr.bf16.mxu0 0
      %1107 = vmatpush1.bf16.xpose.msra.mxu0 0
      %1108 = vmatprep.subr.bf16.mxu0 0
      %1109 = vmatpush1.bf16.xpose.msra.mxu0 0
      %1110 = vmatprep.subr.bf16.mxu0 0
      %1111 = vmatpush1.bf16.xpose.msra.mxu0 0
      %1112 = vmatprep.subr.bf16.mxu0 0
      %1113 = vmatpush1.bf16.xpose.msra.mxu0 0
      %1114 = vmatprep.subr.bf16.mxu0 0
      %1115 = vmatpush1.bf16.xpose.msra.mxu0 0
      %1116 = vmatprep.subr.bf16.mxu0 0
      %1117 = vmatpush1.bf16.xpose.msra.mxu0 0
      %1118 = vmatprep.subr.bf16.mxu0 0
      %1119 = vmatpush1.bf16.xpose.msra.mxu0 %v1102
      %1120 = vmatprep.subr.bf16.mxu0 0
      %1121 = vmatpush2.bf16.xpose.msra.mxu0 0
      %1122 = vmatprep.subr.bf16.mxu0 0
      %1123 = vmatpush2.bf16.xpose.msra.mxu0 0
      %1124 = vmatprep.subr.bf16.mxu0 0
      %1125 = vmatpush2.bf16.xpose.msra.mxu0 0
      %1126 = vmatprep.subr.bf16.mxu0 0
      %1127 = vmatpush2.bf16.xpose.msra.mxu0 0
      %1128 = vmatprep.subr.bf16.mxu0 0
      %1129 = vmatpush2.bf16.xpose.msra.mxu0 0
      %1130 = vmatprep.subr.bf16.mxu0 0
      %1131 = vmatpush2.bf16.xpose.msra.mxu0 0
      %1132 = vmatprep.subr.bf16.mxu0 0
      %1133 = vmatpush2.bf16.xpose.msra.mxu0 0
      %1134 = vmatprep.subr.bf16.mxu0 0
      %1135 = vmatpush2.bf16.xpose.msra.mxu0 0
      %1136 = vmatprep.mubr.bf16.mxu0 0
      %1137 = vmatmul.mubr.bf16.gmra.mxu0 %v1099
      %v1138 = vpop.f32.mrf.mxu0
      %v1139 = vadd.f32 0.0, %v1138
      %v1140 = vpop.f32.mrf.mxu0
      %v1141 = vpop.f32.mrf.mxu0
      %v1142 = vadd.f32 0.0, %v1141
      %v1143 = vpop.f32.mrf.mxu0
      %1144 = vdwg.mxu0
      %v1145 = vsel %vm273, %v1139, -inf
      %1146 = vmax.xlane.f32.xlu0 %v1145
      %v1147 = vpop.xlane.xlu0 %1146
      %v1148 = vsel %vm273, %v1142, -inf
      %1149 = vmax.xlane.f32.xlu0 %v1148
      %v1150 = vpop.xlane.xlu0 %1149
      %v1151 = vsub.f32 %v1139, %v1147
      %v1152 = vsub.f32 %v1142, %v1150
      %v1153 = vmul.f32 %v1151, 1.442695
      %v1154 = vpow.pop %v1153
      %v1155 = vmul.f32 %v1152, 1.442695
      %v1156 = vpow.pop %v1155
      %v1157 = vsel %vm273, %v1154, 0.0
      %1158 = vadd.xlane.f32.xlu0 %v1157
      %v1159 = vpop.xlane.xlu0 %1158
      %v1160 = vsel %vm273, %v1156, 0.0
      %1161 = vadd.xlane.f32.xlu0 %v1160
      %v1162 = vpop.xlane.xlu0 %1161
      %v1163 = vrcp.pop %v1159
      %v1164 = vrcp.pop %v1162
      %v1165 = vmul.f32 %v1154, %v1163
      %v1166 = vmul.f32 %v1156, %v1164
      %v1167 = vpack.c.bf16 %v1166, %v1165
      %v1170 = vunpack.c.l.b16 %v1086
      %v1171 = vunpack.c.l.b16 %v1087
      %v1172 = vpack.c.b16 %v1171, %v1170
      %v1175 = vsel %vm273, %v1167, 0
      %1177 = vmatprep.subr.bf16.mxu0 0
      %1178 = vmatpush1.bf16.msra.mxu0 0
      %1179 = vmatprep.subr.bf16.mxu0 0
      %1180 = vmatpush1.bf16.msra.mxu0 0
      %1181 = vmatprep.subr.bf16.mxu0 0
      %1182 = vmatpush1.bf16.msra.mxu0 0
      %1183 = vmatprep.subr.bf16.mxu0 0
      %1184 = vmatpush1.bf16.msra.mxu0 0
      %1185 = vmatprep.subr.bf16.mxu0 0
      %1186 = vmatpush1.bf16.msra.mxu0 0
      %1187 = vmatprep.subr.bf16.mxu0 0
      %1188 = vmatpush1.bf16.msra.mxu0 0
      %1189 = vmatprep.subr.bf16.mxu0 0
      %1190 = vmatpush1.bf16.msra.mxu0 0
      %1191 = vmatprep.subr.bf16.mxu0 0
      %1192 = vmatpush1.bf16.msra.mxu0 %v1172
      %1193 = vmatprep.subr.bf16.mxu0 0
      %1194 = vmatpush2.bf16.msra.mxu0 0
      %1195 = vmatprep.subr.bf16.mxu0 0
      %1196 = vmatpush2.bf16.msra.mxu0 0
      %1197 = vmatprep.subr.bf16.mxu0 0
      %1198 = vmatpush2.bf16.msra.mxu0 0
      %1199 = vmatprep.subr.bf16.mxu0 0
      %1200 = vmatpush2.bf16.msra.mxu0 0
      %1201 = vmatprep.subr.bf16.mxu0 0
      %1202 = vmatpush2.bf16.msra.mxu0 0
      %1203 = vmatprep.subr.bf16.mxu0 0
      %1204 = vmatpush2.bf16.msra.mxu0 0
      %1205 = vmatprep.subr.bf16.mxu0 0
      %1206 = vmatpush2.bf16.msra.mxu0 0
      %1207 = vmatprep.subr.bf16.mxu0 0
      %1208 = vmatpush2.bf16.msra.mxu0 0
      %1209 = vmatprep.mubr.bf16.mxu0 0
      %1210 = vmatmul.mubr.bf16.gmra.mxu0 %v1175
      %v1211 = vpop.f32.mrf.mxu0
      %v1212 = vadd.f32 0.0, %v1211
      %v1213 = vpop.f32.mrf.mxu0
      %v1214 = vpop.f32.mrf.mxu0
      %v1215 = vadd.f32 0.0, %v1214
      %v1216 = vpop.f32.mrf.mxu0
      %1217 = vdwg.mxu0
      %1218 = vst.msk [vmem:[#allocation2 + $0x18] sm:$0xff] %vm225, %v1212
      %1219 = vst.msk [vmem:[#allocation2 + $0x38] sm:$0xff] %vm225, %v1215
      %v1220 = vld [vmem:[%s190 + $0xc] sm:$0xf]
      %v1221 = vld [vmem:[%s190 + $0x3c] sm:$0xf]
      %v1222 = vld [vmem:[%s196 + $0x1c] sm:$0xf]
      %v1223 = vld [vmem:[%s196 + $0x4c] sm:$0xf]
      %v1224 = vld [vmem:[%s196 + $0x2c] sm:$0xf]
      %v1225 = vld [vmem:[%s196 + $0x5c] sm:$0xf]
      %v1228 = vunpack.c.l.b16 %v1220
      %v1229 = vunpack.c.l.b16 %v1221
      %v1230 = vpack.c.b16 %v1229, %v1228
      %1231 = vrot.lane.b32.xlu0 %v1230, 64
      %v1232 = vpop.permute.xlu0 %1231
      %v1235 = vunpack.c.l.b16 %v1222
      %v1236 = vunpack.c.l.b16 %v1223
      %v1237 = vpack.c.b16 %v1236, %v1235
      %1238 = vrot.lane.b32.xlu0 %v1237, 64
      %v1239 = vpop.permute.xlu0 %1238
      %v1241 = vsel %vm225, %v1232, 0
      %v1244 = vsel %vm225, %v1239, 0
      %1246 = vmatprep.subr.bf16.mxu0 0
      %1247 = vmatpush1.bf16.xpose.msra.mxu0 0
      %1248 = vmatprep.subr.bf16.mxu0 0
      %1249 = vmatpush1.bf16.xpose.msra.mxu0 0
      %1250 = vmatprep.subr.bf16.mxu0 0
      %1251 = vmatpush1.bf16.xpose.msra.mxu0 0
      %1252 = vmatprep.subr.bf16.mxu0 0
      %1253 = vmatpush1.bf16.xpose.msra.mxu0 0
      %1254 = vmatprep.subr.bf16.mxu0 0
      %1255 = vmatpush1.bf16.xpose.msra.mxu0 0
      %1256 = vmatprep.subr.bf16.mxu0 0
      %1257 = vmatpush1.bf16.xpose.msra.mxu0 0
      %1258 = vmatprep.subr.bf16.mxu0 0
      %1259 = vmatpush1.bf16.xpose.msra.mxu0 0
      %1260 = vmatprep.subr.bf16.mxu0 0
      %1261 = vmatpush1.bf16.xpose.msra.mxu0 %v1244
      %1262 = vmatprep.subr.bf16.mxu0 0
      %1263 = vmatpush2.bf16.xpose.msra.mxu0 0
      %1264 = vmatprep.subr.bf16.mxu0 0
      %1265 = vmatpush2.bf16.xpose.msra.mxu0 0
      %1266 = vmatprep.subr.bf16.mxu0 0
      %1267 = vmatpush2.bf16.xpose.msra.mxu0 0
      %1268 = vmatprep.subr.bf16.mxu0 0
      %1269 = vmatpush2.bf16.xpose.msra.mxu0 0
      %1270 = vmatprep.subr.bf16.mxu0 0
      %1271 = vmatpush2.bf16.xpose.msra.mxu0 0
      %1272 = vmatprep.subr.bf16.mxu0 0
      %1273 = vmatpush2.bf16.xpose.msra.mxu0 0
      %1274 = vmatprep.subr.bf16.mxu0 0
      %1275 = vmatpush2.bf16.xpose.msra.mxu0 0
      %1276 = vmatprep.subr.bf16.mxu0 0
      %1277 = vmatpush2.bf16.xpose.msra.mxu0 0
      %1278 = vmatprep.mubr.bf16.mxu0 0
      %1279 = vmatmul.mubr.bf16.gmra.mxu0 %v1241
      %v1280 = vpop.f32.mrf.mxu0
      %v1281 = vadd.f32 0.0, %v1280
      %v1282 = vpop.f32.mrf.mxu0
      %v1283 = vpop.f32.mrf.mxu0
      %v1284 = vadd.f32 0.0, %v1283
      %v1285 = vpop.f32.mrf.mxu0
      %1286 = vdwg.mxu0
      %v1287 = vsel %vm273, %v1281, -inf
      %1288 = vmax.xlane.f32.xlu0 %v1287
      %v1289 = vpop.xlane.xlu0 %1288
      %v1290 = vsel %vm273, %v1284, -inf
      %1291 = vmax.xlane.f32.xlu0 %v1290
      %v1292 = vpop.xlane.xlu0 %1291
      %v1293 = vsub.f32 %v1281, %v1289
      %v1294 = vsub.f32 %v1284, %v1292
      %v1295 = vmul.f32 %v1293, 1.442695
      %v1296 = vpow.pop %v1295
      %v1297 = vmul.f32 %v1294, 1.442695
      %v1298 = vpow.pop %v1297
      %v1299 = vsel %vm273, %v1296, 0.0
      %1300 = vadd.xlane.f32.xlu0 %v1299
      %v1301 = vpop.xlane.xlu0 %1300
      %v1302 = vsel %vm273, %v1298, 0.0
      %1303 = vadd.xlane.f32.xlu0 %v1302
      %v1304 = vpop.xlane.xlu0 %1303
      %v1305 = vrcp.pop %v1301
      %v1306 = vrcp.pop %v1304
      %v1307 = vmul.f32 %v1296, %v1305
      %v1308 = vmul.f32 %v1298, %v1306
      %v1309 = vpack.c.bf16 %v1308, %v1307
      %v1312 = vunpack.c.l.b16 %v1224
      %v1313 = vunpack.c.l.b16 %v1225
      %v1314 = vpack.c.b16 %v1313, %v1312
      %1315 = vrot.lane.b32.xlu0 %v1314, 64
      %v1316 = vpop.permute.xlu0 %1315
      %v1319 = vsel %vm273, %v1309, 0
      %1321 = vmatprep.subr.bf16.mxu0 0
      %1322 = vmatpush1.bf16.msra.mxu0 0
      %1323 = vmatprep.subr.bf16.mxu0 0
      %1324 = vmatpush1.bf16.msra.mxu0 0
      %1325 = vmatprep.subr.bf16.mxu0 0
      %1326 = vmatpush1.bf16.msra.mxu0 0
      %1327 = vmatprep.subr.bf16.mxu0 0
      %1328 = vmatpush1.bf16.msra.mxu0 0
      %1329 = vmatprep.subr.bf16.mxu0 0
      %1330 = vmatpush1.bf16.msra.mxu0 0
      %1331 = vmatprep.subr.bf16.mxu0 0
      %1332 = vmatpush1.bf16.msra.mxu0 0
      %1333 = vmatprep.subr.bf16.mxu0 0
      %1334 = vmatpush1.bf16.msra.mxu0 0
      %1335 = vmatprep.subr.bf16.mxu0 0
      %1336 = vmatpush1.bf16.msra.mxu0 %v1316
      %1337 = vmatprep.subr.bf16.mxu0 0
      %1338 = vmatpush2.bf16.msra.mxu0 0
      %1339 = vmatprep.subr.bf16.mxu0 0
      %1340 = vmatpush2.bf16.msra.mxu0 0
      %1341 = vmatprep.subr.bf16.mxu0 0
      %1342 = vmatpush2.bf16.msra.mxu0 0
      %1343 = vmatprep.subr.bf16.mxu0 0
      %1344 = vmatpush2.bf16.msra.mxu0 0
      %1345 = vmatprep.subr.bf16.mxu0 0
      %1346 = vmatpush2.bf16.msra.mxu0 0
      %1347 = vmatprep.subr.bf16.mxu0 0
      %1348 = vmatpush2.bf16.msra.mxu0 0
      %1349 = vmatprep.subr.bf16.mxu0 0
      %1350 = vmatpush2.bf16.msra.mxu0 0
      %1351 = vmatprep.subr.bf16.mxu0 0
      %1352 = vmatpush2.bf16.msra.mxu0 0
      %1353 = vmatprep.mubr.bf16.mxu0 0
      %1354 = vmatmul.mubr.bf16.gmra.mxu0 %v1319
      %v1355 = vpop.f32.mrf.mxu0
      %v1356 = vadd.f32 0.0, %v1355
      %v1357 = vpop.f32.mrf.mxu0
      %v1358 = vpop.f32.mrf.mxu0
      %v1359 = vadd.f32 0.0, %v1358
      %v1360 = vpop.f32.mrf.mxu0
      %1361 = vdwg.mxu0
      %1364 = vrot.lane.b32.xlu0 %v1356, 64
      %v1365 = vpop.permute.xlu0 %1364
      %1366 = vrot.lane.b32.xlu0 %v1359, 64
      %v1367 = vpop.permute.xlu0 %1366
      %1370 = vst.msk [vmem:[#allocation2 + $0x18] sm:$0xff] %vm499, %v1365
      %1371 = vst.msk [vmem:[#allocation2 + $0x38] sm:$0xff] %vm499, %v1367
      %v1372 = vld [vmem:[#allocation2] sm:$0xff]
      %v1373 = vld [vmem:[#allocation2 + $0x8] sm:$0xff]
      %v1374 = vld [vmem:[#allocation2 + $0x10] sm:$0xff]
      %v1375 = vld [vmem:[#allocation2 + $0x18] sm:$0xff]
      %v1376 = vld [vmem:[#allocation2 + $0x20] sm:$0xff]
      %v1377 = vld [vmem:[#allocation2 + $0x28] sm:$0xff]
      %v1378 = vld [vmem:[#allocation2 + $0x30] sm:$0xff]
      %v1379 = vld [vmem:[#allocation2 + $0x38] sm:$0xff]
      %v1380 = vpack.c.bf16 %v1376, %v1372
      %v1381 = vpack.c.bf16 %v1377, %v1373
      %v1382 = vpack.c.bf16 %v1378, %v1374
      %v1383 = vpack.c.bf16 %v1379, %v1375
      %v1388 = vunpack.c.l.b16 %v1380
      %v1389 = vunpack.c.l.b16 %v1381
      %v1390 = vunpack.c.l.b16 %v1382
      %v1391 = vunpack.c.l.b16 %v1383
      %v1392 = vunpack.c.h.b16 %v1380
      %v1393 = vunpack.c.h.b16 %v1381
      %v1394 = vunpack.c.h.b16 %v1382
      %v1395 = vunpack.c.h.b16 %v1383
      %v1396 = vpack.c.b16 %v1389, %v1388
      %v1397 = vpack.c.b16 %v1391, %v1390
      %v1398 = vpack.c.b16 %v1393, %v1392
      %v1399 = vpack.c.b16 %v1395, %v1394
      %1404 = vst [vmem:[%s206] sm:$0xff] %v1396
      %1405 = vst [vmem:[%s206 + $0x8] sm:$0xff] %v1397
      %1406 = vst [vmem:[%s206 + $0x10] sm:$0xff] %v1398
      %1407 = vst [vmem:[%s206 + $0x18] sm:$0xff] %v1399
      %s1408 = smul.u32 2, %s18
      %p1409 = scmp.lt.s32.totalorder %s17, 1
      %s1410 = scalar_select %p1409, %s17, 1
      %p1411 = scmp.lt.s32.totalorder %s1408, 1
      %s1412 = scalar_select %p1411, %s1408, 1
      %s1413 = smul.addr %s1412, 4
      %s1414 = smul.addr %s1410, 8
      %s1415 = sadd.s32 %s1413, %s1414
      %s1416 = smul.addr %s1415, 4
      %s1417 = scalar_lea.vmem %s2, %s1416
      // Predicated region
      $region29: #{attention_forward.4} parent=27 // pred_check
        %p1418 = pneg %p99
      $region30: #{attention_forward.4} parent=27 // pred_check_branch
        %1420 = sbr.rel (%p1418) target = $region32
      $region31: #{attention_forward.4} parent=27 // pred_region
        %s1421 = smul.u32 2, %s18
      $region32: #{attention_forward.4} parent=27 // pred_fallthru
        _
    $region28: #{attention_forward.4} parent=5 // pred_fallthru
      _
    %p1422 = scmp.le.s32.totalorder 2, %s8
    // Predicated region
    $region33: #{attention_forward.4} parent=5 // pred_check
      %p1423 = pneg %p1422
    $region34: #{attention_forward.4} parent=5 // pred_check_branch
      %1425 = sbr.rel (%p1423) target = $region36
    $region35: #{attention_forward.4} parent=5 // pred_region
      %s1426 = ssub.s32 %s8, 2
      // Predicated region
      $region37: #{attention_forward.4} parent=35 // pred_check
        %p1427 = pneg %p105
      $region38: #{attention_forward.4} parent=35 // pred_check_branch
        %1429 = sbr.rel (%p1427) target = $region40
      $region39: #{attention_forward.4} parent=35 // pred_region
        %s1430 = smul.u32 2, %s20
        %p1431 = scmp.lt.s32.totalorder %s19, 1
        %s1432 = scalar_select %p1431, %s19, 1
        %p1433 = scmp.lt.s32.totalorder %s1430, 1
        %s1434 = scalar_select %p1433, %s1430, 1
        %s1435 = smul.addr %s1434, 4
        %s1436 = smul.addr %s1432, 8
        %s1437 = sadd.s32 %s1435, %s1436
        %s1438 = smul.addr %s1437, 4
        %s1439 = scalar_lea.vmem %s2, %s1438
      $region40: #{attention_forward.4} parent=35 // pred_fallthru
        _
    $region36: #{attention_forward.4} parent=5 // pred_fallthru
      _
  $region6: #{attention_forward.4} parent=0 // loop_footer
    %s12 = sadd.s32 1, %s8
  $region7: #{attention_forward.4} parent=0 // loop_footer_branch
    %7 = sbr.rel target = $region3
  $region8: #{attention_forward.4} parent=0 // loop_exit
    _

</llo_original>
